<compile_context>
chip_gen: v7x
topology: tpu7x:2x2x1
jax: 0.10.0
libtpu: 0.0.40
codegen_flags: <defaults>
</compile_context>

<pallas_src>
import functools
import math

import jax
import jax.numpy as jnp
from jax.experimental import pallas as pl
from jax.experimental.pallas import tpu as pltpu


_LN_EPS = 1e-5
_INV_SQRT2 = 1.0 / math.sqrt(2.0)

# Memory-space enum (name differs across JAX versions).
_MS = getattr(pltpu, "MemorySpace", None) or getattr(pltpu, "TPUMemorySpace", None)


def _cdiv(a, b):
    return -(-a // b)


def _round_up(n, m):
    return _cdiv(n, m) * m


def _vmem_resident_spec():
    """Whole-array operand, resident in VMEM for the entire kernel (1 copy)."""
    return pl.BlockSpec(memory_space=_MS.VMEM)


def _default_vmem_limit_bytes():
    """Physical VMEM minus headroom for compiler internals / pipelining."""
    phys = 64 * 1024 * 1024  # most restrictive generation (v7x, per TensorCore)
    try:
        info = pltpu.get_tpu_info()
        phys = int(getattr(info, "vmem_capacity_bytes", phys))
    except Exception:
        pass
    return max(32 * 1024 * 1024, min(phys - 8 * 1024 * 1024, int(phys * 0.85)))


def _gelu(h, use_tanh):
    if use_tanh:
        # tanh approximation: transcendental goes to the EUP slot (frees VALU).
        c = math.sqrt(2.0 / math.pi)
        return 0.5 * h * (1.0 + jnp.tanh(c * (h + 0.044715 * (h * h * h))))
    # Exact erf: matches PyTorch nn.GELU(approximate='none').
    return 0.5 * h * (1.0 + jax.lax.erf(h * _INV_SQRT2))


def _modulated_ln(x, y, wada_ref, bada_ref):
    """SiLU(y) -> fused (dim,3*dim) ada projection -> AdaLN modulation.

    Returns (x_res_f32, sigma_f32). gamma/mu/sigma are lane slices of the
    fused (tm, 3*dim) MXU result (128-aligned when dim % 128 == 0).
    """
    dim = x.shape[-1]
    y_act = (y * jax.nn.sigmoid(y)).astype(jnp.bfloat16)
    ada = jnp.dot(y_act, wada_ref[...],
                  preferred_element_type=jnp.float32) + bada_ref[...]
    gamma = ada[:, 0 * dim:1 * dim]
    mu = ada[:, 1 * dim:2 * dim]
    sigma = ada[:, 2 * dim:3 * dim]
    # LayerNorm(dim, elementwise_affine=False), eps=1e-5, in f32.
    mean = jnp.mean(x, axis=-1, keepdims=True)
    var = jnp.mean(jnp.square(x - mean), axis=-1, keepdims=True)
    ln_x = (x - mean) * jax.lax.rsqrt(var + _LN_EPS)
    x_res = (1.0 + gamma) * ln_x + mu
    return x_res, sigma


# ----------------------------------------------------------------------------
# Path A: weights VMEM-resident, grid = (row_tiles,).
# Each grid step runs the full block forward for one row tile; the fc1/fc2
# reduction is chunked internally over static lane-aligned slices of W1/W2
# so the (tm, hidden) intermediate never has to be fully live.
# ----------------------------------------------------------------------------
def _adaln_mlp_kernel_resident(x_ref, y_ref, wada_ref, bada_ref,
                               w1_ref, b1_ref, w2_ref, b2_ref, o_ref,
                               *, hidden_chunk, use_tanh_gelu):
    x = x_ref[...].astype(jnp.float32)                 # (tm, dim)
    y = y_ref[...].astype(jnp.float32)                 # (tm, dim)
    x_res_f32, sigma = _modulated_ln(x, y, wada_ref, bada_ref)
    x_res = x_res_f32.astype(jnp.bfloat16)             # MXU lhs

    dim = x_ref.shape[-1]
    hidden = w1_ref.shape[-1]
    acc = jnp.zeros((x.shape[0], dim), jnp.float32)
    for h0 in range(0, hidden, hidden_chunk):
        h1 = min(h0 + hidden_chunk, hidden)
        pre = jnp.dot(x_res, w1_ref[:, h0:h1],
                      preferred_element_type=jnp.float32) + b1_ref[:, h0:h1]
        act = _gelu(pre, use_tanh_gelu).astype(jnp.bfloat16)
        acc = acc + jnp.dot(act, w2_ref[h0:h1, :],
                            preferred_element_type=jnp.float32)

    o_ref[...] = (x + (acc + b2_ref[...]) * sigma).astype(o_ref.dtype)


# ----------------------------------------------------------------------------
# Path B: hidden-streamed fallback, grid = (row_tiles, hidden_tiles).
# Used only when the bf16 weights do not fit the VMEM budget. W_ada/b_ada/b2
# stay VMEM-resident; W1/b1/W2 are tiled along hidden (reduction axis last).
# ----------------------------------------------------------------------------
def _adaln_mlp_kernel_streamed(x_ref, y_ref, wada_ref, bada_ref,
                               w1_ref, b1_ref, w2_ref, b2_ref, o_ref,
                               xres_ref, sigma_ref, acc_ref,
                               *, use_tanh_gelu):
    j = pl.program_id(1)

    @pl.when(j == 0)
    def _init():
        x = x_ref[...].astype(jnp.float32)
        y = y_ref[...].astype(jnp.float32)
        x_res, sigma = _modulated_ln(x, y, wada_ref, bada_ref)
        xres_ref[...] = x_res.astype(xres_ref.dtype)    # bf16 MXU lhs
        sigma_ref[...] = sigma.astype(sigma_ref.dtype)  # bf16: gate only, VMEM-cheap
        acc_ref[...] = jnp.zeros_like(acc_ref)

    pre = jnp.dot(xres_ref[...], w1_ref[...],
                  preferred_element_type=jnp.float32) + b1_ref[...]
    act = _gelu(pre, use_tanh_gelu).astype(jnp.bfloat16)
    acc_ref[...] += jnp.dot(act, w2_ref[...], preferred_element_type=jnp.float32)

    @pl.when(j == pl.num_programs(1) - 1)
    def _finalize():
        x = x_ref[...].astype(jnp.float32)
        mlp_out = acc_ref[...] + b2_ref[...]
        o_ref[...] = (x + mlp_out * sigma_ref[...].astype(jnp.float32)).astype(o_ref.dtype)


# ----------------------------------------------------------------------------
# Wrapper
# ----------------------------------------------------------------------------
def adaln_mlp_block(x, y, params, *,
                    block_rows=None, block_hidden=256,
                    vmem_limit_bytes=None,
                    use_tanh_gelu=False,
                    force_streamed=False):
    orig_shape = x.shape
    dim = x.shape[-1]
    hidden = params["w1"].shape[1]

    if vmem_limit_bytes is None:
        vmem_limit_bytes = _default_vmem_limit_bytes()
    if block_rows is None:
        # 128 MiB-VMEM generations (v5e/v6e) can afford bigger row tiles.
        block_rows = 512 if vmem_limit_bytes >= 96 * 1024 * 1024 else 256

    x2 = x.reshape(-1, dim)
    y2 = y.reshape(-1, dim)
    M = x2.shape[0]

    # Row tiling: at least two row tiles so both v7x TensorCores get work;
    # pad ragged batches (rows are independent) and slice the pad off after.
    tm = max(8, min(block_rows, _round_up(_cdiv(M, 2), 8)))
    Mp = _round_up(M, tm)
    if Mp != M:
        pad = Mp - M
        x2 = jnp.pad(x2, ((0, pad), (0, 0)))
        y2 = jnp.pad(y2, ((0, pad), (0, 0)))
    n_row = Mp // tm

    # bf16 weights (f32 MXU accumulation inside the kernel); f32 biases.
    bf16 = jnp.bfloat16
    w_ada = params["w_ada"].astype(bf16)                       # (dim, 3*dim), fused
    b_ada = params["b_ada"].reshape(1, 3 * dim).astype(jnp.float32)
    w1 = params["w1"].astype(bf16)                             # (dim, hidden)
    b1 = params["b1"].reshape(1, hidden).astype(jnp.float32)
    w2 = params["w2"].astype(bf16)                             # (hidden, dim)
    b2 = params["b2"].reshape(1, dim).astype(jnp.float32)

    itemsize = jnp.dtype(x.dtype).itemsize
    weight_bytes = (w_ada.size + w1.size + w2.size) * 2
    bias_bytes = (b_ada.size + b1.size + b2.size) * 4
    act_tile_bytes = 3 * 2 * tm * dim * itemsize               # x/y/out, double-buffered
    hidden_chunk = min(hidden, 512)                             # in-kernel fc chunk (path A)
    live_f32_bytes = tm * (hidden_chunk + 10 * dim) * 4         # h-chunk + ada/x_res/acc margin

    use_resident = (not force_streamed) and (
        weight_bytes + bias_bytes <= vmem_limit_bytes // 2
        and weight_bytes + bias_bytes + act_tile_bytes + live_f32_bytes
        <= int(0.85 * vmem_limit_bytes))

    if use_resident:
        kernel = functools.partial(_adaln_mlp_kernel_resident,
                                   hidden_chunk=hidden_chunk,
                                   use_tanh_gelu=use_tanh_gelu)
        grid = (n_row,)
        in_specs = [
            pl.BlockSpec((tm, dim), lambda i: (i, 0)),   # x rows
            pl.BlockSpec((tm, dim), lambda i: (i, 0)),   # y rows
            _vmem_resident_spec(),                       # W_ada (read from HBM once)
            _vmem_resident_spec(),                       # b_ada
            _vmem_resident_spec(),                       # W1
            _vmem_resident_spec(),                       # b1
            _vmem_resident_spec(),                       # W2
            _vmem_resident_spec(),                       # b2
        ]
        out_specs = pl.BlockSpec((tm, dim), lambda i: (i, 0))
        scratch_shapes = []
        dim_sem = ("parallel",)
        w12_rereads = 1                                   # weights read from HBM once
    else:
        # Hidden tiling with cdiv + zero padding (exact: pads contribute 0).
        th = min(block_hidden, _round_up(hidden, 128))
        hidden_p = _round_up(hidden, th)
        if hidden_p != hidden:
            hp = hidden_p - hidden
            w1 = jnp.pad(w1, ((0, 0), (0, hp)))
            b1 = jnp.pad(b1, ((0, 0), (0, hp)))
            w2 = jnp.pad(w2, ((0, hp), (0, 0)))
        kernel = functools.partial(_adaln_mlp_kernel_streamed,
                                   use_tanh_gelu=use_tanh_gelu)
        grid = (n_row, hidden_p // th)
        in_specs = [
            pl.BlockSpec((tm, dim), lambda i, j: (i, 0)),   # x rows
            pl.BlockSpec((tm, dim), lambda i, j: (i, 0)),   # y rows
            _vmem_resident_spec(),                          # W_ada (constant, 1 copy)
            _vmem_resident_spec(),                          # b_ada
            pl.BlockSpec((dim, th), lambda i, j: (0, j)),   # W1 tile
            pl.BlockSpec((1, th), lambda i, j: (0, j)),     # b1 tile
            pl.BlockSpec((th, dim), lambda i, j: (j, 0)),   # W2 tile
            _vmem_resident_spec(),                          # b2
        ]
        out_specs = pl.BlockSpec((tm, dim), lambda i, j: (i, 0))
        scratch_shapes = [
            pltpu.VMEM((tm, dim), jnp.bfloat16),   # x_res (MXU lhs)
            pltpu.VMEM((tm, dim), jnp.bfloat16),   # sigma (bf16 gate, VMEM-cheap)
            pltpu.VMEM((tm, dim), jnp.float32),    # fc2 accumulator
        ]
        dim_sem = ("parallel", "arbitrary")
        w12_rereads = n_row                         # W1/W2 re-streamed per row tile

    # Advisory cost estimate for the XLA scheduler (counts weight re-streams).
    hid_eff = w1.shape[1]
    flops = 2 * Mp * dim * (3 * dim + 2 * hid_eff)
    transcendentals = Mp * (dim + hid_eff)
    bytes_accessed = (3 * Mp * dim * itemsize
                      + w_ada.size * 2 + bias_bytes
                      + (w1.size + w2.size) * 2 * w12_rereads)

    out = pl.pallas_call(
        kernel,
        out_shape=jax.ShapeDtypeStruct((Mp, dim), x.dtype),
        grid_spec=pltpu.PrefetchScalarGridSpec(
            num_scalar_prefetch=0,
            grid=grid,
            in_specs=in_specs,
            out_specs=out_specs,
            scratch_shapes=scratch_shapes),
        compiler_params=pltpu.CompilerParams(
            dimension_semantics=dim_sem,
            vmem_limit_bytes=int(vmem_limit_bytes)),
        cost_estimate=pl.CostEstimate(
            flops=int(flops),
            transcendentals=int(transcendentals),
            bytes_accessed=int(bytes_accessed)),
    )(x2, y2, w_ada, b_ada, w1, b1, w2, b2)

    return out[:M].reshape(orig_shape)


# ----------------------------------------------------------------------------
# Deterministic parameter init (shapes from AdaLNMLPBlock.__init__).
# PyTorch default Linear init (uniform +-1/sqrt(fan_in)); mlp[-1] zeroed as in
# the module's __init__.
# ----------------------------------------------------------------------------
def init_params(key, dim, expansion):
    hidden = dim * expansion
    k1, k2, k3, k4 = jax.random.split(key, 4)

    def linear(kw, kb, fan_in, fan_out):
        bound = 1.0 / math.sqrt(fan_in)
        w = jax.random.uniform(kw, (fan_in, fan_out), jnp.float32, -bound, bound)
        b = jax.random.uniform(kb, (1, fan_out), jnp.float32, -bound, bound)
        return w, b

    w_ada, b_ada = linear(k1, k2, dim, 3 * dim)
    w1, b1 = linear(k3, k4, dim, hidden)
    # nn.init.zeros_(self.mlp[-1].weight / .bias)
    w2 = jnp.zeros((hidden, dim), jnp.float32)
    b2 = jnp.zeros((1, dim), jnp.float32)
    return dict(w_ada=w_ada, b_ada=b_ada, w1=w1, b1=b1, w2=w2, b2=b2)


# ----------------------------------------------------------------------------
# Pure-JAX reference. matmul_dtype=jnp.bfloat16 mirrors the kernel's bf16
# MXU operands with f32 accumulation; jnp.float32 gives the exact-f32 path.
# ----------------------------------------------------------------------------
def reference(x, y, params, *, matmul_dtype=jnp.float32, use_tanh_gelu=False):
    def mm(a, w):
        return jnp.dot(a.astype(matmul_dtype), w.astype(matmul_dtype),
                       preferred_element_type=jnp.float32)

    y_act = y * jax.nn.sigmoid(y)
    ada = mm(y_act, params["w_ada"]) + params["b_ada"].reshape(-1)
    gamma, mu, sigma = jnp.split(ada, 3, axis=-1)
    mean = jnp.mean(x, -1, keepdims=True)
    var = jnp.mean(jnp.square(x - mean), -1, keepdims=True)
    ln_x = (x - mean) / jnp.sqrt(var + _LN_EPS)
    x_res = (1.0 + gamma) * ln_x + mu
    h = mm(x_res, params["w1"]) + params["b1"].reshape(-1)
    if use_tanh_gelu:
        c = math.sqrt(2.0 / math.pi)
        h = 0.5 * h * (1.0 + jnp.tanh(c * (h + 0.044715 * (h * h * h))))
    else:
        h = 0.5 * h * (1.0 + jax.scipy.special.erf(h / math.sqrt(2.0)))
    mlp_out = mm(h, params["w2"]) + params["b2"].reshape(-1)
    return x + mlp_out * sigma


if __name__ == "__main__":
    import numpy as np

    dim, expansion = 128, 4
    B, N = 2, 256                 # 512 rows -> two 256-row tiles (both v7x TCs busy)
    hidden = dim * expansion

    key = jax.random.PRNGKey(0)
    kx, ky, kp, kw = jax.random.split(key, 4)
    x = jax.random.normal(kx, (B, N, dim), jnp.float32)
    y = jax.random.normal(ky, (B, N, dim), jnp.float32)
    params = init_params(kp, dim, expansion)

    # 1) Faithful init (mlp[-1] zeroed): forward is exactly identity on x.
    out = jax.block_until_ready(adaln_mlp_block(x, y, params))
    np.testing.assert_allclose(np.asarray(out), np.asarray(x), rtol=1e-6, atol=1e-6)

    # Non-zero final layer for the remaining checks.
    kw1, kw2 = jax.random.split(kw)
    bound = 1.0 / math.sqrt(hidden)
    params_nz = dict(params)
    params_nz["w2"] = jax.random.uniform(kw1, (hidden, dim), jnp.float32, -bound, bound)
    params_nz["b2"] = jax.random.uniform(kw2, (1, dim), jnp.float32, -bound, bound)
    ref_nz = reference(x, y, params_nz, matmul_dtype=jnp.bfloat16)

    # 2) Default path: weights VMEM-resident, grid over rows only.
    out_nz = jax.block_until_ready(adaln_mlp_block(x, y, params_nz))
    np.testing.assert_allclose(np.asarray(out_nz), np.asarray(ref_nz),
                               rtol=2e-2, atol=2e-2)

    # 3) Forced hidden-streamed fallback: exercises the reduction grid axis,
    #    cdiv/zero-pad tiling and the scratch accumulator path.
    out_st = jax.block_until_ready(
        adaln_mlp_block(x, y, params_nz, force_streamed=True, block_hidden=256))
    np.testing.assert_allclose(np.asarray(out_st), np.asarray(ref_nz),
                               rtol=2e-2, atol=2e-2)

    # 4) Ragged row count: exercises padding and a small row tile.
    xs = jax.random.normal(kx, (2, 5, dim), jnp.float32)
    ys = jax.random.normal(ky, (2, 5, dim), jnp.float32)
    out_s = jax.block_until_ready(adaln_mlp_block(xs, ys, params_nz))
    ref_s = reference(xs, ys, params_nz, matmul_dtype=jnp.bfloat16)
    np.testing.assert_allclose(np.asarray(out_s), np.asarray(ref_s),
                               rtol=2e-2, atol=2e-2)

    # 5) bf16 activations in -> bf16 out (halves activation HBM traffic).
    xb = x.astype(jnp.bfloat16)
    yb = y.astype(jnp.bfloat16)
    out_b = jax.block_until_ready(adaln_mlp_block(xb, yb, params_nz))
    assert out_b.dtype == jnp.bfloat16
    ref_b = reference(xb.astype(jnp.float32), yb.astype(jnp.float32), params_nz,
                      matmul_dtype=jnp.bfloat16)
    np.testing.assert_allclose(np.asarray(out_b.astype(jnp.float32)),
                               np.asarray(ref_b), rtol=5e-2, atol=5e-2)

    # 6) Optional tanh-approx GELU (EUP path) against a matching reference.
    out_t = jax.block_until_ready(adaln_mlp_block(x, y, params_nz, use_tanh_gelu=True))
    ref_t = reference(x, y, params_nz, matmul_dtype=jnp.bfloat16, use_tanh_gelu=True)
    np.testing.assert_allclose(np.asarray(out_t), np.asarray(ref_t),
                               rtol=2e-2, atol=2e-2)

    print("KERNEL_OK")
</pallas_src>

<mosaic_0001>
module attributes {stable_mosaic.version = 11 : i64} {
  func.func @_adaln_mlp_kernel_resident(%arg0: i32, %arg1: memref<256x128xf32, #tpu.memory_space<vmem>>, %arg2: memref<256x128xf32, #tpu.memory_space<vmem>>, %arg3: memref<128x384xbf16, #tpu.memory_space<vmem>>, %arg4: memref<1x384xf32, #tpu.memory_space<vmem>>, %arg5: memref<128x512xbf16, #tpu.memory_space<vmem>>, %arg6: memref<1x512xf32, #tpu.memory_space<vmem>>, %arg7: memref<512x128xbf16, #tpu.memory_space<vmem>>, %arg8: memref<1x128xf32, #tpu.memory_space<vmem>>, %arg9: memref<256x128xf32, #tpu.memory_space<vmem>>) attributes {dimension_semantics = [#tpu.dimension_semantics<parallel>], iteration_bounds = array<i64: 2>, scalar_prefetch = 0 : i64, scratch_operands = 0 : i64, tpu.core_type = #tpu.core_type<tc>, window_params = [{transform_indices = @transform_0, window_bounds = array<i64: 256, 128>}, {transform_indices = @transform_1, window_bounds = array<i64: 256, 128>}, {pipeline_mode = #tpu.pipeline_mode<synchronous>, transform_indices = @transform_2, window_bounds = array<i64: 128, 384>}, {pipeline_mode = #tpu.pipeline_mode<synchronous>, transform_indices = @transform_3, window_bounds = array<i64: 1, 384>}, {pipeline_mode = #tpu.pipeline_mode<synchronous>, transform_indices = @transform_4, window_bounds = array<i64: 128, 512>}, {pipeline_mode = #tpu.pipeline_mode<synchronous>, transform_indices = @transform_5, window_bounds = array<i64: 1, 512>}, {pipeline_mode = #tpu.pipeline_mode<synchronous>, transform_indices = @transform_6, window_bounds = array<i64: 512, 128>}, {pipeline_mode = #tpu.pipeline_mode<synchronous>, transform_indices = @transform_7, window_bounds = array<i64: 1, 128>}, {transform_indices = @transform_8, window_bounds = array<i64: 256, 128>}]} {
    %c0 = arith.constant 0 : index
    %c0_0 = arith.constant 0 : index
    %0 = vector.load %arg1[%c0, %c0_0] : memref<256x128xf32, #tpu.memory_space<vmem>>, vector<256x128xf32>
    %c0_1 = arith.constant 0 : index
    %c0_2 = arith.constant 0 : index
    %1 = vector.load %arg2[%c0_1, %c0_2] : memref<256x128xf32, #tpu.memory_space<vmem>>, vector<256x128xf32>
    %2 = arith.negf %1 : vector<256x128xf32>
    %3 = math.exp %2 : vector<256x128xf32>
    %cst = arith.constant 1.000000e+00 : f32
    %4 = vector.broadcast %cst : f32 to vector<256x128xf32>
    %5 = arith.addf %4, %3 : vector<256x128xf32>
    %6 = arith.divf %4, %5 : vector<256x128xf32>
    %7 = arith.mulf %1, %6 : vector<256x128xf32>
    %8 = arith.truncf %7 : vector<256x128xf32> to vector<256x128xbf16>
    %c0_3 = arith.constant 0 : index
    %c0_4 = arith.constant 0 : index
    %9 = vector.load %arg3[%c0_3, %c0_4] : memref<128x384xbf16, #tpu.memory_space<vmem>>, vector<128x384xbf16>
    %cst_5 = arith.constant dense<0.000000e+00> : vector<256x384xf32>
    %10 = tpu.matmul %8, %9, %cst_5 {dimension_numbers = #tpu.dot_dimension_numbers<[1], [0], [0], [1], [0, 0, 1, 1], [], []>} : vector<256x128xbf16>, vector<128x384xbf16>, vector<256x384xf32> -> vector<256x384xf32>
    %c0_6 = arith.constant 0 : index
    %c0_7 = arith.constant 0 : index
    %11 = vector.load %arg4[%c0_6, %c0_7] : memref<1x384xf32, #tpu.memory_space<vmem>>, vector<1x384xf32>
    %12 = vector.broadcast %11 : vector<1x384xf32> to vector<256x384xf32>
    %13 = arith.addf %10, %12 : vector<256x384xf32>
    %14 = vector.extract_strided_slice %13 {offsets = [0, 0], sizes = [256, 128], strides = [1, 1]} : vector<256x384xf32> to vector<256x128xf32>
    %15 = vector.extract_strided_slice %13 {offsets = [0, 128], sizes = [256, 128], strides = [1, 1]} : vector<256x384xf32> to vector<256x128xf32>
    %16 = vector.extract_strided_slice %13 {offsets = [0, 256], sizes = [256, 128], strides = [1, 1]} : vector<256x384xf32> to vector<256x128xf32>
    %cst_8 = arith.constant dense<0.000000e+00> : vector<256xf32>
    %17 = vector.multi_reduction <add>, %0, %cst_8 [1] : vector<256x128xf32> to vector<256xf32>
    %18 = vector.shape_cast %17 : vector<256xf32> to vector<256x1xf32>
    %cst_9 = arith.constant 1.280000e+02 : f32
    %19 = vector.broadcast %cst_9 : f32 to vector<256x1xf32>
    %20 = arith.divf %18, %19 : vector<256x1xf32>
    %21 = vector.broadcast %20 : vector<256x1xf32> to vector<256x128xf32>
    %22 = arith.subf %0, %21 : vector<256x128xf32>
    %23 = arith.mulf %22, %22 : vector<256x128xf32>
    %cst_10 = arith.constant dense<0.000000e+00> : vector<256xf32>
    %24 = vector.multi_reduction <add>, %23, %cst_10 [1] : vector<256x128xf32> to vector<256xf32>
    %25 = vector.shape_cast %24 : vector<256xf32> to vector<256x1xf32>
    %cst_11 = arith.constant 1.280000e+02 : f32
    %26 = vector.broadcast %cst_11 : f32 to vector<256x1xf32>
    %27 = arith.divf %25, %26 : vector<256x1xf32>
    %28 = vector.broadcast %20 : vector<256x1xf32> to vector<256x128xf32>
    %29 = arith.subf %0, %28 : vector<256x128xf32>
    %cst_12 = arith.constant 9.99999974E-6 : f32
    %30 = vector.broadcast %cst_12 : f32 to vector<256x1xf32>
    %31 = arith.addf %27, %30 : vector<256x1xf32>
    %32 = math.rsqrt %31 : vector<256x1xf32>
    %33 = vector.broadcast %32 : vector<256x1xf32> to vector<256x128xf32>
    %34 = arith.mulf %29, %33 : vector<256x128xf32>
    %cst_13 = arith.constant 1.000000e+00 : f32
    %35 = vector.broadcast %cst_13 : f32 to vector<256x128xf32>
    %36 = arith.addf %35, %14 : vector<256x128xf32>
    %37 = arith.mulf %36, %34 : vector<256x128xf32>
    %38 = arith.addf %37, %15 : vector<256x128xf32>
    %39 = arith.truncf %38 : vector<256x128xf32> to vector<256x128xbf16>
    %cst_14 = arith.constant 0.000000e+00 : f32
    %40 = vector.broadcast %cst_14 : f32 to vector<256x128xf32>
    %c0_15 = arith.constant 0 : index
    %c0_16 = arith.constant 0 : index
    %41 = vector.load %arg5[%c0_15, %c0_16] : memref<128x512xbf16, #tpu.memory_space<vmem>>, vector<128x512xbf16>
    %cst_17 = arith.constant dense<0.000000e+00> : vector<256x512xf32>
    %42 = tpu.matmul %39, %41, %cst_17 {dimension_numbers = #tpu.dot_dimension_numbers<[1], [0], [0], [1], [0, 0, 1, 1], [], []>} : vector<256x128xbf16>, vector<128x512xbf16>, vector<256x512xf32> -> vector<256x512xf32>
    %c0_18 = arith.constant 0 : index
    %c0_19 = arith.constant 0 : index
    %43 = vector.load %arg6[%c0_18, %c0_19] : memref<1x512xf32, #tpu.memory_space<vmem>>, vector<1x512xf32>
    %44 = vector.broadcast %43 : vector<1x512xf32> to vector<256x512xf32>
    %45 = arith.addf %42, %44 : vector<256x512xf32>
    %cst_20 = arith.constant 5.000000e-01 : f32
    %46 = vector.broadcast %cst_20 : f32 to vector<256x512xf32>
    %47 = arith.mulf %46, %45 : vector<256x512xf32>
    %cst_21 = arith.constant 0.707106769 : f32
    %48 = vector.broadcast %cst_21 : f32 to vector<256x512xf32>
    %49 = arith.mulf %45, %48 : vector<256x512xf32>
    %50 = math.erf %49 : vector<256x512xf32>
    %cst_22 = arith.constant 1.000000e+00 : f32
    %51 = vector.broadcast %cst_22 : f32 to vector<256x512xf32>
    %52 = arith.addf %51, %50 : vector<256x512xf32>
    %53 = arith.mulf %47, %52 : vector<256x512xf32>
    %54 = arith.truncf %53 : vector<256x512xf32> to vector<256x512xbf16>
    %c0_23 = arith.constant 0 : index
    %c0_24 = arith.constant 0 : index
    %55 = vector.load %arg7[%c0_23, %c0_24] : memref<512x128xbf16, #tpu.memory_space<vmem>>, vector<512x128xbf16>
    %cst_25 = arith.constant dense<0.000000e+00> : vector<256x128xf32>
    %56 = tpu.matmul %54, %55, %cst_25 {dimension_numbers = #tpu.dot_dimension_numbers<[1], [0], [0], [1], [0, 0, 1, 1], [], []>} : vector<256x512xbf16>, vector<512x128xbf16>, vector<256x128xf32> -> vector<256x128xf32>
    %57 = arith.addf %40, %56 : vector<256x128xf32>
    %c0_26 = arith.constant 0 : index
    %c0_27 = arith.constant 0 : index
    %58 = vector.load %arg8[%c0_26, %c0_27] : memref<1x128xf32, #tpu.memory_space<vmem>>, vector<1x128xf32>
    %59 = vector.broadcast %58 : vector<1x128xf32> to vector<256x128xf32>
    %60 = arith.addf %57, %59 : vector<256x128xf32>
    %61 = arith.mulf %60, %16 : vector<256x128xf32>
    %62 = arith.addf %0, %61 : vector<256x128xf32>
    %c0_28 = arith.constant 0 : index
    %c0_29 = arith.constant 0 : index
    %63 = vector.load %arg9[%c0_28, %c0_29] : memref<256x128xf32, #tpu.memory_space<vmem>>, vector<256x128xf32>
    tpu.vector_store %arg9[%c0_28, %c0_29], %62 {strides = array<i32>} : memref<256x128xf32, #tpu.memory_space<vmem>>, vector<256x128xf32>,
    return
  }
  func.func @transform_0(%arg0: i32) -> (i32, i32) {
    %c0_i32 = arith.constant 0 : i32
    %c0_i32_0 = arith.constant 0 : i32
    return %arg0, %c0_i32 : i32, i32
  }
  func.func @transform_1(%arg0: i32) -> (i32, i32) {
    %c0_i32 = arith.constant 0 : i32
    %c0_i32_0 = arith.constant 0 : i32
    return %arg0, %c0_i32 : i32, i32
  }
  func.func @transform_2(%arg0: i32) -> (i32, i32) {
    %c0_i32 = arith.constant 0 : i32
    %c0_i32_0 = arith.constant 0 : i32
    %c0_i32_1 = arith.constant 0 : i32
    return %c0_i32, %c0_i32_0 : i32, i32
  }
  func.func @transform_3(%arg0: i32) -> (i32, i32) {
    %c0_i32 = arith.constant 0 : i32
    %c0_i32_0 = arith.constant 0 : i32
    %c0_i32_1 = arith.constant 0 : i32
    return %c0_i32, %c0_i32_0 : i32, i32
  }
  func.func @transform_4(%arg0: i32) -> (i32, i32) {
    %c0_i32 = arith.constant 0 : i32
    %c0_i32_0 = arith.constant 0 : i32
    %c0_i32_1 = arith.constant 0 : i32
    return %c0_i32, %c0_i32_0 : i32, i32
  }
  func.func @transform_5(%arg0: i32) -> (i32, i32) {
    %c0_i32 = arith.constant 0 : i32
    %c0_i32_0 = arith.constant 0 : i32
    %c0_i32_1 = arith.constant 0 : i32
    return %c0_i32, %c0_i32_0 : i32, i32
  }
  func.func @transform_6(%arg0: i32) -> (i32, i32) {
    %c0_i32 = arith.constant 0 : i32
    %c0_i32_0 = arith.constant 0 : i32
    %c0_i32_1 = arith.constant 0 : i32
    return %c0_i32, %c0_i32_0 : i32, i32
  }
  func.func @transform_7(%arg0: i32) -> (i32, i32) {
    %c0_i32 = arith.constant 0 : i32
    %c0_i32_0 = arith.constant 0 : i32
    %c0_i32_1 = arith.constant 0 : i32
    return %c0_i32, %c0_i32_0 : i32, i32
  }
  func.func @transform_8(%arg0: i32) -> (i32, i32) {
    %c0_i32 = arith.constant 0 : i32
    %c0_i32_0 = arith.constant 0 : i32
    return %arg0, %c0_i32 : i32, i32
  }
}

</mosaic_0001>

<llo_original>
// kernel: tpu_custom_call.1
$region0: #{tpu_custom_call.1}
  #allocation0 [shape = 'u32[]', space=smem, size = 0x4, offset = 0x4, fixed_abs, tag = 'smem constant byte address 0x4 - core index']
  #allocation1 [shape = 'u32[144,128]{1,0:T(1,128)}', space=vmem, size = 0x12000, scoped, tag = 'internal scratch']
  %s0 = inlined_call_operand.hbm [shape: f32[512,128], index: 0, kind: input, shape index: {}]
  %s1 = inlined_call_operand.hbm [shape: f32[512,128], index: 1, kind: input, shape index: {}]
  %s2 = inlined_call_operand.hbm [shape: bf16[128,384], index: 2, kind: input, shape index: {}]
  %s3 = inlined_call_operand.vmem [shape: f32[1,384], index: 3, kind: input, shape index: {}]
  %s4 = inlined_call_operand.hbm [shape: bf16[128,512], index: 4, kind: input, shape index: {}]
  %s5 = inlined_call_operand.vmem [shape: f32[1,512], index: 5, kind: input, shape index: {}]
  %s6 = inlined_call_operand.hbm [shape: bf16[512,128], index: 6, kind: input, shape index: {}]
  %s7 = inlined_call_operand.vmem [shape: f32[1,128], index: 7, kind: input, shape index: {}]
  %s8 = inlined_call_operand.hbm [shape: f32[512,128], index: 8, kind: output, shape index: {}]
  %s9 = sld [smem:[#allocation0]]
  $region85: #{tpu_custom_call.1} parent=0
    _
  %s11 = ssub.s32 1, %s9
  %s12 = scalar_select 0, %s11, %s9
  $region1: #{tpu_custom_call.1} parent=0
    #allocation2 [shape = 'u8[262144]{0}', space=vmem, size = 0x40000, scoped, tag = 'input window, operand 0']
    #allocation3 [shape = 's32[2]{0}', space=sflag, size = 0x8, scoped, tag = 'scoped memory for tpu_custom_call.1']
    #allocation4 [shape = 's32[2]{0}', space=sflag, size = 0x8, scoped, tag = 'scoped memory for tpu_custom_call.1']
    #allocation5 [shape = 'u8[262144]{0}', space=vmem, size = 0x40000, scoped, tag = 'input window, operand 1']
    #allocation6 [shape = 's32[2]{0}', space=sflag, size = 0x8, scoped, tag = 'scoped memory for tpu_custom_call.1']
    #allocation7 [shape = 'u8[98304]{0}', space=vmem, size = 0x18000, scoped, tag = 'input window, operand 2, single buffered']
    #allocation8 [shape = 'u8[131072]{0}', space=vmem, size = 0x20000, scoped, tag = 'input window, operand 4, single buffered']
    #allocation9 [shape = 's32[1]{0}', space=sflag, size = 0x4, scoped, tag = 'scoped memory for tpu_custom_call.1']
    #allocation10 [shape = 'u8[131072]{0}', space=vmem, size = 0x20000, scoped, tag = 'input window, operand 6, single buffered']
    #allocation11 [shape = 'u8[262144]{0}', space=vmem, size = 0x40000, scoped, tag = 'output window, operand 0']
    %13 = vsyncpa [#allocation3], 0
    %s14 = scalar_lea.sflag [#allocation3], 1
    %15 = vsyncpa %s14, 0
    %16 = vsyncpa [#allocation6], 0
    %s17 = scalar_lea.sflag [#allocation6], 1
    %18 = vsyncpa %s17, 0
    %19 = vsyncpa [#allocation9], 0
    %20 = vsyncpa [#allocation4], 0
    %s21 = scalar_lea.sflag [#allocation4], 1
    %22 = vsyncpa %s21, 0
    loop: start=0, step=1, limit=4
    $region2: #{tpu_custom_call.1} parent=1 // loop_pre_header
      _
    $region3: #{tpu_custom_call.1} parent=1 // loop_header
      %s24 = sphi 0, %s28
      %p25 = scmp.ge.s32.totalorder %s24, 4
      %s34 = sphi 0, %s36
      %s37 = sphi 0, %s34
      %s38 = sphi 0, %s37
      %s54 = sphi 0, %s38
      %s60 = sphi 0, %s62
      %s63 = sphi 0, %s60
      %s64 = sphi 0, %s63
      %s80 = sphi 0, %s64
      %s84 = sphi 0, %s84
      %s86 = sphi 0, %s84
      %s87 = sphi 0, %s86
      %s101 = sphi 0, %s87
      %s105 = sphi 0, %s105
      %s107 = sphi 0, %s105
      %s108 = sphi 0, %s107
      %s122 = sphi 0, %s108
      %s126 = sphi 0, %s126
      %s128 = sphi 0, %s126
      %s129 = sphi 0, %s128
      %s143 = sphi 0, %s129
      %s147 = sphi 0, %s147
      %s149 = sphi 0, %s147
      %s150 = sphi 0, %s149
      %s164 = sphi 0, %s150
      %s168 = sphi 0, %s168
      %s170 = sphi 0, %s168
      %s171 = sphi 0, %s170
      %s185 = sphi 0, %s171
      %s189 = sphi 0, %s189
      %s191 = sphi 0, %s189
      %s192 = sphi 0, %s191
      %s206 = sphi 0, %s192
      %s212 = sphi 0, %s214
      %s215 = sphi 0, %s212
      %s216 = sphi 0, %s215
      %s232 = sphi 0, %s216
    $region4: #{tpu_custom_call.1} parent=1 // loop_header_branch
      %27 = sbr.rel (%p25) target = $region8
    $region5: #{tpu_custom_call.1} parent=1 // loop_body
      %s29 = ssub.s32 %s24, 1
      %s30 = ssub.s32 %s24, 2
      %s31 = sadd.s32 %s24, 1
      %s32 = ssub.s32 %s24, %s31
      %p33 = scmp.eq.s32.totalorder %s32, 0
      %s35 = sadd.s32 %s34, 1
      %s36 = scalar_select %p33, %s34, %s35
      %p39 = pneg %p33
      %p40 = scmp.eq.s32.totalorder %s24, 1
      %p41 = por %p39, %p40
      %p42 = scmp.ne.s32.totalorder %s34, %s37
      %p43 = scmp.eq.s32.totalorder %s24, 0
      %p44 = por %p42, %p43
      %p45 = scmp.ne.s32.totalorder %s34, %s37
      %p46 = scmp.eq.s32.totalorder %s29, 1
      %p47 = por %p45, %p46
      %p48 = scmp.ne.s32.totalorder %s37, %s38
      %p49 = scmp.eq.s32.totalorder %s29, 0
      %p50 = por %p48, %p49
      %p51 = scmp.ne.s32.totalorder %s37, %s38
      %p52 = scmp.eq.s32.totalorder %s30, 1
      %p53 = por %p51, %p52
      %p55 = scmp.ne.s32.totalorder %s38, %s54
      %p56 = scmp.eq.s32.totalorder %s30, 0
      %p57 = por %p55, %p56
      %s58 = ssub.s32 %s24, %s31
      %p59 = scmp.eq.s32.totalorder %s58, 0
      %s61 = sadd.s32 %s60, 1
      %s62 = scalar_select %p59, %s60, %s61
      %p65 = pneg %p59
      %p66 = scmp.eq.s32.totalorder %s24, 1
      %p67 = por %p65, %p66
      %p68 = scmp.ne.s32.totalorder %s60, %s63
      %p69 = scmp.eq.s32.totalorder %s24, 0
      %p70 = por %p68, %p69
      %p71 = scmp.ne.s32.totalorder %s60, %s63
      %p72 = scmp.eq.s32.totalorder %s29, 1
      %p73 = por %p71, %p72
      %p74 = scmp.ne.s32.totalorder %s63, %s64
      %p75 = scmp.eq.s32.totalorder %s29, 0
      %p76 = por %p74, %p75
      %p77 = scmp.ne.s32.totalorder %s63, %s64
      %p78 = scmp.eq.s32.totalorder %s30, 1
      %p79 = por %p77, %p78
      %p81 = scmp.ne.s32.totalorder %s64, %s80
      %p82 = scmp.eq.s32.totalorder %s30, 0
      %p83 = por %p81, %p82
      %s85 = sadd.s32 %s84, 1
      %p88 = scmp.eq.s32.totalorder %s24, 1
      %p89 = scmp.ne.s32.totalorder %s84, %s86
      %p90 = scmp.eq.s32.totalorder %s24, 0
      %p91 = por %p89, %p90
      %p92 = scmp.ne.s32.totalorder %s84, %s86
      %p93 = scmp.eq.s32.totalorder %s29, 1
      %p94 = por %p92, %p93
      %p95 = scmp.ne.s32.totalorder %s86, %s87
      %p96 = scmp.eq.s32.totalorder %s29, 0
      %p97 = por %p95, %p96
      %p98 = scmp.ne.s32.totalorder %s86, %s87
      %p99 = scmp.eq.s32.totalorder %s30, 1
      %p100 = por %p98, %p99
      %p102 = scmp.ne.s32.totalorder %s87, %s101
      %p103 = scmp.eq.s32.totalorder %s30, 0
      %p104 = por %p102, %p103
      %s106 = sadd.s32 %s105, 1
      %p109 = scmp.eq.s32.totalorder %s24, 1
      %p110 = scmp.ne.s32.totalorder %s105, %s107
      %p111 = scmp.eq.s32.totalorder %s24, 0
      %p112 = por %p110, %p111
      %p113 = scmp.ne.s32.totalorder %s105, %s107
      %p114 = scmp.eq.s32.totalorder %s29, 1
      %p115 = por %p113, %p114
      %p116 = scmp.ne.s32.totalorder %s107, %s108
      %p117 = scmp.eq.s32.totalorder %s29, 0
      %p118 = por %p116, %p117
      %p119 = scmp.ne.s32.totalorder %s107, %s108
      %p120 = scmp.eq.s32.totalorder %s30, 1
      %p121 = por %p119, %p120
      %p123 = scmp.ne.s32.totalorder %s108, %s122
      %p124 = scmp.eq.s32.totalorder %s30, 0
      %p125 = por %p123, %p124
      %s127 = sadd.s32 %s126, 1
      %p130 = scmp.eq.s32.totalorder %s24, 1
      %p131 = scmp.ne.s32.totalorder %s126, %s128
      %p132 = scmp.eq.s32.totalorder %s24, 0
      %p133 = por %p131, %p132
      %p134 = scmp.ne.s32.totalorder %s126, %s128
      %p135 = scmp.eq.s32.totalorder %s29, 1
      %p136 = por %p134, %p135
      %p137 = scmp.ne.s32.totalorder %s128, %s129
      %p138 = scmp.eq.s32.totalorder %s29, 0
      %p139 = por %p137, %p138
      %p140 = scmp.ne.s32.totalorder %s128, %s129
      %p141 = scmp.eq.s32.totalorder %s30, 1
      %p142 = por %p140, %p141
      %p144 = scmp.ne.s32.totalorder %s129, %s143
      %p145 = scmp.eq.s32.totalorder %s30, 0
      %p146 = por %p144, %p145
      %s148 = sadd.s32 %s147, 1
      %p151 = scmp.eq.s32.totalorder %s24, 1
      %p152 = scmp.ne.s32.totalorder %s147, %s149
      %p153 = scmp.eq.s32.totalorder %s24, 0
      %p154 = por %p152, %p153
      %p155 = scmp.ne.s32.totalorder %s147, %s149
      %p156 = scmp.eq.s32.totalorder %s29, 1
      %p157 = por %p155, %p156
      %p158 = scmp.ne.s32.totalorder %s149, %s150
      %p159 = scmp.eq.s32.totalorder %s29, 0
      %p160 = por %p158, %p159
      %p161 = scmp.ne.s32.totalorder %s149, %s150
      %p162 = scmp.eq.s32.totalorder %s30, 1
      %p163 = por %p161, %p162
      %p165 = scmp.ne.s32.totalorder %s150, %s164
      %p166 = scmp.eq.s32.totalorder %s30, 0
      %p167 = por %p165, %p166
      %s169 = sadd.s32 %s168, 1
      %p172 = scmp.eq.s32.totalorder %s24, 1
      %p173 = scmp.ne.s32.totalorder %s168, %s170
      %p174 = scmp.eq.s32.totalorder %s24, 0
      %p175 = por %p173, %p174
      %p176 = scmp.ne.s32.totalorder %s168, %s170
      %p177 = scmp.eq.s32.totalorder %s29, 1
      %p178 = por %p176, %p177
      %p179 = scmp.ne.s32.totalorder %s170, %s171
      %p180 = scmp.eq.s32.totalorder %s29, 0
      %p181 = por %p179, %p180
      %p182 = scmp.ne.s32.totalorder %s170, %s171
      %p183 = scmp.eq.s32.totalorder %s30, 1
      %p184 = por %p182, %p183
      %p186 = scmp.ne.s32.totalorder %s171, %s185
      %p187 = scmp.eq.s32.totalorder %s30, 0
      %p188 = por %p186, %p187
      %s190 = sadd.s32 %s189, 1
      %p193 = scmp.eq.s32.totalorder %s24, 1
      %p194 = scmp.ne.s32.totalorder %s189, %s191
      %p195 = scmp.eq.s32.totalorder %s24, 0
      %p196 = por %p194, %p195
      %p197 = scmp.ne.s32.totalorder %s189, %s191
      %p198 = scmp.eq.s32.totalorder %s29, 1
      %p199 = por %p197, %p198
      %p200 = scmp.ne.s32.totalorder %s191, %s192
      %p201 = scmp.eq.s32.totalorder %s29, 0
      %p202 = por %p200, %p201
      %p203 = scmp.ne.s32.totalorder %s191, %s192
      %p204 = scmp.eq.s32.totalorder %s30, 1
      %p205 = por %p203, %p204
      %p207 = scmp.ne.s32.totalorder %s192, %s206
      %p208 = scmp.eq.s32.totalorder %s30, 0
      %p209 = por %p207, %p208
      %s210 = ssub.s32 %s24, %s31
      %p211 = scmp.eq.s32.totalorder %s210, 0
      %s213 = sadd.s32 %s212, 1
      %s214 = scalar_select %p211, %s212, %s213
      %p217 = pneg %p211
      %p218 = scmp.eq.s32.totalorder %s24, 1
      %p219 = por %p217, %p218
      %p220 = scmp.ne.s32.totalorder %s212, %s215
      %p221 = scmp.eq.s32.totalorder %s24, 0
      %p222 = por %p220, %p221
      %p223 = scmp.ne.s32.totalorder %s212, %s215
      %p224 = scmp.eq.s32.totalorder %s29, 1
      %p225 = por %p223, %p224
      %p226 = scmp.ne.s32.totalorder %s215, %s216
      %p227 = scmp.eq.s32.totalorder %s29, 0
      %p228 = por %p226, %p227
      %p229 = scmp.ne.s32.totalorder %s215, %s216
      %p230 = scmp.eq.s32.totalorder %s30, 1
      %p231 = por %p229, %p230
      %p233 = scmp.ne.s32.totalorder %s216, %s232
      %p234 = scmp.eq.s32.totalorder %s30, 0
      %p235 = por %p233, %p234
      %p236 = scmp.le.s32.totalorder 1, %s24
      %p237 = scmp.lt.s32.totalorder %s24, 3
      %p238 = pnand %p236, %p237
      %p239 = pneg %p238
      // Predicated region
      $region9: #{tpu_custom_call.1} parent=5 // pred_check
        _
      $region10: #{tpu_custom_call.1} parent=5 // pred_check_branch
        %241 = sbr.rel (%p238) target = $region12
      $region11: #{tpu_custom_call.1} parent=5 // pred_region
        %s242 = ssub.s32 %s24, 1
        // Predicated region
        $region13: #{tpu_custom_call.1} parent=11 // pred_check
          %p243 = pneg %p97
        $region14: #{tpu_custom_call.1} parent=11 // pred_check_branch
          %245 = sbr.rel (%p243) target = $region16
        $region15: #{tpu_custom_call.1} parent=11 // pred_region
          %s247 = ssub.s32 3072, 3072
          %248 = vsyncadd [#allocation6], %s247
          %s249 = sshll.u32 [#allocation7], 4
          %s250 = int_to_ptr.vmem [resolvable:$true] %s249
          %255 = dma.hbm_to_vmem [thread:$0]  %s2, 3072, %s250, [#allocation6], 192, 192, 12
        $region16: #{tpu_custom_call.1} parent=11 // pred_fallthru
          _
        // Predicated region
        $region17: #{tpu_custom_call.1} parent=11 // pred_check
          %p256 = pneg %p118
        $region18: #{tpu_custom_call.1} parent=11 // pred_check_branch
          %258 = sbr.rel (%p256) target = $region20
        $region19: #{tpu_custom_call.1} parent=11 // pred_region
          _
        $region20: #{tpu_custom_call.1} parent=11 // pred_fallthru
          _
        // Predicated region
        $region21: #{tpu_custom_call.1} parent=11 // pred_check
          %p259 = pneg %p139
        $region22: #{tpu_custom_call.1} parent=11 // pred_check_branch
          %261 = sbr.rel (%p259) target = $region24
        $region23: #{tpu_custom_call.1} parent=11 // pred_region
          %s263 = ssub.s32 4096, 4096
          %264 = vsyncadd [#allocation9], %s263
          %s265 = sshll.u32 [#allocation8], 4
          %s266 = int_to_ptr.vmem [resolvable:$true] %s265
          %271 = dma.hbm_to_vmem [thread:$0]  %s4, 4096, %s266, [#allocation9], 256, 256, 16
        $region24: #{tpu_custom_call.1} parent=11 // pred_fallthru
          _
        // Predicated region
        $region25: #{tpu_custom_call.1} parent=11 // pred_check
          %p272 = pneg %p160
        $region26: #{tpu_custom_call.1} parent=11 // pred_check_branch
          %274 = sbr.rel (%p272) target = $region28
        $region27: #{tpu_custom_call.1} parent=11 // pred_region
          _
        $region28: #{tpu_custom_call.1} parent=11 // pred_fallthru
          _
        // Predicated region
        $region29: #{tpu_custom_call.1} parent=11 // pred_check
          %p275 = pneg %p181
        $region30: #{tpu_custom_call.1} parent=11 // pred_check_branch
          %277 = sbr.rel (%p275) target = $region32
        $region31: #{tpu_custom_call.1} parent=11 // pred_region
          %s279 = ssub.s32 4096, 4096
          %280 = vsyncadd [#allocation9], %s279
          %s281 = sshll.u32 [#allocation10], 4
          %s282 = int_to_ptr.vmem [resolvable:$true] %s281
          %287 = dma.hbm_to_vmem [thread:$0]  %s6, 4096, %s282, [#allocation9], 64, 64, 4
        $region32: #{tpu_custom_call.1} parent=11 // pred_fallthru
          _
        // Predicated region
        $region33: #{tpu_custom_call.1} parent=11 // pred_check
          %p288 = pneg %p202
        $region34: #{tpu_custom_call.1} parent=11 // pred_check_branch
          %290 = sbr.rel (%p288) target = $region36
        $region35: #{tpu_custom_call.1} parent=11 // pred_region
          _
        $region36: #{tpu_custom_call.1} parent=11 // pred_fallthru
          _
      $region12: #{tpu_custom_call.1} parent=5 // pred_fallthru
        _
      %p291 = scmp.lt.s32.totalorder %s24, 2
      // Predicated region
      $region37: #{tpu_custom_call.1} parent=5 // pred_check
        %p292 = pneg %p291
      $region38: #{tpu_custom_call.1} parent=5 // pred_check_branch
        %294 = sbr.rel (%p292) target = $region40
      $region39: #{tpu_custom_call.1} parent=5 // pred_region
        // Predicated region
        $region41: #{tpu_custom_call.1} parent=39 // pred_check
          %p295 = pneg %p44
        $region42: #{tpu_custom_call.1} parent=39 // pred_check_branch
          %297 = sbr.rel (%p295) target = $region44
        $region43: #{tpu_custom_call.1} parent=39 // pred_region
          %s298 = sand.u32 %s34, 1
          %s299 = scalar_lea.sflag [#allocation3], %s298
          %s300 = sand.u32 %s34, 1
          %s301 = smul.addr %s300, 256
          %s302 = scalar_lea.vmem [#allocation2], %s301
          %s303 = smul.u32 32, %s24
          %s305 = ssub.s32 4096, 4096
          %306 = vsyncadd %s299, %s305
          %s307 = smul.addr %s303, 128
          %s308 = scalar_lea.hbm %s0, %s307
          %s309 = sshll.u32 %s302, 4
          %s310 = int_to_ptr.vmem [resolvable:$true] %s309
          %315 = dma.hbm_to_vmem [thread:$0]  %s308, 4096, %s310, %s299, 128, 128, 8
        $region44: #{tpu_custom_call.1} parent=39 // pred_fallthru
          _
        // Predicated region
        $region45: #{tpu_custom_call.1} parent=39 // pred_check
          %p316 = pneg %p70
        $region46: #{tpu_custom_call.1} parent=39 // pred_check_branch
          %318 = sbr.rel (%p316) target = $region48
        $region47: #{tpu_custom_call.1} parent=39 // pred_region
          %s319 = sand.u32 %s24, 1
          %s320 = scalar_lea.sflag [#allocation6], %s319
          %s321 = sand.u32 %s60, 1
          %s322 = smul.addr %s321, 256
          %s323 = scalar_lea.vmem [#allocation5], %s322
          %s324 = smul.u32 32, %s24
          %s326 = ssub.s32 4096, 4096
          %327 = vsyncadd %s320, %s326
          %s328 = smul.addr %s324, 128
          %s329 = scalar_lea.hbm %s1, %s328
          %s330 = sshll.u32 %s323, 4
          %s331 = int_to_ptr.vmem [resolvable:$true] %s330
          %336 = dma.hbm_to_vmem [thread:$0]  %s329, 4096, %s331, %s320, 128, 128, 8
        $region48: #{tpu_custom_call.1} parent=39 // pred_fallthru
          _
      $region40: #{tpu_custom_call.1} parent=5 // pred_fallthru
        _
      %p337 = scmp.le.s32.totalorder 1, %s24
      %p338 = scmp.lt.s32.totalorder %s24, 3
      %p339 = pnand %p337, %p338
      %p340 = pneg %p339
      // Predicated region
      $region49: #{tpu_custom_call.1} parent=5 // pred_check
        _
      $region50: #{tpu_custom_call.1} parent=5 // pred_check_branch
        %342 = sbr.rel (%p339) target = $region52
      $region51: #{tpu_custom_call.1} parent=5 // pred_region
        %s343 = ssub.s32 %s24, 1
        %s344 = sand.u32 %s37, 1
        %s345 = scalar_lea.sflag [#allocation3], %s344
        %s346 = sand.u32 %s37, 1
        %s347 = smul.addr %s346, 256
        %s348 = scalar_lea.vmem [#allocation2], %s347
        // Predicated region
        $region53: #{tpu_custom_call.1} parent=51 // pred_check
          %p349 = pneg %p50
        $region54: #{tpu_custom_call.1} parent=51 // pred_check_branch
          %351 = sbr.rel (%p349) target = $region56
        $region55: #{tpu_custom_call.1} parent=51 // pred_region
          %352 = dma.done %s345, 4096
        $region56: #{tpu_custom_call.1} parent=51 // pred_fallthru
          _
        %s353 = sand.u32 %s29, 1
        %s354 = scalar_lea.sflag [#allocation6], %s353
        %s355 = sand.u32 %s63, 1
        %s356 = smul.addr %s355, 256
        %s357 = scalar_lea.vmem [#allocation5], %s356
        // Predicated region
        $region57: #{tpu_custom_call.1} parent=51 // pred_check
          %p358 = pneg %p76
        $region58: #{tpu_custom_call.1} parent=51 // pred_check_branch
          %360 = sbr.rel (%p358) target = $region60
        $region59: #{tpu_custom_call.1} parent=51 // pred_region
          %361 = dma.done %s354, 4096
        $region60: #{tpu_custom_call.1} parent=51 // pred_fallthru
          _
        // Predicated region
        $region61: #{tpu_custom_call.1} parent=51 // pred_check
          %p362 = pneg %p97
        $region62: #{tpu_custom_call.1} parent=51 // pred_check_branch
          %364 = sbr.rel (%p362) target = $region64
        $region63: #{tpu_custom_call.1} parent=51 // pred_region
          %365 = dma.done [#allocation6], 3072
        $region64: #{tpu_custom_call.1} parent=51 // pred_fallthru
          _
        // Predicated region
        $region65: #{tpu_custom_call.1} parent=51 // pred_check
          %p366 = pneg %p139
        $region66: #{tpu_custom_call.1} parent=51 // pred_check_branch
          %368 = sbr.rel (%p366) target = $region68
        $region67: #{tpu_custom_call.1} parent=51 // pred_region
          %369 = dma.done [#allocation9], 4096
        $region68: #{tpu_custom_call.1} parent=51 // pred_fallthru
          _
        // Predicated region
        $region69: #{tpu_custom_call.1} parent=51 // pred_check
          %p370 = pneg %p181
        $region70: #{tpu_custom_call.1} parent=51 // pred_check_branch
          %372 = sbr.rel (%p370) target = $region72
        $region71: #{tpu_custom_call.1} parent=51 // pred_region
          %373 = dma.done [#allocation9], 4096
        $region72: #{tpu_custom_call.1} parent=51 // pred_fallthru
          _
        %s374 = sand.u32 %s37, 1
        %s375 = scalar_lea.sflag [#allocation3], %s374
        %s376 = sand.u32 %s37, 1
        %s377 = smul.addr %s376, 256
        %s378 = scalar_lea.vmem [#allocation2], %s377
        %p379 = pneg %p50
        %p380 = pneg %p47
        %s381 = sand.u32 %s29, 1
        %s382 = scalar_lea.sflag [#allocation6], %s381
        %s383 = sand.u32 %s63, 1
        %s384 = smul.addr %s383, 256
        %s385 = scalar_lea.vmem [#allocation5], %s384
        %p386 = pneg %p76
        %p387 = pneg %p73
        %p388 = pneg %p97
        %p389 = pneg %p94
        %p390 = pneg %p118
        %p391 = pneg %p115
        %p392 = pneg %p139
        %p393 = pneg %p136
        %p394 = pneg %p160
        %p395 = pneg %p157
        %p396 = pneg %p181
        %p397 = pneg %p178
        %p398 = pneg %p202
        %p399 = pneg %p199
        %p400 = pneg %p228
        %p401 = pneg %p225
        %s402 = sand.u32 %s215, 1
        %s403 = scalar_lea.sflag [#allocation4], %s402
        %s404 = sand.u32 %s215, 1
        %s405 = smul.addr %s404, 256
        %s406 = scalar_lea.vmem [#allocation11], %s405
        %s407 = smul.u32 32, %s29
        %s408 = smul.u32 32, %s29
        %s409 = smul.u32 32, %s29
        %v411 = vld [vmem:[%s348] sm:$0xff]
        %v412 = vld [vmem:[%s348 + $0x8] sm:$0xff]
        %v413 = vld [vmem:[%s348 + $0x10] sm:$0xff]
        %v414 = vld [vmem:[%s348 + $0x18] sm:$0xff]
        %v415 = vld [vmem:[%s348 + $0x20] sm:$0xff]
        %v416 = vld [vmem:[%s348 + $0x28] sm:$0xff]
        %v417 = vld [vmem:[%s348 + $0x30] sm:$0xff]
        %v418 = vld [vmem:[%s348 + $0x38] sm:$0xff]
        %v419 = vld [vmem:[%s348 + $0x40] sm:$0xff]
        %v420 = vld [vmem:[%s348 + $0x48] sm:$0xff]
        %v421 = vld [vmem:[%s348 + $0x50] sm:$0xff]
        %v422 = vld [vmem:[%s348 + $0x58] sm:$0xff]
        %v423 = vld [vmem:[%s348 + $0x60] sm:$0xff]
        %v424 = vld [vmem:[%s348 + $0x68] sm:$0xff]
        %v425 = vld [vmem:[%s348 + $0x70] sm:$0xff]
        %v426 = vld [vmem:[%s348 + $0x78] sm:$0xff]
        %v427 = vld [vmem:[%s348 + $0x80] sm:$0xff]
        %v428 = vld [vmem:[%s348 + $0x88] sm:$0xff]
        %v429 = vld [vmem:[%s348 + $0x90] sm:$0xff]
        %v430 = vld [vmem:[%s348 + $0x98] sm:$0xff]
        %v431 = vld [vmem:[%s348 + $0xa0] sm:$0xff]
        %v432 = vld [vmem:[%s348 + $0xa8] sm:$0xff]
        %v433 = vld [vmem:[%s348 + $0xb0] sm:$0xff]
        %v434 = vld [vmem:[%s348 + $0xb8] sm:$0xff]
        %v435 = vld [vmem:[%s348 + $0xc0] sm:$0xff]
        %v436 = vld [vmem:[%s348 + $0xc8] sm:$0xff]
        %v437 = vld [vmem:[%s348 + $0xd0] sm:$0xff]
        %v438 = vld [vmem:[%s348 + $0xd8] sm:$0xff]
        %v439 = vld [vmem:[%s348 + $0xe0] sm:$0xff]
        %v440 = vld [vmem:[%s348 + $0xe8] sm:$0xff]
        %v441 = vld [vmem:[%s348 + $0xf0] sm:$0xff]
        %v442 = vld [vmem:[%s348 + $0xf8] sm:$0xff]
        %v443 = vld [vmem:[%s357] sm:$0xff]
        %v444 = vld [vmem:[%s357 + $0x8] sm:$0xff]
        %v445 = vld [vmem:[%s357 + $0x10] sm:$0xff]
        %v446 = vld [vmem:[%s357 + $0x18] sm:$0xff]
        %v447 = vld [vmem:[%s357 + $0x20] sm:$0xff]
        %v448 = vld [vmem:[%s357 + $0x28] sm:$0xff]
        %v449 = vld [vmem:[%s357 + $0x30] sm:$0xff]
        %v450 = vld [vmem:[%s357 + $0x38] sm:$0xff]
        %v451 = vld [vmem:[%s357 + $0x40] sm:$0xff]
        %v452 = vld [vmem:[%s357 + $0x48] sm:$0xff]
        %v453 = vld [vmem:[%s357 + $0x50] sm:$0xff]
        %v454 = vld [vmem:[%s357 + $0x58] sm:$0xff]
        %v455 = vld [vmem:[%s357 + $0x60] sm:$0xff]
        %v456 = vld [vmem:[%s357 + $0x68] sm:$0xff]
        %v457 = vld [vmem:[%s357 + $0x70] sm:$0xff]
        %v458 = vld [vmem:[%s357 + $0x78] sm:$0xff]
        %v459 = vld [vmem:[%s357 + $0x80] sm:$0xff]
        %v460 = vld [vmem:[%s357 + $0x88] sm:$0xff]
        %v461 = vld [vmem:[%s357 + $0x90] sm:$0xff]
        %v462 = vld [vmem:[%s357 + $0x98] sm:$0xff]
        %v463 = vld [vmem:[%s357 + $0xa0] sm:$0xff]
        %v464 = vld [vmem:[%s357 + $0xa8] sm:$0xff]
        %v465 = vld [vmem:[%s357 + $0xb0] sm:$0xff]
        %v466 = vld [vmem:[%s357 + $0xb8] sm:$0xff]
        %v467 = vld [vmem:[%s357 + $0xc0] sm:$0xff]
        %v468 = vld [vmem:[%s357 + $0xc8] sm:$0xff]
        %v469 = vld [vmem:[%s357 + $0xd0] sm:$0xff]
        %v470 = vld [vmem:[%s357 + $0xd8] sm:$0xff]
        %v471 = vld [vmem:[%s357 + $0xe0] sm:$0xff]
        %v472 = vld [vmem:[%s357 + $0xe8] sm:$0xff]
        %v473 = vld [vmem:[%s357 + $0xf0] sm:$0xff]
        %v474 = vld [vmem:[%s357 + $0xf8] sm:$0xff]
        %v475 = vxor.u32 %v443, 2147483648
        %v476 = vxor.u32 %v444, 2147483648
        %v477 = vxor.u32 %v445, 2147483648
        %v478 = vxor.u32 %v446, 2147483648
        %v479 = vxor.u32 %v447, 2147483648
        %v480 = vxor.u32 %v448, 2147483648
        %v481 = vxor.u32 %v449, 2147483648
        %v482 = vxor.u32 %v450, 2147483648
        %v483 = vxor.u32 %v451, 2147483648
        %v484 = vxor.u32 %v452, 2147483648
        %v485 = vxor.u32 %v453, 2147483648
        %v486 = vxor.u32 %v454, 2147483648
        %v487 = vxor.u32 %v455, 2147483648
        %v488 = vxor.u32 %v456, 2147483648
        %v489 = vxor.u32 %v457, 2147483648
        %v490 = vxor.u32 %v458, 2147483648
        %v491 = vxor.u32 %v459, 2147483648
        %v492 = vxor.u32 %v460, 2147483648
        %v493 = vxor.u32 %v461, 2147483648
        %v494 = vxor.u32 %v462, 2147483648
        %v495 = vxor.u32 %v463, 2147483648
        %v496 = vxor.u32 %v464, 2147483648
        %v497 = vxor.u32 %v465, 2147483648
        %v498 = vxor.u32 %v466, 2147483648
        %v499 = vxor.u32 %v467, 2147483648
        %v500 = vxor.u32 %v468, 2147483648
        %v501 = vxor.u32 %v469, 2147483648
        %v502 = vxor.u32 %v470, 2147483648
        %v503 = vxor.u32 %v471, 2147483648
        %v504 = vxor.u32 %v472, 2147483648
        %v505 = vxor.u32 %v473, 2147483648
        %v506 = vxor.u32 %v474, 2147483648
        %v507 = vmul.f32 %v475, 1.442695
        %v508 = vpow.pop %v507
        %v509 = vmul.f32 %v476, 1.442695
        %v510 = vpow.pop %v509
        %v511 = vmul.f32 %v477, 1.442695
        %v512 = vpow.pop %v511
        %v513 = vmul.f32 %v478, 1.442695
        %v514 = vpow.pop %v513
        %v515 = vmul.f32 %v479, 1.442695
        %v516 = vpow.pop %v515
        %v517 = vmul.f32 %v480, 1.442695
        %v518 = vpow.pop %v517
        %v519 = vmul.f32 %v481, 1.442695
        %v520 = vpow.pop %v519
        %v521 = vmul.f32 %v482, 1.442695
        %v522 = vpow.pop %v521
        %v523 = vmul.f32 %v483, 1.442695
        %v524 = vpow.pop %v523
        %v525 = vmul.f32 %v484, 1.442695
        %v526 = vpow.pop %v525
        %v527 = vmul.f32 %v485, 1.442695
        %v528 = vpow.pop %v527
        %v529 = vmul.f32 %v486, 1.442695
        %v530 = vpow.pop %v529
        %v531 = vmul.f32 %v487, 1.442695
        %v532 = vpow.pop %v531
        %v533 = vmul.f32 %v488, 1.442695
        %v534 = vpow.pop %v533
        %v535 = vmul.f32 %v489, 1.442695
        %v536 = vpow.pop %v535
        %v537 = vmul.f32 %v490, 1.442695
        %v538 = vpow.pop %v537
        %v539 = vmul.f32 %v491, 1.442695
        %v540 = vpow.pop %v539
        %v541 = vmul.f32 %v492, 1.442695
        %v542 = vpow.pop %v541
        %v543 = vmul.f32 %v493, 1.442695
        %v544 = vpow.pop %v543
        %v545 = vmul.f32 %v494, 1.442695
        %v546 = vpow.pop %v545
        %v547 = vmul.f32 %v495, 1.442695
        %v548 = vpow.pop %v547
        %v549 = vmul.f32 %v496, 1.442695
        %v550 = vpow.pop %v549
        %v551 = vmul.f32 %v497, 1.442695
        %v552 = vpow.pop %v551
        %v553 = vmul.f32 %v498, 1.442695
        %v554 = vpow.pop %v553
        %v555 = vmul.f32 %v499, 1.442695
        %v556 = vpow.pop %v555
        %v557 = vmul.f32 %v500, 1.442695
        %v558 = vpow.pop %v557
        %v559 = vmul.f32 %v501, 1.442695
        %v560 = vpow.pop %v559
        %v561 = vmul.f32 %v502, 1.442695
        %v562 = vpow.pop %v561
        %v563 = vmul.f32 %v503, 1.442695
        %v564 = vpow.pop %v563
        %v565 = vmul.f32 %v504, 1.442695
        %v566 = vpow.pop %v565
        %v567 = vmul.f32 %v505, 1.442695
        %v568 = vpow.pop %v567
        %v569 = vmul.f32 %v506, 1.442695
        %v570 = vpow.pop %v569
        %v571 = vadd.f32 %v508, 1.0
        %v572 = vadd.f32 %v510, 1.0
        %v573 = vadd.f32 %v512, 1.0
        %v574 = vadd.f32 %v514, 1.0
        %v575 = vadd.f32 %v516, 1.0
        %v576 = vadd.f32 %v518, 1.0
        %v577 = vadd.f32 %v520, 1.0
        %v578 = vadd.f32 %v522, 1.0
        %v579 = vadd.f32 %v524, 1.0
        %v580 = vadd.f32 %v526, 1.0
        %v581 = vadd.f32 %v528, 1.0
        %v582 = vadd.f32 %v530, 1.0
        %v583 = vadd.f32 %v532, 1.0
        %v584 = vadd.f32 %v534, 1.0
        %v585 = vadd.f32 %v536, 1.0
        %v586 = vadd.f32 %v538, 1.0
        %v587 = vadd.f32 %v540, 1.0
        %v588 = vadd.f32 %v542, 1.0
        %v589 = vadd.f32 %v544, 1.0
        %v590 = vadd.f32 %v546, 1.0
        %v591 = vadd.f32 %v548, 1.0
        %v592 = vadd.f32 %v550, 1.0
        %v593 = vadd.f32 %v552, 1.0
        %v594 = vadd.f32 %v554, 1.0
        %v595 = vadd.f32 %v556, 1.0
        %v596 = vadd.f32 %v558, 1.0
        %v597 = vadd.f32 %v560, 1.0
        %v598 = vadd.f32 %v562, 1.0
        %v599 = vadd.f32 %v564, 1.0
        %v600 = vadd.f32 %v566, 1.0
        %v601 = vadd.f32 %v568, 1.0
        %v602 = vadd.f32 %v570, 1.0
        %v603 = vrcp.pop %v571
        %v604 = vmul.f32 1.0, %v603
        %v605 = vrcp.pop %v572
        %v606 = vmul.f32 1.0, %v605
        %v607 = vrcp.pop %v573
        %v608 = vmul.f32 1.0, %v607
        %v609 = vrcp.pop %v574
        %v610 = vmul.f32 1.0, %v609
        %v611 = vrcp.pop %v575
        %v612 = vmul.f32 1.0, %v611
        %v613 = vrcp.pop %v576
        %v614 = vmul.f32 1.0, %v613
        %v615 = vrcp.pop %v577
        %v616 = vmul.f32 1.0, %v615
        %v617 = vrcp.pop %v578
        %v618 = vmul.f32 1.0, %v617
        %v619 = vrcp.pop %v579
        %v620 = vmul.f32 1.0, %v619
        %v621 = vrcp.pop %v580
        %v622 = vmul.f32 1.0, %v621
        %v623 = vrcp.pop %v581
        %v624 = vmul.f32 1.0, %v623
        %v625 = vrcp.pop %v582
        %v626 = vmul.f32 1.0, %v625
        %v627 = vrcp.pop %v583
        %v628 = vmul.f32 1.0, %v627
        %v629 = vrcp.pop %v584
        %v630 = vmul.f32 1.0, %v629
        %v631 = vrcp.pop %v585
        %v632 = vmul.f32 1.0, %v631
        %v633 = vrcp.pop %v586
        %v634 = vmul.f32 1.0, %v633
        %v635 = vrcp.pop %v587
        %v636 = vmul.f32 1.0, %v635
        %v637 = vrcp.pop %v588
        %v638 = vmul.f32 1.0, %v637
        %v639 = vrcp.pop %v589
        %v640 = vmul.f32 1.0, %v639
        %v641 = vrcp.pop %v590
        %v642 = vmul.f32 1.0, %v641
        %v643 = vrcp.pop %v591
        %v644 = vmul.f32 1.0, %v643
        %v645 = vrcp.pop %v592
        %v646 = vmul.f32 1.0, %v645
        %v647 = vrcp.pop %v593
        %v648 = vmul.f32 1.0, %v647
        %v649 = vrcp.pop %v594
        %v650 = vmul.f32 1.0, %v649
        %v651 = vrcp.pop %v595
        %v652 = vmul.f32 1.0, %v651
        %v653 = vrcp.pop %v596
        %v654 = vmul.f32 1.0, %v653
        %v655 = vrcp.pop %v597
        %v656 = vmul.f32 1.0, %v655
        %v657 = vrcp.pop %v598
        %v658 = vmul.f32 1.0, %v657
        %v659 = vrcp.pop %v599
        %v660 = vmul.f32 1.0, %v659
        %v661 = vrcp.pop %v600
        %v662 = vmul.f32 1.0, %v661
        %v663 = vrcp.pop %v601
        %v664 = vmul.f32 1.0, %v663
        %v665 = vrcp.pop %v602
        %v666 = vmul.f32 1.0, %v665
        %v667 = vmul.f32 %v443, %v604
        %v668 = vmul.f32 %v444, %v606
        %v669 = vmul.f32 %v445, %v608
        %v670 = vmul.f32 %v446, %v610
        %v671 = vmul.f32 %v447, %v612
        %v672 = vmul.f32 %v448, %v614
        %v673 = vmul.f32 %v449, %v616
        %v674 = vmul.f32 %v450, %v618
        %v675 = vmul.f32 %v451, %v620
        %v676 = vmul.f32 %v452, %v622
        %v677 = vmul.f32 %v453, %v624
        %v678 = vmul.f32 %v454, %v626
        %v679 = vmul.f32 %v455, %v628
        %v680 = vmul.f32 %v456, %v630
        %v681 = vmul.f32 %v457, %v632
        %v682 = vmul.f32 %v458, %v634
        %v683 = vmul.f32 %v459, %v636
        %v684 = vmul.f32 %v460, %v638
        %v685 = vmul.f32 %v461, %v640
        %v686 = vmul.f32 %v462, %v642
        %v687 = vmul.f32 %v463, %v644
        %v688 = vmul.f32 %v464, %v646
        %v689 = vmul.f32 %v465, %v648
        %v690 = vmul.f32 %v466, %v650
        %v691 = vmul.f32 %v467, %v652
        %v692 = vmul.f32 %v468, %v654
        %v693 = vmul.f32 %v469, %v656
        %v694 = vmul.f32 %v470, %v658
        %v695 = vmul.f32 %v471, %v660
        %v696 = vmul.f32 %v472, %v662
        %v697 = vmul.f32 %v473, %v664
        %v698 = vmul.f32 %v474, %v666
        %v699 = vpack.c.bf16 %v668, %v667
        %v700 = vpack.c.bf16 %v670, %v669
        %v701 = vpack.c.bf16 %v672, %v671
        %v702 = vpack.c.bf16 %v674, %v673
        %v703 = vpack.c.bf16 %v676, %v675
        %v704 = vpack.c.bf16 %v678, %v677
        %v705 = vpack.c.bf16 %v680, %v679
        %v706 = vpack.c.bf16 %v682, %v681
        %v707 = vpack.c.bf16 %v684, %v683
        %v708 = vpack.c.bf16 %v686, %v685
        %v709 = vpack.c.bf16 %v688, %v687
        %v710 = vpack.c.bf16 %v690, %v689
        %v711 = vpack.c.bf16 %v692, %v691
        %v712 = vpack.c.bf16 %v694, %v693
        %v713 = vpack.c.bf16 %v696, %v695
        %v714 = vpack.c.bf16 %v698, %v697
        %v715 = vld [vmem:[#allocation7] sm:$0xff]
        %v716 = vld [vmem:[#allocation7 + $0x8] sm:$0xf]
        %v717 = vld [vmem:[#allocation7 + $0xc] sm:$0xff]
        %v718 = vld [vmem:[#allocation7 + $0x14] sm:$0xf]
        %v719 = vld [vmem:[#allocation7 + $0x18] sm:$0xff]
        %v720 = vld [vmem:[#allocation7 + $0x20] sm:$0xf]
        %v721 = vld [vmem:[#allocation7 + $0x24] sm:$0xff]
        %v722 = vld [vmem:[#allocation7 + $0x2c] sm:$0xf]
        %v723 = vld [vmem:[#allocation7 + $0x30] sm:$0xff]
        %v724 = vld [vmem:[#allocation7 + $0x38] sm:$0xf]
        %v725 = vld [vmem:[#allocation7 + $0x3c] sm:$0xff]
        %v726 = vld [vmem:[#allocation7 + $0x44] sm:$0xf]
        %v727 = vld [vmem:[#allocation7 + $0x48] sm:$0xff]
        %v728 = vld [vmem:[#allocation7 + $0x50] sm:$0xf]
        %v729 = vld [vmem:[#allocation7 + $0x54] sm:$0xff]
        %v730 = vld [vmem:[#allocation7 + $0x5c] sm:$0xf]
        %v731 = vld [vmem:[#allocation7 + $0x60] sm:$0xff]
        %v732 = vld [vmem:[#allocation7 + $0x68] sm:$0xf]
        %v733 = vld [vmem:[#allocation7 + $0x6c] sm:$0xff]
        %v734 = vld [vmem:[#allocation7 + $0x74] sm:$0xf]
        %v735 = vld [vmem:[#allocation7 + $0x78] sm:$0xff]
        %v736 = vld [vmem:[#allocation7 + $0x80] sm:$0xf]
        %v737 = vld [vmem:[#allocation7 + $0x84] sm:$0xff]
        %v738 = vld [vmem:[#allocation7 + $0x8c] sm:$0xf]
        %v739 = vld [vmem:[#allocation7 + $0x90] sm:$0xff]
        %v740 = vld [vmem:[#allocation7 + $0x98] sm:$0xf]
        %v741 = vld [vmem:[#allocation7 + $0x9c] sm:$0xff]
        %v742 = vld [vmem:[#allocation7 + $0xa4] sm:$0xf]
        %v743 = vld [vmem:[#allocation7 + $0xa8] sm:$0xff]
        %v744 = vld [vmem:[#allocation7 + $0xb0] sm:$0xf]
        %v745 = vld [vmem:[#allocation7 + $0xb4] sm:$0xff]
        %v746 = vld [vmem:[#allocation7 + $0xbc] sm:$0xf]
        %v747 = vld [vmem:[%s3] sm:$0x7]
        %v749 = vlaneseq
        %v750 = vshrl.u32 %v749, 7
        %v751 = vsub.s32 0, %v750
        %v752 = vrot.slane %v747, %v751
        %v753 = vlaneseq
        %v754 = vshrl.u32 %v753, 7
        %v755 = vsub.s32 1, %v754
        %v756 = vrot.slane %v747, %v755
        %v757 = vlaneseq
        %v758 = vshrl.u32 %v757, 7
        %v759 = vsub.s32 2, %v758
        %v760 = vrot.slane %v747, %v759
        %v796 = vunpack.c.l.b16 %v715
        %v797 = vunpack.c.h.b16 %v715
        %v798 = vunpack.c.l.b16 %v716
        %v799 = vunpack.c.l.b16 %v717
        %v800 = vunpack.c.h.b16 %v717
        %v801 = vunpack.c.l.b16 %v718
        %v802 = vunpack.c.l.b16 %v719
        %v803 = vunpack.c.h.b16 %v719
        %v804 = vunpack.c.l.b16 %v720
        %v805 = vunpack.c.l.b16 %v721
        %v806 = vunpack.c.h.b16 %v721
        %v807 = vunpack.c.l.b16 %v722
        %v808 = vunpack.c.l.b16 %v723
        %v809 = vunpack.c.h.b16 %v723
        %v810 = vunpack.c.l.b16 %v724
        %v811 = vunpack.c.l.b16 %v725
        %v812 = vunpack.c.h.b16 %v725
        %v813 = vunpack.c.l.b16 %v726
        %v814 = vunpack.c.l.b16 %v727
        %v815 = vunpack.c.h.b16 %v727
        %v816 = vunpack.c.l.b16 %v728
        %v817 = vunpack.c.l.b16 %v729
        %v818 = vunpack.c.h.b16 %v729
        %v819 = vunpack.c.l.b16 %v730
        %v820 = vunpack.c.l.b16 %v731
        %v821 = vunpack.c.h.b16 %v731
        %v822 = vunpack.c.l.b16 %v732
        %v823 = vunpack.c.l.b16 %v733
        %v824 = vunpack.c.h.b16 %v733
        %v825 = vunpack.c.l.b16 %v734
        %v826 = vunpack.c.l.b16 %v735
        %v827 = vunpack.c.h.b16 %v735
        %v828 = vunpack.c.l.b16 %v736
        %v829 = vunpack.c.l.b16 %v737
        %v830 = vunpack.c.h.b16 %v737
        %v831 = vunpack.c.l.b16 %v738
        %v832 = vunpack.c.l.b16 %v739
        %v833 = vunpack.c.h.b16 %v739
        %v834 = vunpack.c.l.b16 %v740
        %v835 = vunpack.c.l.b16 %v741
        %v836 = vunpack.c.h.b16 %v741
        %v837 = vunpack.c.l.b16 %v742
        %v838 = vunpack.c.l.b16 %v743
        %v839 = vunpack.c.h.b16 %v743
        %v840 = vunpack.c.l.b16 %v744
        %v841 = vunpack.c.l.b16 %v745
        %v842 = vunpack.c.h.b16 %v745
        %v843 = vunpack.c.l.b16 %v746
        %v844 = vpack.c.b16 %v799, %v796
        %v845 = vpack.c.b16 %v800, %v797
        %v846 = vpack.c.b16 %v801, %v798
        %v847 = vpack.c.b16 %v805, %v802
        %v848 = vpack.c.b16 %v806, %v803
        %v849 = vpack.c.b16 %v807, %v804
        %v850 = vpack.c.b16 %v811, %v808
        %v851 = vpack.c.b16 %v812, %v809
        %v852 = vpack.c.b16 %v813, %v810
        %v853 = vpack.c.b16 %v817, %v814
        %v854 = vpack.c.b16 %v818, %v815
        %v855 = vpack.c.b16 %v819, %v816
        %v856 = vpack.c.b16 %v823, %v820
        %v857 = vpack.c.b16 %v824, %v821
        %v858 = vpack.c.b16 %v825, %v822
        %v859 = vpack.c.b16 %v829, %v826
        %v860 = vpack.c.b16 %v830, %v827
        %v861 = vpack.c.b16 %v831, %v828
        %v862 = vpack.c.b16 %v835, %v832
        %v863 = vpack.c.b16 %v836, %v833
        %v864 = vpack.c.b16 %v837, %v834
        %v865 = vpack.c.b16 %v841, %v838
        %v866 = vpack.c.b16 %v842, %v839
        %v867 = vpack.c.b16 %v843, %v840
        %892 = vmatprep.subr.bf16.mxu0 %v845
        %893 = vmatpush1.bf16.msra.mxu0 %v844
        %894 = vmatprep.subr.bf16.mxu0 %v848
        %895 = vmatpush1.bf16.msra.mxu0 %v847
        %896 = vmatprep.subr.bf16.mxu0 %v851
        %897 = vmatpush1.bf16.msra.mxu0 %v850
        %898 = vmatprep.subr.bf16.mxu0 %v854
        %899 = vmatpush1.bf16.msra.mxu0 %v853
        %900 = vmatprep.subr.bf16.mxu0 %v857
        %901 = vmatpush1.bf16.msra.mxu0 %v856
        %902 = vmatprep.subr.bf16.mxu0 %v860
        %903 = vmatpush1.bf16.msra.mxu0 %v859
        %904 = vmatprep.subr.bf16.mxu0 %v863
        %905 = vmatpush1.bf16.msra.mxu0 %v862
        %906 = vmatprep.subr.bf16.mxu0 %v866
        %907 = vmatpush1.bf16.msra.mxu0 %v865
        %908 = vmatprep.subr.bf16.mxu0 0
        %909 = vmatpush1.bf16.msra.mxu0 0
        %910 = vmatprep.subr.bf16.mxu0 0
        %911 = vmatpush1.bf16.msra.mxu0 0
        %912 = vmatprep.subr.bf16.mxu0 0
        %913 = vmatpush1.bf16.msra.mxu0 0
        %914 = vmatprep.subr.bf16.mxu0 0
        %915 = vmatpush1.bf16.msra.mxu0 0
        %916 = vmatprep.subr.bf16.mxu0 0
        %917 = vmatpush1.bf16.msra.mxu0 0
        %918 = vmatprep.subr.bf16.mxu0 0
        %919 = vmatpush1.bf16.msra.mxu0 0
        %920 = vmatprep.subr.bf16.mxu0 0
        %921 = vmatpush1.bf16.msra.mxu0 0
        %922 = vmatprep.subr.bf16.mxu0 0
        %923 = vmatpush1.bf16.msra.mxu0 0
        %924 = vmatprep.mubr.bf16.mxu0 0
        %925 = vmatmul.mubr.bf16.gmra.mrb[0].mxu0 %v699
        %v926 = vpop.f32.mrb[0].mxu0
        %v927 = vadd.f32 %v752, %v926
        %v928 = vpop.f32.mrb[0].mxu0
        %v929 = vadd.f32 %v756, %v928
        %v930 = vpop.f32.mrb[0].mxu0
        %v931 = vadd.f32 %v752, %v930
        %v932 = vpop.f32.mrb[0].mxu0
        %v933 = vadd.f32 %v756, %v932
        %934 = vmatprep.mubr.bf16.mxu0 0
        %935 = vmatmul.mubr.bf16.gmra.mrb[0].mxu0 %v700
        %v936 = vpop.f32.mrb[0].mxu0
        %v937 = vadd.f32 %v752, %v936
        %v938 = vpop.f32.mrb[0].mxu0
        %v939 = vadd.f32 %v756, %v938
        %v940 = vpop.f32.mrb[0].mxu0
        %v941 = vadd.f32 %v752, %v940
        %v942 = vpop.f32.mrb[0].mxu0
        %v943 = vadd.f32 %v756, %v942
        %944 = vmatprep.mubr.bf16.mxu0 0
        %945 = vmatmul.mubr.bf16.gmra.mrb[0].mxu0 %v701
        %v946 = vpop.f32.mrb[0].mxu0
        %v947 = vadd.f32 %v752, %v946
        %v948 = vpop.f32.mrb[0].mxu0
        %v949 = vadd.f32 %v756, %v948
        %v950 = vpop.f32.mrb[0].mxu0
        %v951 = vadd.f32 %v752, %v950
        %v952 = vpop.f32.mrb[0].mxu0
        %v953 = vadd.f32 %v756, %v952
        %954 = vmatprep.mubr.bf16.mxu0 0
        %955 = vmatmul.mubr.bf16.gmra.mrb[0].mxu0 %v702
        %v956 = vpop.f32.mrb[0].mxu0
        %v957 = vadd.f32 %v752, %v956
        %v958 = vpop.f32.mrb[0].mxu0
        %v959 = vadd.f32 %v756, %v958
        %v960 = vpop.f32.mrb[0].mxu0
        %v961 = vadd.f32 %v752, %v960
        %v962 = vpop.f32.mrb[0].mxu0
        %v963 = vadd.f32 %v756, %v962
        %964 = vmatprep.mubr.bf16.mxu0 0
        %965 = vmatmul.mubr.bf16.gmra.mrb[0].mxu0 %v703
        %v966 = vpop.f32.mrb[0].mxu0
        %v967 = vadd.f32 %v752, %v966
        %v968 = vpop.f32.mrb[0].mxu0
        %v969 = vadd.f32 %v756, %v968
        %v970 = vpop.f32.mrb[0].mxu0
        %v971 = vadd.f32 %v752, %v970
        %v972 = vpop.f32.mrb[0].mxu0
        %v973 = vadd.f32 %v756, %v972
        %974 = vmatprep.mubr.bf16.mxu0 0
        %975 = vmatmul.mubr.bf16.gmra.mrb[0].mxu0 %v704
        %v976 = vpop.f32.mrb[0].mxu0
        %v977 = vadd.f32 %v752, %v976
        %v978 = vpop.f32.mrb[0].mxu0
        %v979 = vadd.f32 %v756, %v978
        %v980 = vpop.f32.mrb[0].mxu0
        %v981 = vadd.f32 %v752, %v980
        %v982 = vpop.f32.mrb[0].mxu0
        %v983 = vadd.f32 %v756, %v982
        %984 = vmatprep.mubr.bf16.mxu0 0
        %985 = vmatmul.mubr.bf16.gmra.mrb[0].mxu0 %v705
        %v986 = vpop.f32.mrb[0].mxu0
        %v987 = vadd.f32 %v752, %v986
        %v988 = vpop.f32.mrb[0].mxu0
        %v989 = vadd.f32 %v756, %v988
        %v990 = vpop.f32.mrb[0].mxu0
        %v991 = vadd.f32 %v752, %v990
        %v992 = vpop.f32.mrb[0].mxu0
        %v993 = vadd.f32 %v756, %v992
        %994 = vmatprep.mubr.bf16.mxu0 0
        %995 = vmatmul.mubr.bf16.gmra.mrb[0].mxu0 %v706
        %v996 = vpop.f32.mrb[0].mxu0
        %v997 = vadd.f32 %v752, %v996
        %v998 = vpop.f32.mrb[0].mxu0
        %v999 = vadd.f32 %v756, %v998
        %v1000 = vpop.f32.mrb[0].mxu0
        %v1001 = vadd.f32 %v752, %v1000
        %v1002 = vpop.f32.mrb[0].mxu0
        %v1003 = vadd.f32 %v756, %v1002
        %1004 = vmatprep.mubr.bf16.mxu0 0
        %1005 = vmatmul.mubr.bf16.gmra.mrb[0].mxu0 %v707
        %v1006 = vpop.f32.mrb[0].mxu0
        %v1007 = vadd.f32 %v752, %v1006
        %v1008 = vpop.f32.mrb[0].mxu0
        %v1009 = vadd.f32 %v756, %v1008
        %v1010 = vpop.f32.mrb[0].mxu0
        %v1011 = vadd.f32 %v752, %v1010
        %v1012 = vpop.f32.mrb[0].mxu0
        %v1013 = vadd.f32 %v756, %v1012
        %1014 = vmatprep.mubr.bf16.mxu0 0
        %1015 = vmatmul.mubr.bf16.gmra.mrb[0].mxu0 %v708
        %v1016 = vpop.f32.mrb[0].mxu0
        %v1017 = vadd.f32 %v752, %v1016
        %v1018 = vpop.f32.mrb[0].mxu0
        %v1019 = vadd.f32 %v756, %v1018
        %v1020 = vpop.f32.mrb[0].mxu0
        %v1021 = vadd.f32 %v752, %v1020
        %v1022 = vpop.f32.mrb[0].mxu0
        %v1023 = vadd.f32 %v756, %v1022
        %1024 = vmatprep.mubr.bf16.mxu0 0
        %1025 = vmatmul.mubr.bf16.gmra.mrb[0].mxu0 %v709
        %v1026 = vpop.f32.mrb[0].mxu0
        %v1027 = vadd.f32 %v752, %v1026
        %v1028 = vpop.f32.mrb[0].mxu0
        %v1029 = vadd.f32 %v756, %v1028
        %v1030 = vpop.f32.mrb[0].mxu0
        %v1031 = vadd.f32 %v752, %v1030
        %v1032 = vpop.f32.mrb[0].mxu0
        %v1033 = vadd.f32 %v756, %v1032
        %1034 = vmatprep.mubr.bf16.mxu0 0
        %1035 = vmatmul.mubr.bf16.gmra.mrb[0].mxu0 %v710
        %v1036 = vpop.f32.mrb[0].mxu0
        %v1037 = vadd.f32 %v752, %v1036
        %v1038 = vpop.f32.mrb[0].mxu0
        %v1039 = vadd.f32 %v756, %v1038
        %v1040 = vpop.f32.mrb[0].mxu0
        %v1041 = vadd.f32 %v752, %v1040
        %v1042 = vpop.f32.mrb[0].mxu0
        %v1043 = vadd.f32 %v756, %v1042
        %1044 = vmatprep.mubr.bf16.mxu0 0
        %1045 = vmatmul.mubr.bf16.gmra.mrb[0].mxu0 %v711
        %v1046 = vpop.f32.mrb[0].mxu0
        %v1047 = vadd.f32 %v752, %v1046
        %v1048 = vpop.f32.mrb[0].mxu0
        %v1049 = vadd.f32 %v756, %v1048
        %v1050 = vpop.f32.mrb[0].mxu0
        %v1051 = vadd.f32 %v752, %v1050
        %v1052 = vpop.f32.mrb[0].mxu0
        %v1053 = vadd.f32 %v756, %v1052
        %1054 = vmatprep.mubr.bf16.mxu0 0
        %1055 = vmatmul.mubr.bf16.gmra.mrb[0].mxu0 %v712
        %v1056 = vpop.f32.mrb[0].mxu0
        %v1057 = vadd.f32 %v752, %v1056
        %v1058 = vpop.f32.mrb[0].mxu0
        %v1059 = vadd.f32 %v756, %v1058
        %v1060 = vpop.f32.mrb[0].mxu0
        %v1061 = vadd.f32 %v752, %v1060
        %v1062 = vpop.f32.mrb[0].mxu0
        %v1063 = vadd.f32 %v756, %v1062
        %1064 = vmatprep.mubr.bf16.mxu0 0
        %1065 = vmatmul.mubr.bf16.gmra.mrb[0].mxu0 %v713
        %v1066 = vpop.f32.mrb[0].mxu0
        %v1067 = vadd.f32 %v752, %v1066
        %v1068 = vpop.f32.mrb[0].mxu0
        %v1069 = vadd.f32 %v756, %v1068
        %v1070 = vpop.f32.mrb[0].mxu0
        %v1071 = vadd.f32 %v752, %v1070
        %v1072 = vpop.f32.mrb[0].mxu0
        %v1073 = vadd.f32 %v756, %v1072
        %1074 = vmatprep.mubr.bf16.mxu0 0
        %1075 = vmatmul.mubr.bf16.gmra.mrb[0].mxu0 %v714
        %v1076 = vpop.f32.mrb[0].mxu0
        %v1077 = vadd.f32 %v752, %v1076
        %v1078 = vpop.f32.mrb[0].mxu0
        %v1079 = vadd.f32 %v756, %v1078
        %v1080 = vpop.f32.mrb[0].mxu0
        %v1081 = vadd.f32 %v752, %v1080
        %v1082 = vpop.f32.mrb[0].mxu0
        %v1083 = vadd.f32 %v756, %v1082
        %1084 = vdwg.mxu0
        %1085 = vmatprep.subr.bf16.mxu0 0
        %1086 = vmatpush1.bf16.msra.mxu0 %v846
        %1087 = vmatprep.subr.bf16.mxu0 0
        %1088 = vmatpush1.bf16.msra.mxu0 %v849
        %1089 = vmatprep.subr.bf16.mxu0 0
        %1090 = vmatpush1.bf16.msra.mxu0 %v852
        %1091 = vmatprep.subr.bf16.mxu0 0
        %1092 = vmatpush1.bf16.msra.mxu0 %v855
        %1093 = vmatprep.subr.bf16.mxu0 0
        %1094 = vmatpush1.bf16.msra.mxu0 %v858
        %1095 = vmatprep.subr.bf16.mxu0 0
        %1096 = vmatpush1.bf16.msra.mxu0 %v861
        %1097 = vmatprep.subr.bf16.mxu0 0
        %1098 = vmatpush1.bf16.msra.mxu0 %v864
        %1099 = vmatprep.subr.bf16.mxu0 0
        %1100 = vmatpush1.bf16.msra.mxu0 %v867
        %1101 = vmatprep.subr.bf16.mxu0 0
        %1102 = vmatpush1.bf16.msra.mxu0 0
        %1103 = vmatprep.subr.bf16.mxu0 0
        %1104 = vmatpush1.bf16.msra.mxu0 0
        %1105 = vmatprep.subr.bf16.mxu0 0
        %1106 = vmatpush1.bf16.msra.mxu0 0
        %1107 = vmatprep.subr.bf16.mxu0 0
        %1108 = vmatpush1.bf16.msra.mxu0 0
        %1109 = vmatprep.subr.bf16.mxu0 0
        %1110 = vmatpush1.bf16.msra.mxu0 0
        %1111 = vmatprep.subr.bf16.mxu0 0
        %1112 = vmatpush1.bf16.msra.mxu0 0
        %1113 = vmatprep.subr.bf16.mxu0 0
        %1114 = vmatpush1.bf16.msra.mxu0 0
        %1115 = vmatprep.subr.bf16.mxu0 0
        %1116 = vmatpush1.bf16.msra.mxu0 0
        %1117 = vmatprep.mubr.bf16.mxu0 0
        %1118 = vmatmul.mubr.bf16.gmra.mrb[0].mxu0 %v699
        %v1119 = vpop.f32.mrb[0].mxu0
        %v1120 = vadd.f32 %v760, %v1119
        %v1121 = vpop.f32.mrb[0].mxu0
        %v1122 = vpop.f32.mrb[0].mxu0
        %v1123 = vadd.f32 %v760, %v1122
        %v1124 = vpop.f32.mrb[0].mxu0
        %1125 = vmatprep.mubr.bf16.mxu0 0
        %1126 = vmatmul.mubr.bf16.gmra.mrb[0].mxu0 %v700
        %v1127 = vpop.f32.mrb[0].mxu0
        %v1128 = vadd.f32 %v760, %v1127
        %v1129 = vpop.f32.mrb[0].mxu0
        %v1130 = vpop.f32.mrb[0].mxu0
        %v1131 = vadd.f32 %v760, %v1130
        %v1132 = vpop.f32.mrb[0].mxu0
        %1133 = vmatprep.mubr.bf16.mxu0 0
        %1134 = vmatmul.mubr.bf16.gmra.mrb[0].mxu0 %v701
        %v1135 = vpop.f32.mrb[0].mxu0
        %v1136 = vadd.f32 %v760, %v1135
        %v1137 = vpop.f32.mrb[0].mxu0
        %v1138 = vpop.f32.mrb[0].mxu0
        %v1139 = vadd.f32 %v760, %v1138
        %v1140 = vpop.f32.mrb[0].mxu0
        %1141 = vmatprep.mubr.bf16.mxu0 0
        %1142 = vmatmul.mubr.bf16.gmra.mrb[0].mxu0 %v702
        %v1143 = vpop.f32.mrb[0].mxu0
        %v1144 = vadd.f32 %v760, %v1143
        %v1145 = vpop.f32.mrb[0].mxu0
        %v1146 = vpop.f32.mrb[0].mxu0
        %v1147 = vadd.f32 %v760, %v1146
        %v1148 = vpop.f32.mrb[0].mxu0
        %1149 = vmatprep.mubr.bf16.mxu0 0
        %1150 = vmatmul.mubr.bf16.gmra.mrb[0].mxu0 %v703
        %v1151 = vpop.f32.mrb[0].mxu0
        %v1152 = vadd.f32 %v760, %v1151
        %v1153 = vpop.f32.mrb[0].mxu0
        %v1154 = vpop.f32.mrb[0].mxu0
        %v1155 = vadd.f32 %v760, %v1154
        %v1156 = vpop.f32.mrb[0].mxu0
        %1157 = vmatprep.mubr.bf16.mxu0 0
        %1158 = vmatmul.mubr.bf16.gmra.mrb[0].mxu0 %v704
        %v1159 = vpop.f32.mrb[0].mxu0
        %v1160 = vadd.f32 %v760, %v1159
        %v1161 = vpop.f32.mrb[0].mxu0
        %v1162 = vpop.f32.mrb[0].mxu0
        %v1163 = vadd.f32 %v760, %v1162
        %v1164 = vpop.f32.mrb[0].mxu0
        %1165 = vmatprep.mubr.bf16.mxu0 0
        %1166 = vmatmul.mubr.bf16.gmra.mrb[0].mxu0 %v705
        %v1167 = vpop.f32.mrb[0].mxu0
        %v1168 = vadd.f32 %v760, %v1167
        %v1169 = vpop.f32.mrb[0].mxu0
        %v1170 = vpop.f32.mrb[0].mxu0
        %v1171 = vadd.f32 %v760, %v1170
        %v1172 = vpop.f32.mrb[0].mxu0
        %1173 = vmatprep.mubr.bf16.mxu0 0
        %1174 = vmatmul.mubr.bf16.gmra.mrb[0].mxu0 %v706
        %v1175 = vpop.f32.mrb[0].mxu0
        %v1176 = vadd.f32 %v760, %v1175
        %v1177 = vpop.f32.mrb[0].mxu0
        %v1178 = vpop.f32.mrb[0].mxu0
        %v1179 = vadd.f32 %v760, %v1178
        %v1180 = vpop.f32.mrb[0].mxu0
        %1181 = vmatprep.mubr.bf16.mxu0 0
        %1182 = vmatmul.mubr.bf16.gmra.mrb[0].mxu0 %v707
        %v1183 = vpop.f32.mrb[0].mxu0
        %v1184 = vadd.f32 %v760, %v1183
        %v1185 = vpop.f32.mrb[0].mxu0
        %v1186 = vpop.f32.mrb[0].mxu0
        %v1187 = vadd.f32 %v760, %v1186
        %v1188 = vpop.f32.mrb[0].mxu0
        %1189 = vmatprep.mubr.bf16.mxu0 0
        %1190 = vmatmul.mubr.bf16.gmra.mrb[0].mxu0 %v708
        %v1191 = vpop.f32.mrb[0].mxu0
        %v1192 = vadd.f32 %v760, %v1191
        %v1193 = vpop.f32.mrb[0].mxu0
        %v1194 = vpop.f32.mrb[0].mxu0
        %v1195 = vadd.f32 %v760, %v1194
        %v1196 = vpop.f32.mrb[0].mxu0
        %1197 = vmatprep.mubr.bf16.mxu0 0
        %1198 = vmatmul.mubr.bf16.gmra.mrb[0].mxu0 %v709
        %v1199 = vpop.f32.mrb[0].mxu0
        %v1200 = vadd.f32 %v760, %v1199
        %v1201 = vpop.f32.mrb[0].mxu0
        %v1202 = vpop.f32.mrb[0].mxu0
        %v1203 = vadd.f32 %v760, %v1202
        %v1204 = vpop.f32.mrb[0].mxu0
        %1205 = vmatprep.mubr.bf16.mxu0 0
        %1206 = vmatmul.mubr.bf16.gmra.mrb[0].mxu0 %v710
        %v1207 = vpop.f32.mrb[0].mxu0
        %v1208 = vadd.f32 %v760, %v1207
        %v1209 = vpop.f32.mrb[0].mxu0
        %v1210 = vpop.f32.mrb[0].mxu0
        %v1211 = vadd.f32 %v760, %v1210
        %v1212 = vpop.f32.mrb[0].mxu0
        %1213 = vmatprep.mubr.bf16.mxu0 0
        %1214 = vmatmul.mubr.bf16.gmra.mrb[0].mxu0 %v711
        %v1215 = vpop.f32.mrb[0].mxu0
        %v1216 = vadd.f32 %v760, %v1215
        %v1217 = vpop.f32.mrb[0].mxu0
        %v1218 = vpop.f32.mrb[0].mxu0
        %v1219 = vadd.f32 %v760, %v1218
        %v1220 = vpop.f32.mrb[0].mxu0
        %1221 = vmatprep.mubr.bf16.mxu0 0
        %1222 = vmatmul.mubr.bf16.gmra.mrb[0].mxu0 %v712
        %v1223 = vpop.f32.mrb[0].mxu0
        %v1224 = vadd.f32 %v760, %v1223
        %v1225 = vpop.f32.mrb[0].mxu0
        %v1226 = vpop.f32.mrb[0].mxu0
        %v1227 = vadd.f32 %v760, %v1226
        %v1228 = vpop.f32.mrb[0].mxu0
        %1229 = vmatprep.mubr.bf16.mxu0 0
        %1230 = vmatmul.mubr.bf16.gmra.mrb[0].mxu0 %v713
        %v1231 = vpop.f32.mrb[0].mxu0
        %v1232 = vadd.f32 %v760, %v1231
        %v1233 = vpop.f32.mrb[0].mxu0
        %v1234 = vpop.f32.mrb[0].mxu0
        %v1235 = vadd.f32 %v760, %v1234
        %v1236 = vpop.f32.mrb[0].mxu0
        %1237 = vmatprep.mubr.bf16.mxu0 0
        %1238 = vmatmul.mubr.bf16.gmra.mrb[0].mxu0 %v714
        %v1239 = vpop.f32.mrb[0].mxu0
        %v1240 = vadd.f32 %v760, %v1239
        %v1241 = vpop.f32.mrb[0].mxu0
        %v1242 = vpop.f32.mrb[0].mxu0
        %v1243 = vadd.f32 %v760, %v1242
        %v1244 = vpop.f32.mrb[0].mxu0
        %1245 = vdwg.mxu0
        %1246 = vadd.xlane.f32.xlu0 %v411
        %v1247 = vpop.xlane.xlu0 %1246
        %1248 = vadd.xlane.f32.xlu0 %v412
        %v1249 = vpop.xlane.xlu0 %1248
        %1250 = vadd.xlane.f32.xlu0 %v413
        %v1251 = vpop.xlane.xlu0 %1250
        %1252 = vadd.xlane.f32.xlu0 %v414
        %v1253 = vpop.xlane.xlu0 %1252
        %1254 = vadd.xlane.f32.xlu0 %v415
        %v1255 = vpop.xlane.xlu0 %1254
        %1256 = vadd.xlane.f32.xlu0 %v416
        %v1257 = vpop.xlane.xlu0 %1256
        %1258 = vadd.xlane.f32.xlu0 %v417
        %v1259 = vpop.xlane.xlu0 %1258
        %1260 = vadd.xlane.f32.xlu0 %v418
        %v1261 = vpop.xlane.xlu0 %1260
        %1262 = vadd.xlane.f32.xlu0 %v419
        %v1263 = vpop.xlane.xlu0 %1262
        %1264 = vadd.xlane.f32.xlu0 %v420
        %v1265 = vpop.xlane.xlu0 %1264
        %1266 = vadd.xlane.f32.xlu0 %v421
        %v1267 = vpop.xlane.xlu0 %1266
        %1268 = vadd.xlane.f32.xlu0 %v422
        %v1269 = vpop.xlane.xlu0 %1268
        %1270 = vadd.xlane.f32.xlu0 %v423
        %v1271 = vpop.xlane.xlu0 %1270
        %1272 = vadd.xlane.f32.xlu0 %v424
        %v1273 = vpop.xlane.xlu0 %1272
        %1274 = vadd.xlane.f32.xlu0 %v425
        %v1275 = vpop.xlane.xlu0 %1274
        %1276 = vadd.xlane.f32.xlu0 %v426
        %v1277 = vpop.xlane.xlu0 %1276
        %1278 = vadd.xlane.f32.xlu0 %v427
        %v1279 = vpop.xlane.xlu0 %1278
        %1280 = vadd.xlane.f32.xlu0 %v428
        %v1281 = vpop.xlane.xlu0 %1280
        %1282 = vadd.xlane.f32.xlu0 %v429
        %v1283 = vpop.xlane.xlu0 %1282
        %1284 = vadd.xlane.f32.xlu0 %v430
        %v1285 = vpop.xlane.xlu0 %1284
        %1286 = vadd.xlane.f32.xlu0 %v431
        %v1287 = vpop.xlane.xlu0 %1286
        %1288 = vadd.xlane.f32.xlu0 %v432
        %v1289 = vpop.xlane.xlu0 %1288
        %1290 = vadd.xlane.f32.xlu0 %v433
        %v1291 = vpop.xlane.xlu0 %1290
        %1292 = vadd.xlane.f32.xlu0 %v434
        %v1293 = vpop.xlane.xlu0 %1292
        %1294 = vadd.xlane.f32.xlu0 %v435
        %v1295 = vpop.xlane.xlu0 %1294
        %1296 = vadd.xlane.f32.xlu0 %v436
        %v1297 = vpop.xlane.xlu0 %1296
        %1298 = vadd.xlane.f32.xlu0 %v437
        %v1299 = vpop.xlane.xlu0 %1298
        %1300 = vadd.xlane.f32.xlu0 %v438
        %v1301 = vpop.xlane.xlu0 %1300
        %1302 = vadd.xlane.f32.xlu0 %v439
        %v1303 = vpop.xlane.xlu0 %1302
        %1304 = vadd.xlane.f32.xlu0 %v440
        %v1305 = vpop.xlane.xlu0 %1304
        %1306 = vadd.xlane.f32.xlu0 %v441
        %v1307 = vpop.xlane.xlu0 %1306
        %1308 = vadd.xlane.f32.xlu0 %v442
        %v1309 = vpop.xlane.xlu0 %1308
        %v1310 = vrcp.pop 128.0
        %v1311 = vmul.f32 %v1247, %v1310
        %v1312 = vmul.f32 %v1249, %v1310
        %v1313 = vmul.f32 %v1251, %v1310
        %v1314 = vmul.f32 %v1253, %v1310
        %v1315 = vmul.f32 %v1255, %v1310
        %v1316 = vmul.f32 %v1257, %v1310
        %v1317 = vmul.f32 %v1259, %v1310
        %v1318 = vmul.f32 %v1261, %v1310
        %v1319 = vmul.f32 %v1263, %v1310
        %v1320 = vmul.f32 %v1265, %v1310
        %v1321 = vmul.f32 %v1267, %v1310
        %v1322 = vmul.f32 %v1269, %v1310
        %v1323 = vmul.f32 %v1271, %v1310
        %v1324 = vmul.f32 %v1273, %v1310
        %v1325 = vmul.f32 %v1275, %v1310
        %v1326 = vmul.f32 %v1277, %v1310
        %v1327 = vmul.f32 %v1279, %v1310
        %v1328 = vmul.f32 %v1281, %v1310
        %v1329 = vmul.f32 %v1283, %v1310
        %v1330 = vmul.f32 %v1285, %v1310
        %v1331 = vmul.f32 %v1287, %v1310
        %v1332 = vmul.f32 %v1289, %v1310
        %v1333 = vmul.f32 %v1291, %v1310
        %v1334 = vmul.f32 %v1293, %v1310
        %v1335 = vmul.f32 %v1295, %v1310
        %v1336 = vmul.f32 %v1297, %v1310
        %v1337 = vmul.f32 %v1299, %v1310
        %v1338 = vmul.f32 %v1301, %v1310
        %v1339 = vmul.f32 %v1303, %v1310
        %v1340 = vmul.f32 %v1305, %v1310
        %v1341 = vmul.f32 %v1307, %v1310
        %v1342 = vmul.f32 %v1309, %v1310
        %v1343 = vsub.f32 %v411, %v1311
        %v1344 = vsub.f32 %v412, %v1312
        %v1345 = vsub.f32 %v413, %v1313
        %v1346 = vsub.f32 %v414, %v1314
        %v1347 = vsub.f32 %v415, %v1315
        %v1348 = vsub.f32 %v416, %v1316
        %v1349 = vsub.f32 %v417, %v1317
        %v1350 = vsub.f32 %v418, %v1318
        %v1351 = vsub.f32 %v419, %v1319
        %v1352 = vsub.f32 %v420, %v1320
        %v1353 = vsub.f32 %v421, %v1321
        %v1354 = vsub.f32 %v422, %v1322
        %v1355 = vsub.f32 %v423, %v1323
        %v1356 = vsub.f32 %v424, %v1324
        %v1357 = vsub.f32 %v425, %v1325
        %v1358 = vsub.f32 %v426, %v1326
        %v1359 = vsub.f32 %v427, %v1327
        %v1360 = vsub.f32 %v428, %v1328
        %v1361 = vsub.f32 %v429, %v1329
        %v1362 = vsub.f32 %v430, %v1330
        %v1363 = vsub.f32 %v431, %v1331
        %v1364 = vsub.f32 %v432, %v1332
        %v1365 = vsub.f32 %v433, %v1333
        %v1366 = vsub.f32 %v434, %v1334
        %v1367 = vsub.f32 %v435, %v1335
        %v1368 = vsub.f32 %v436, %v1336
        %v1369 = vsub.f32 %v437, %v1337
        %v1370 = vsub.f32 %v438, %v1338
        %v1371 = vsub.f32 %v439, %v1339
        %v1372 = vsub.f32 %v440, %v1340
        %v1373 = vsub.f32 %v441, %v1341
        %v1374 = vsub.f32 %v442, %v1342
        %v1375 = vmul.f32 %v1343, %v1343
        %v1376 = vmul.f32 %v1344, %v1344
        %v1377 = vmul.f32 %v1345, %v1345
        %v1378 = vmul.f32 %v1346, %v1346
        %v1379 = vmul.f32 %v1347, %v1347
        %v1380 = vmul.f32 %v1348, %v1348
        %v1381 = vmul.f32 %v1349, %v1349
        %v1382 = vmul.f32 %v1350, %v1350
        %v1383 = vmul.f32 %v1351, %v1351
        %v1384 = vmul.f32 %v1352, %v1352
        %v1385 = vmul.f32 %v1353, %v1353
        %v1386 = vmul.f32 %v1354, %v1354
        %v1387 = vmul.f32 %v1355, %v1355
        %v1388 = vmul.f32 %v1356, %v1356
        %v1389 = vmul.f32 %v1357, %v1357
        %v1390 = vmul.f32 %v1358, %v1358
        %v1391 = vmul.f32 %v1359, %v1359
        %v1392 = vmul.f32 %v1360, %v1360
        %v1393 = vmul.f32 %v1361, %v1361
        %v1394 = vmul.f32 %v1362, %v1362
        %v1395 = vmul.f32 %v1363, %v1363
        %v1396 = vmul.f32 %v1364, %v1364
        %v1397 = vmul.f32 %v1365, %v1365
        %v1398 = vmul.f32 %v1366, %v1366
        %v1399 = vmul.f32 %v1367, %v1367
        %v1400 = vmul.f32 %v1368, %v1368
        %v1401 = vmul.f32 %v1369, %v1369
        %v1402 = vmul.f32 %v1370, %v1370
        %v1403 = vmul.f32 %v1371, %v1371
        %v1404 = vmul.f32 %v1372, %v1372
        %v1405 = vmul.f32 %v1373, %v1373
        %v1406 = vmul.f32 %v1374, %v1374
        %1407 = vadd.xlane.f32.xlu0 %v1375
        %v1408 = vpop.xlane.xlu0 %1407
        %1409 = vadd.xlane.f32.xlu0 %v1376
        %v1410 = vpop.xlane.xlu0 %1409
        %1411 = vadd.xlane.f32.xlu0 %v1377
        %v1412 = vpop.xlane.xlu0 %1411
        %1413 = vadd.xlane.f32.xlu0 %v1378
        %v1414 = vpop.xlane.xlu0 %1413
        %1415 = vadd.xlane.f32.xlu0 %v1379
        %v1416 = vpop.xlane.xlu0 %1415
        %1417 = vadd.xlane.f32.xlu0 %v1380
        %v1418 = vpop.xlane.xlu0 %1417
        %1419 = vadd.xlane.f32.xlu0 %v1381
        %v1420 = vpop.xlane.xlu0 %1419
        %1421 = vadd.xlane.f32.xlu0 %v1382
        %v1422 = vpop.xlane.xlu0 %1421
        %1423 = vadd.xlane.f32.xlu0 %v1383
        %v1424 = vpop.xlane.xlu0 %1423
        %1425 = vadd.xlane.f32.xlu0 %v1384
        %v1426 = vpop.xlane.xlu0 %1425
        %1427 = vadd.xlane.f32.xlu0 %v1385
        %v1428 = vpop.xlane.xlu0 %1427
        %1429 = vadd.xlane.f32.xlu0 %v1386
        %v1430 = vpop.xlane.xlu0 %1429
        %1431 = vadd.xlane.f32.xlu0 %v1387
        %v1432 = vpop.xlane.xlu0 %1431
        %1433 = vadd.xlane.f32.xlu0 %v1388
        %v1434 = vpop.xlane.xlu0 %1433
        %1435 = vadd.xlane.f32.xlu0 %v1389
        %v1436 = vpop.xlane.xlu0 %1435
        %1437 = vadd.xlane.f32.xlu0 %v1390
        %v1438 = vpop.xlane.xlu0 %1437
        %1439 = vadd.xlane.f32.xlu0 %v1391
        %v1440 = vpop.xlane.xlu0 %1439
        %1441 = vadd.xlane.f32.xlu0 %v1392
        %v1442 = vpop.xlane.xlu0 %1441
        %1443 = vadd.xlane.f32.xlu0 %v1393
        %v1444 = vpop.xlane.xlu0 %1443
        %1445 = vadd.xlane.f32.xlu0 %v1394
        %v1446 = vpop.xlane.xlu0 %1445
        %1447 = vadd.xlane.f32.xlu0 %v1395
        %v1448 = vpop.xlane.xlu0 %1447
        %1449 = vadd.xlane.f32.xlu0 %v1396
        %v1450 = vpop.xlane.xlu0 %1449
        %1451 = vadd.xlane.f32.xlu0 %v1397
        %v1452 = vpop.xlane.xlu0 %1451
        %1453 = vadd.xlane.f32.xlu0 %v1398
        %v1454 = vpop.xlane.xlu0 %1453
        %1455 = vadd.xlane.f32.xlu0 %v1399
        %v1456 = vpop.xlane.xlu0 %1455
        %1457 = vadd.xlane.f32.xlu0 %v1400
        %v1458 = vpop.xlane.xlu0 %1457
        %1459 = vadd.xlane.f32.xlu0 %v1401
        %v1460 = vpop.xlane.xlu0 %1459
        %1461 = vadd.xlane.f32.xlu0 %v1402
        %v1462 = vpop.xlane.xlu0 %1461
        %1463 = vadd.xlane.f32.xlu0 %v1403
        %v1464 = vpop.xlane.xlu0 %1463
        %1465 = vadd.xlane.f32.xlu0 %v1404
        %v1466 = vpop.xlane.xlu0 %1465
        %1467 = vadd.xlane.f32.xlu0 %v1405
        %v1468 = vpop.xlane.xlu0 %1467
        %1469 = vadd.xlane.f32.xlu0 %v1406
        %v1470 = vpop.xlane.xlu0 %1469
        %v1471 = vmul.f32 %v1408, %v1310
        %v1472 = vmul.f32 %v1410, %v1310
        %v1473 = vmul.f32 %v1412, %v1310
        %v1474 = vmul.f32 %v1414, %v1310
        %v1475 = vmul.f32 %v1416, %v1310
        %v1476 = vmul.f32 %v1418, %v1310
        %v1477 = vmul.f32 %v1420, %v1310
        %v1478 = vmul.f32 %v1422, %v1310
        %v1479 = vmul.f32 %v1424, %v1310
        %v1480 = vmul.f32 %v1426, %v1310
        %v1481 = vmul.f32 %v1428, %v1310
        %v1482 = vmul.f32 %v1430, %v1310
        %v1483 = vmul.f32 %v1432, %v1310
        %v1484 = vmul.f32 %v1434, %v1310
        %v1485 = vmul.f32 %v1436, %v1310
        %v1486 = vmul.f32 %v1438, %v1310
        %v1487 = vmul.f32 %v1440, %v1310
        %v1488 = vmul.f32 %v1442, %v1310
        %v1489 = vmul.f32 %v1444, %v1310
        %v1490 = vmul.f32 %v1446, %v1310
        %v1491 = vmul.f32 %v1448, %v1310
        %v1492 = vmul.f32 %v1450, %v1310
        %v1493 = vmul.f32 %v1452, %v1310
        %v1494 = vmul.f32 %v1454, %v1310
        %v1495 = vmul.f32 %v1456, %v1310
        %v1496 = vmul.f32 %v1458, %v1310
        %v1497 = vmul.f32 %v1460, %v1310
        %v1498 = vmul.f32 %v1462, %v1310
        %v1499 = vmul.f32 %v1464, %v1310
        %v1500 = vmul.f32 %v1466, %v1310
        %v1501 = vmul.f32 %v1468, %v1310
        %v1502 = vmul.f32 %v1470, %v1310
        %v1503 = vadd.f32 %v1471, 1e-05
        %v1504 = vadd.f32 %v1472, 1e-05
        %v1505 = vadd.f32 %v1473, 1e-05
        %v1506 = vadd.f32 %v1474, 1e-05
        %v1507 = vadd.f32 %v1475, 1e-05
        %v1508 = vadd.f32 %v1476, 1e-05
        %v1509 = vadd.f32 %v1477, 1e-05
        %v1510 = vadd.f32 %v1478, 1e-05
        %v1511 = vadd.f32 %v1479, 1e-05
        %v1512 = vadd.f32 %v1480, 1e-05
        %v1513 = vadd.f32 %v1481, 1e-05
        %v1514 = vadd.f32 %v1482, 1e-05
        %v1515 = vadd.f32 %v1483, 1e-05
        %v1516 = vadd.f32 %v1484, 1e-05
        %v1517 = vadd.f32 %v1485, 1e-05
        %v1518 = vadd.f32 %v1486, 1e-05
        %v1519 = vadd.f32 %v1487, 1e-05
        %v1520 = vadd.f32 %v1488, 1e-05
        %v1521 = vadd.f32 %v1489, 1e-05
        %v1522 = vadd.f32 %v1490, 1e-05
        %v1523 = vadd.f32 %v1491, 1e-05
        %v1524 = vadd.f32 %v1492, 1e-05
        %v1525 = vadd.f32 %v1493, 1e-05
        %v1526 = vadd.f32 %v1494, 1e-05
        %v1527 = vadd.f32 %v1495, 1e-05
        %v1528 = vadd.f32 %v1496, 1e-05
        %v1529 = vadd.f32 %v1497, 1e-05
        %v1530 = vadd.f32 %v1498, 1e-05
        %v1531 = vadd.f32 %v1499, 1e-05
        %v1532 = vadd.f32 %v1500, 1e-05
        %v1533 = vadd.f32 %v1501, 1e-05
        %v1534 = vadd.f32 %v1502, 1e-05
        %v1535 = vrsqrt.pop %v1503
        %v1536 = vrsqrt.pop %v1504
        %v1537 = vrsqrt.pop %v1505
        %v1538 = vrsqrt.pop %v1506
        %v1539 = vrsqrt.pop %v1507
        %v1540 = vrsqrt.pop %v1508
        %v1541 = vrsqrt.pop %v1509
        %v1542 = vrsqrt.pop %v1510
        %v1543 = vrsqrt.pop %v1511
        %v1544 = vrsqrt.pop %v1512
        %v1545 = vrsqrt.pop %v1513
        %v1546 = vrsqrt.pop %v1514
        %v1547 = vrsqrt.pop %v1515
        %v1548 = vrsqrt.pop %v1516
        %v1549 = vrsqrt.pop %v1517
        %v1550 = vrsqrt.pop %v1518
        %v1551 = vrsqrt.pop %v1519
        %v1552 = vrsqrt.pop %v1520
        %v1553 = vrsqrt.pop %v1521
        %v1554 = vrsqrt.pop %v1522
        %v1555 = vrsqrt.pop %v1523
        %v1556 = vrsqrt.pop %v1524
        %v1557 = vrsqrt.pop %v1525
        %v1558 = vrsqrt.pop %v1526
        %v1559 = vrsqrt.pop %v1527
        %v1560 = vrsqrt.pop %v1528
        %v1561 = vrsqrt.pop %v1529
        %v1562 = vrsqrt.pop %v1530
        %v1563 = vrsqrt.pop %v1531
        %v1564 = vrsqrt.pop %v1532
        %v1565 = vrsqrt.pop %v1533
        %v1566 = vrsqrt.pop %v1534
        %v1567 = vmul.f32 %v1343, %v1535
        %v1568 = vmul.f32 %v1344, %v1536
        %v1569 = vmul.f32 %v1345, %v1537
        %v1570 = vmul.f32 %v1346, %v1538
        %v1571 = vmul.f32 %v1347, %v1539
        %v1572 = vmul.f32 %v1348, %v1540
        %v1573 = vmul.f32 %v1349, %v1541
        %v1574 = vmul.f32 %v1350, %v1542
        %v1575 = vmul.f32 %v1351, %v1543
        %v1576 = vmul.f32 %v1352, %v1544
        %v1577 = vmul.f32 %v1353, %v1545
        %v1578 = vmul.f32 %v1354, %v1546
        %v1579 = vmul.f32 %v1355, %v1547
        %v1580 = vmul.f32 %v1356, %v1548
        %v1581 = vmul.f32 %v1357, %v1549
        %v1582 = vmul.f32 %v1358, %v1550
        %v1583 = vmul.f32 %v1359, %v1551
        %v1584 = vmul.f32 %v1360, %v1552
        %v1585 = vmul.f32 %v1361, %v1553
        %v1586 = vmul.f32 %v1362, %v1554
        %v1587 = vmul.f32 %v1363, %v1555
        %v1588 = vmul.f32 %v1364, %v1556
        %v1589 = vmul.f32 %v1365, %v1557
        %v1590 = vmul.f32 %v1366, %v1558
        %v1591 = vmul.f32 %v1367, %v1559
        %v1592 = vmul.f32 %v1368, %v1560
        %v1593 = vmul.f32 %v1369, %v1561
        %v1594 = vmul.f32 %v1370, %v1562
        %v1595 = vmul.f32 %v1371, %v1563
        %v1596 = vmul.f32 %v1372, %v1564
        %v1597 = vmul.f32 %v1373, %v1565
        %v1598 = vmul.f32 %v1374, %v1566
        %v1599 = vadd.f32 %v927, 1.0
        %v1600 = vadd.f32 %v931, 1.0
        %v1601 = vadd.f32 %v937, 1.0
        %v1602 = vadd.f32 %v941, 1.0
        %v1603 = vadd.f32 %v947, 1.0
        %v1604 = vadd.f32 %v951, 1.0
        %v1605 = vadd.f32 %v957, 1.0
        %v1606 = vadd.f32 %v961, 1.0
        %v1607 = vadd.f32 %v967, 1.0
        %v1608 = vadd.f32 %v971, 1.0
        %v1609 = vadd.f32 %v977, 1.0
        %v1610 = vadd.f32 %v981, 1.0
        %v1611 = vadd.f32 %v987, 1.0
        %v1612 = vadd.f32 %v991, 1.0
        %v1613 = vadd.f32 %v997, 1.0
        %v1614 = vadd.f32 %v1001, 1.0
        %v1615 = vadd.f32 %v1007, 1.0
        %v1616 = vadd.f32 %v1011, 1.0
        %v1617 = vadd.f32 %v1017, 1.0
        %v1618 = vadd.f32 %v1021, 1.0
        %v1619 = vadd.f32 %v1027, 1.0
        %v1620 = vadd.f32 %v1031, 1.0
        %v1621 = vadd.f32 %v1037, 1.0
        %v1622 = vadd.f32 %v1041, 1.0
        %v1623 = vadd.f32 %v1047, 1.0
        %v1624 = vadd.f32 %v1051, 1.0
        %v1625 = vadd.f32 %v1057, 1.0
        %v1626 = vadd.f32 %v1061, 1.0
        %v1627 = vadd.f32 %v1067, 1.0
        %v1628 = vadd.f32 %v1071, 1.0
        %v1629 = vadd.f32 %v1077, 1.0
        %v1630 = vadd.f32 %v1081, 1.0
        %v1631 = vmul.f32 %v1599, %v1567
        %v1632 = vmul.f32 %v1600, %v1568
        %v1633 = vmul.f32 %v1601, %v1569
        %v1634 = vmul.f32 %v1602, %v1570
        %v1635 = vmul.f32 %v1603, %v1571
        %v1636 = vmul.f32 %v1604, %v1572
        %v1637 = vmul.f32 %v1605, %v1573
        %v1638 = vmul.f32 %v1606, %v1574
        %v1639 = vmul.f32 %v1607, %v1575
        %v1640 = vmul.f32 %v1608, %v1576
        %v1641 = vmul.f32 %v1609, %v1577
        %v1642 = vmul.f32 %v1610, %v1578
        %v1643 = vmul.f32 %v1611, %v1579
        %v1644 = vmul.f32 %v1612, %v1580
        %v1645 = vmul.f32 %v1613, %v1581
        %v1646 = vmul.f32 %v1614, %v1582
        %v1647 = vmul.f32 %v1615, %v1583
        %v1648 = vmul.f32 %v1616, %v1584
        %v1649 = vmul.f32 %v1617, %v1585
        %v1650 = vmul.f32 %v1618, %v1586
        %v1651 = vmul.f32 %v1619, %v1587
        %v1652 = vmul.f32 %v1620, %v1588
        %v1653 = vmul.f32 %v1621, %v1589
        %v1654 = vmul.f32 %v1622, %v1590
        %v1655 = vmul.f32 %v1623, %v1591
        %v1656 = vmul.f32 %v1624, %v1592
        %v1657 = vmul.f32 %v1625, %v1593
        %v1658 = vmul.f32 %v1626, %v1594
        %v1659 = vmul.f32 %v1627, %v1595
        %v1660 = vmul.f32 %v1628, %v1596
        %v1661 = vmul.f32 %v1629, %v1597
        %v1662 = vmul.f32 %v1630, %v1598
        %v1663 = vadd.f32 %v1631, %v929
        %v1664 = vadd.f32 %v1632, %v933
        %v1665 = vadd.f32 %v1633, %v939
        %v1666 = vadd.f32 %v1634, %v943
        %v1667 = vadd.f32 %v1635, %v949
        %v1668 = vadd.f32 %v1636, %v953
        %v1669 = vadd.f32 %v1637, %v959
        %v1670 = vadd.f32 %v1638, %v963
        %v1671 = vadd.f32 %v1639, %v969
        %v1672 = vadd.f32 %v1640, %v973
        %v1673 = vadd.f32 %v1641, %v979
        %v1674 = vadd.f32 %v1642, %v983
        %v1675 = vadd.f32 %v1643, %v989
        %v1676 = vadd.f32 %v1644, %v993
        %v1677 = vadd.f32 %v1645, %v999
        %v1678 = vadd.f32 %v1646, %v1003
        %v1679 = vadd.f32 %v1647, %v1009
        %v1680 = vadd.f32 %v1648, %v1013
        %v1681 = vadd.f32 %v1649, %v1019
        %v1682 = vadd.f32 %v1650, %v1023
        %v1683 = vadd.f32 %v1651, %v1029
        %v1684 = vadd.f32 %v1652, %v1033
        %v1685 = vadd.f32 %v1653, %v1039
        %v1686 = vadd.f32 %v1654, %v1043
        %v1687 = vadd.f32 %v1655, %v1049
        %v1688 = vadd.f32 %v1656, %v1053
        %v1689 = vadd.f32 %v1657, %v1059
        %v1690 = vadd.f32 %v1658, %v1063
        %v1691 = vadd.f32 %v1659, %v1069
        %v1692 = vadd.f32 %v1660, %v1073
        %v1693 = vadd.f32 %v1661, %v1079
        %v1694 = vadd.f32 %v1662, %v1083
        %v1695 = vpack.c.bf16 %v1664, %v1663
        %v1696 = vpack.c.bf16 %v1666, %v1665
        %v1697 = vpack.c.bf16 %v1668, %v1667
        %v1698 = vpack.c.bf16 %v1670, %v1669
        %v1699 = vpack.c.bf16 %v1672, %v1671
        %v1700 = vpack.c.bf16 %v1674, %v1673
        %v1701 = vpack.c.bf16 %v1676, %v1675
        %v1702 = vpack.c.bf16 %v1678, %v1677
        %v1703 = vpack.c.bf16 %v1680, %v1679
        %v1704 = vpack.c.bf16 %v1682, %v1681
        %v1705 = vpack.c.bf16 %v1684, %v1683
        %v1706 = vpack.c.bf16 %v1686, %v1685
        %v1707 = vpack.c.bf16 %v1688, %v1687
        %v1708 = vpack.c.bf16 %v1690, %v1689
        %v1709 = vpack.c.bf16 %v1692, %v1691
        %v1710 = vpack.c.bf16 %v1694, %v1693
        %v1711 = vld [vmem:[#allocation8] sm:$0xff]
        %v1712 = vld [vmem:[#allocation8 + $0x8] sm:$0xff]
        %v1713 = vld [vmem:[#allocation8 + $0x10] sm:$0xff]
        %v1714 = vld [vmem:[#allocation8 + $0x18] sm:$0xff]
        %v1715 = vld [vmem:[#allocation8 + $0x20] sm:$0xff]
        %v1716 = vld [vmem:[#allocation8 + $0x28] sm:$0xff]
        %v1717 = vld [vmem:[#allocation8 + $0x30] sm:$0xff]
        %v1718 = vld [vmem:[#allocation8 + $0x38] sm:$0xff]
        %v1719 = vld [vmem:[#allocation8 + $0x40] sm:$0xff]
        %v1720 = vld [vmem:[#allocation8 + $0x48] sm:$0xff]
        %v1721 = vld [vmem:[#allocation8 + $0x50] sm:$0xff]
        %v1722 = vld [vmem:[#allocation8 + $0x58] sm:$0xff]
        %v1723 = vld [vmem:[#allocation8 + $0x60] sm:$0xff]
        %v1724 = vld [vmem:[#allocation8 + $0x68] sm:$0xff]
        %v1725 = vld [vmem:[#allocation8 + $0x70] sm:$0xff]
        %v1726 = vld [vmem:[#allocation8 + $0x78] sm:$0xff]
        %v1727 = vld [vmem:[#allocation8 + $0x80] sm:$0xff]
        %v1728 = vld [vmem:[#allocation8 + $0x88] sm:$0xff]
        %v1729 = vld [vmem:[#allocation8 + $0x90] sm:$0xff]
        %v1730 = vld [vmem:[#allocation8 + $0x98] sm:$0xff]
        %v1731 = vld [vmem:[#allocation8 + $0xa0] sm:$0xff]
        %v1732 = vld [vmem:[#allocation8 + $0xa8] sm:$0xff]
        %v1733 = vld [vmem:[#allocation8 + $0xb0] sm:$0xff]
        %v1734 = vld [vmem:[#allocation8 + $0xb8] sm:$0xff]
        %v1735 = vld [vmem:[#allocation8 + $0xc0] sm:$0xff]
        %v1736 = vld [vmem:[#allocation8 + $0xc8] sm:$0xff]
        %v1737 = vld [vmem:[#allocation8 + $0xd0] sm:$0xff]
        %v1738 = vld [vmem:[#allocation8 + $0xd8] sm:$0xff]
        %v1739 = vld [vmem:[#allocation8 + $0xe0] sm:$0xff]
        %v1740 = vld [vmem:[#allocation8 + $0xe8] sm:$0xff]
        %v1741 = vld [vmem:[#allocation8 + $0xf0] sm:$0xff]
        %v1742 = vld [vmem:[#allocation8 + $0xf8] sm:$0xff]
        %v1743 = vld [vmem:[%s5] sm:$0xf]
        %v1745 = vlaneseq
        %v1746 = vshrl.u32 %v1745, 7
        %v1747 = vsub.s32 0, %v1746
        %v1748 = vrot.slane %v1743, %v1747
        %v1749 = vlaneseq
        %v1750 = vshrl.u32 %v1749, 7
        %v1751 = vsub.s32 1, %v1750
        %v1752 = vrot.slane %v1743, %v1751
        %v1753 = vlaneseq
        %v1754 = vshrl.u32 %v1753, 7
        %v1755 = vsub.s32 2, %v1754
        %v1756 = vrot.slane %v1743, %v1755
        %v1757 = vlaneseq
        %v1758 = vshrl.u32 %v1757, 7
        %v1759 = vsub.s32 3, %v1758
        %v1760 = vrot.slane %v1743, %v1759
        %v1797 = vunpack.c.l.b16 %v1711
        %v1798 = vunpack.c.h.b16 %v1711
        %v1799 = vunpack.c.l.b16 %v1712
        %v1800 = vunpack.c.h.b16 %v1712
        %v1801 = vunpack.c.l.b16 %v1713
        %v1802 = vunpack.c.h.b16 %v1713
        %v1803 = vunpack.c.l.b16 %v1714
        %v1804 = vunpack.c.h.b16 %v1714
        %v1805 = vunpack.c.l.b16 %v1715
        %v1806 = vunpack.c.h.b16 %v1715
        %v1807 = vunpack.c.l.b16 %v1716
        %v1808 = vunpack.c.h.b16 %v1716
        %v1809 = vunpack.c.l.b16 %v1717
        %v1810 = vunpack.c.h.b16 %v1717
        %v1811 = vunpack.c.l.b16 %v1718
        %v1812 = vunpack.c.h.b16 %v1718
        %v1813 = vunpack.c.l.b16 %v1719
        %v1814 = vunpack.c.h.b16 %v1719
        %v1815 = vunpack.c.l.b16 %v1720
        %v1816 = vunpack.c.h.b16 %v1720
        %v1817 = vunpack.c.l.b16 %v1721
        %v1818 = vunpack.c.h.b16 %v1721
        %v1819 = vunpack.c.l.b16 %v1722
        %v1820 = vunpack.c.h.b16 %v1722
        %v1821 = vunpack.c.l.b16 %v1723
        %v1822 = vunpack.c.h.b16 %v1723
        %v1823 = vunpack.c.l.b16 %v1724
        %v1824 = vunpack.c.h.b16 %v1724
        %v1825 = vunpack.c.l.b16 %v1725
        %v1826 = vunpack.c.h.b16 %v1725
        %v1827 = vunpack.c.l.b16 %v1726
        %v1828 = vunpack.c.h.b16 %v1726
        %v1829 = vunpack.c.l.b16 %v1727
        %v1830 = vunpack.c.h.b16 %v1727
        %v1831 = vunpack.c.l.b16 %v1728
        %v1832 = vunpack.c.h.b16 %v1728
        %v1833 = vunpack.c.l.b16 %v1729
        %v1834 = vunpack.c.h.b16 %v1729
        %v1835 = vunpack.c.l.b16 %v1730
        %v1836 = vunpack.c.h.b16 %v1730
        %v1837 = vunpack.c.l.b16 %v1731
        %v1838 = vunpack.c.h.b16 %v1731
        %v1839 = vunpack.c.l.b16 %v1732
        %v1840 = vunpack.c.h.b16 %v1732
        %v1841 = vunpack.c.l.b16 %v1733
        %v1842 = vunpack.c.h.b16 %v1733
        %v1843 = vunpack.c.l.b16 %v1734
        %v1844 = vunpack.c.h.b16 %v1734
        %v1845 = vunpack.c.l.b16 %v1735
        %v1846 = vunpack.c.h.b16 %v1735
        %v1847 = vunpack.c.l.b16 %v1736
        %v1848 = vunpack.c.h.b16 %v1736
        %v1849 = vunpack.c.l.b16 %v1737
        %v1850 = vunpack.c.h.b16 %v1737
        %v1851 = vunpack.c.l.b16 %v1738
        %v1852 = vunpack.c.h.b16 %v1738
        %v1853 = vunpack.c.l.b16 %v1739
        %v1854 = vunpack.c.h.b16 %v1739
        %v1855 = vunpack.c.l.b16 %v1740
        %v1856 = vunpack.c.h.b16 %v1740
        %v1857 = vunpack.c.l.b16 %v1741
        %v1858 = vunpack.c.h.b16 %v1741
        %v1859 = vunpack.c.l.b16 %v1742
        %v1860 = vunpack.c.h.b16 %v1742
        %v1861 = vpack.c.b16 %v1801, %v1797
        %v1862 = vpack.c.b16 %v1802, %v1798
        %v1863 = vpack.c.b16 %v1803, %v1799
        %v1864 = vpack.c.b16 %v1804, %v1800
        %v1865 = vpack.c.b16 %v1809, %v1805
        %v1866 = vpack.c.b16 %v1810, %v1806
        %v1867 = vpack.c.b16 %v1811, %v1807
        %v1868 = vpack.c.b16 %v1812, %v1808
        %v1869 = vpack.c.b16 %v1817, %v1813
        %v1870 = vpack.c.b16 %v1818, %v1814
        %v1871 = vpack.c.b16 %v1819, %v1815
        %v1872 = vpack.c.b16 %v1820, %v1816
        %v1873 = vpack.c.b16 %v1825, %v1821
        %v1874 = vpack.c.b16 %v1826, %v1822
        %v1875 = vpack.c.b16 %v1827, %v1823
        %v1876 = vpack.c.b16 %v1828, %v1824
        %v1877 = vpack.c.b16 %v1833, %v1829
        %v1878 = vpack.c.b16 %v1834, %v1830
        %v1879 = vpack.c.b16 %v1835, %v1831
        %v1880 = vpack.c.b16 %v1836, %v1832
        %v1881 = vpack.c.b16 %v1841, %v1837
        %v1882 = vpack.c.b16 %v1842, %v1838
        %v1883 = vpack.c.b16 %v1843, %v1839
        %v1884 = vpack.c.b16 %v1844, %v1840
        %v1885 = vpack.c.b16 %v1849, %v1845
        %v1886 = vpack.c.b16 %v1850, %v1846
        %v1887 = vpack.c.b16 %v1851, %v1847
        %v1888 = vpack.c.b16 %v1852, %v1848
        %v1889 = vpack.c.b16 %v1857, %v1853
        %v1890 = vpack.c.b16 %v1858, %v1854
        %v1891 = vpack.c.b16 %v1859, %v1855
        %v1892 = vpack.c.b16 %v1860, %v1856
        %1925 = vmatprep.subr.bf16.mxu0 %v1862
        %1926 = vmatpush1.bf16.msra.mxu0 %v1861
        %1927 = vmatprep.subr.bf16.mxu0 %v1866
        %1928 = vmatpush1.bf16.msra.mxu0 %v1865
        %1929 = vmatprep.subr.bf16.mxu0 %v1870
        %1930 = vmatpush1.bf16.msra.mxu0 %v1869
        %1931 = vmatprep.subr.bf16.mxu0 %v1874
        %1932 = vmatpush1.bf16.msra.mxu0 %v1873
        %1933 = vmatprep.subr.bf16.mxu0 %v1878
        %1934 = vmatpush1.bf16.msra.mxu0 %v1877
        %1935 = vmatprep.subr.bf16.mxu0 %v1882
        %1936 = vmatpush1.bf16.msra.mxu0 %v1881
        %1937 = vmatprep.subr.bf16.mxu0 %v1886
        %1938 = vmatpush1.bf16.msra.mxu0 %v1885
        %1939 = vmatprep.subr.bf16.mxu0 %v1890
        %1940 = vmatpush1.bf16.msra.mxu0 %v1889
        %1941 = vmatprep.subr.bf16.mxu0 0
        %1942 = vmatpush1.bf16.msra.mxu0 0
        %1943 = vmatprep.subr.bf16.mxu0 0
        %1944 = vmatpush1.bf16.msra.mxu0 0
        %1945 = vmatprep.subr.bf16.mxu0 0
        %1946 = vmatpush1.bf16.msra.mxu0 0
        %1947 = vmatprep.subr.bf16.mxu0 0
        %1948 = vmatpush1.bf16.msra.mxu0 0
        %1949 = vmatprep.subr.bf16.mxu0 0
        %1950 = vmatpush1.bf16.msra.mxu0 0
        %1951 = vmatprep.subr.bf16.mxu0 0
        %1952 = vmatpush1.bf16.msra.mxu0 0
        %1953 = vmatprep.subr.bf16.mxu0 0
        %1954 = vmatpush1.bf16.msra.mxu0 0
        %1955 = vmatprep.subr.bf16.mxu0 0
        %1956 = vmatpush1.bf16.msra.mxu0 0
        %1957 = vmatprep.mubr.bf16.mxu0 0
        %1958 = vmatmul.mubr.bf16.gmra.mrb[0].mxu0 %v1695
        %v1959 = vpop.f32.mrb[0].mxu0
        %v1960 = vadd.f32 %v1748, %v1959
        %v1961 = vpop.f32.mrb[0].mxu0
        %v1962 = vadd.f32 %v1752, %v1961
        %v1963 = vpop.f32.mrb[0].mxu0
        %v1964 = vadd.f32 %v1748, %v1963
        %v1965 = vpop.f32.mrb[0].mxu0
        %v1966 = vadd.f32 %v1752, %v1965
        %1967 = vmatprep.mubr.bf16.mxu0 0
        %1968 = vmatmul.mubr.bf16.gmra.mrb[0].mxu0 %v1696
        %v1969 = vpop.f32.mrb[0].mxu0
        %v1970 = vadd.f32 %v1748, %v1969
        %v1971 = vpop.f32.mrb[0].mxu0
        %v1972 = vadd.f32 %v1752, %v1971
        %v1973 = vpop.f32.mrb[0].mxu0
        %v1974 = vadd.f32 %v1748, %v1973
        %v1975 = vpop.f32.mrb[0].mxu0
        %v1976 = vadd.f32 %v1752, %v1975
        %1977 = vmatprep.mubr.bf16.mxu0 0
        %1978 = vmatmul.mubr.bf16.gmra.mrb[0].mxu0 %v1697
        %v1979 = vpop.f32.mrb[0].mxu0
        %v1980 = vadd.f32 %v1748, %v1979
        %v1981 = vpop.f32.mrb[0].mxu0
        %v1982 = vadd.f32 %v1752, %v1981
        %v1983 = vpop.f32.mrb[0].mxu0
        %v1984 = vadd.f32 %v1748, %v1983
        %v1985 = vpop.f32.mrb[0].mxu0
        %v1986 = vadd.f32 %v1752, %v1985
        %1987 = vmatprep.mubr.bf16.mxu0 0
        %1988 = vmatmul.mubr.bf16.gmra.mrb[0].mxu0 %v1698
        %v1989 = vpop.f32.mrb[0].mxu0
        %v1990 = vadd.f32 %v1748, %v1989
        %v1991 = vpop.f32.mrb[0].mxu0
        %v1992 = vadd.f32 %v1752, %v1991
        %v1993 = vpop.f32.mrb[0].mxu0
        %v1994 = vadd.f32 %v1748, %v1993
        %v1995 = vpop.f32.mrb[0].mxu0
        %v1996 = vadd.f32 %v1752, %v1995
        %1997 = vmatprep.mubr.bf16.mxu0 0
        %1998 = vmatmul.mubr.bf16.gmra.mrb[0].mxu0 %v1699
        %v1999 = vpop.f32.mrb[0].mxu0
        %v2000 = vadd.f32 %v1748, %v1999
        %v2001 = vpop.f32.mrb[0].mxu0
        %v2002 = vadd.f32 %v1752, %v2001
        %v2003 = vpop.f32.mrb[0].mxu0
        %v2004 = vadd.f32 %v1748, %v2003
        %v2005 = vpop.f32.mrb[0].mxu0
        %v2006 = vadd.f32 %v1752, %v2005
        %2007 = vmatprep.mubr.bf16.mxu0 0
        %2008 = vmatmul.mubr.bf16.gmra.mrb[0].mxu0 %v1700
        %v2009 = vpop.f32.mrb[0].mxu0
        %v2010 = vadd.f32 %v1748, %v2009
        %v2011 = vpop.f32.mrb[0].mxu0
        %v2012 = vadd.f32 %v1752, %v2011
        %v2013 = vpop.f32.mrb[0].mxu0
        %v2014 = vadd.f32 %v1748, %v2013
        %v2015 = vpop.f32.mrb[0].mxu0
        %v2016 = vadd.f32 %v1752, %v2015
        %2017 = vmatprep.mubr.bf16.mxu0 0
        %2018 = vmatmul.mubr.bf16.gmra.mrb[0].mxu0 %v1701
        %v2019 = vpop.f32.mrb[0].mxu0
        %v2020 = vadd.f32 %v1748, %v2019
        %v2021 = vpop.f32.mrb[0].mxu0
        %v2022 = vadd.f32 %v1752, %v2021
        %v2023 = vpop.f32.mrb[0].mxu0
        %v2024 = vadd.f32 %v1748, %v2023
        %v2025 = vpop.f32.mrb[0].mxu0
        %v2026 = vadd.f32 %v1752, %v2025
        %2027 = vmatprep.mubr.bf16.mxu0 0
        %2028 = vmatmul.mubr.bf16.gmra.mrb[0].mxu0 %v1702
        %v2029 = vpop.f32.mrb[0].mxu0
        %v2030 = vadd.f32 %v1748, %v2029
        %v2031 = vpop.f32.mrb[0].mxu0
        %v2032 = vadd.f32 %v1752, %v2031
        %v2033 = vpop.f32.mrb[0].mxu0
        %v2034 = vadd.f32 %v1748, %v2033
        %v2035 = vpop.f32.mrb[0].mxu0
        %v2036 = vadd.f32 %v1752, %v2035
        %2037 = vmatprep.mubr.bf16.mxu0 0
        %2038 = vmatmul.mubr.bf16.gmra.mrb[0].mxu0 %v1703
        %v2039 = vpop.f32.mrb[0].mxu0
        %v2040 = vadd.f32 %v1748, %v2039
        %v2041 = vpop.f32.mrb[0].mxu0
        %v2042 = vadd.f32 %v1752, %v2041
        %v2043 = vpop.f32.mrb[0].mxu0
        %v2044 = vadd.f32 %v1748, %v2043
        %v2045 = vpop.f32.mrb[0].mxu0
        %v2046 = vadd.f32 %v1752, %v2045
        %2047 = vmatprep.mubr.bf16.mxu0 0
        %2048 = vmatmul.mubr.bf16.gmra.mrb[0].mxu0 %v1704
        %v2049 = vpop.f32.mrb[0].mxu0
        %v2050 = vadd.f32 %v1748, %v2049
        %v2051 = vpop.f32.mrb[0].mxu0
        %v2052 = vadd.f32 %v1752, %v2051
        %v2053 = vpop.f32.mrb[0].mxu0
        %v2054 = vadd.f32 %v1748, %v2053
        %v2055 = vpop.f32.mrb[0].mxu0
        %v2056 = vadd.f32 %v1752, %v2055
        %2057 = vmatprep.mubr.bf16.mxu0 0
        %2058 = vmatmul.mubr.bf16.gmra.mrb[0].mxu0 %v1705
        %v2059 = vpop.f32.mrb[0].mxu0
        %v2060 = vadd.f32 %v1748, %v2059
        %v2061 = vpop.f32.mrb[0].mxu0
        %v2062 = vadd.f32 %v1752, %v2061
        %v2063 = vpop.f32.mrb[0].mxu0
        %v2064 = vadd.f32 %v1748, %v2063
        %v2065 = vpop.f32.mrb[0].mxu0
        %v2066 = vadd.f32 %v1752, %v2065
        %2067 = vmatprep.mubr.bf16.mxu0 0
        %2068 = vmatmul.mubr.bf16.gmra.mrb[0].mxu0 %v1706
        %v2069 = vpop.f32.mrb[0].mxu0
        %v2070 = vadd.f32 %v1748, %v2069
        %v2071 = vpop.f32.mrb[0].mxu0
        %v2072 = vadd.f32 %v1752, %v2071
        %v2073 = vpop.f32.mrb[0].mxu0
        %v2074 = vadd.f32 %v1748, %v2073
        %v2075 = vpop.f32.mrb[0].mxu0
        %v2076 = vadd.f32 %v1752, %v2075
        %2077 = vmatprep.mubr.bf16.mxu0 0
        %2078 = vmatmul.mubr.bf16.gmra.mrb[0].mxu0 %v1707
        %v2079 = vpop.f32.mrb[0].mxu0
        %v2080 = vadd.f32 %v1748, %v2079
        %v2081 = vpop.f32.mrb[0].mxu0
        %v2082 = vadd.f32 %v1752, %v2081
        %v2083 = vpop.f32.mrb[0].mxu0
        %v2084 = vadd.f32 %v1748, %v2083
        %v2085 = vpop.f32.mrb[0].mxu0
        %v2086 = vadd.f32 %v1752, %v2085
        %2087 = vmatprep.mubr.bf16.mxu0 0
        %2088 = vmatmul.mubr.bf16.gmra.mrb[0].mxu0 %v1708
        %v2089 = vpop.f32.mrb[0].mxu0
        %v2090 = vadd.f32 %v1748, %v2089
        %v2091 = vpop.f32.mrb[0].mxu0
        %v2092 = vadd.f32 %v1752, %v2091
        %v2093 = vpop.f32.mrb[0].mxu0
        %v2094 = vadd.f32 %v1748, %v2093
        %v2095 = vpop.f32.mrb[0].mxu0
        %v2096 = vadd.f32 %v1752, %v2095
        %2097 = vmatprep.mubr.bf16.mxu0 0
        %2098 = vmatmul.mubr.bf16.gmra.mrb[0].mxu0 %v1709
        %v2099 = vpop.f32.mrb[0].mxu0
        %v2100 = vadd.f32 %v1748, %v2099
        %v2101 = vpop.f32.mrb[0].mxu0
        %v2102 = vadd.f32 %v1752, %v2101
        %v2103 = vpop.f32.mrb[0].mxu0
        %v2104 = vadd.f32 %v1748, %v2103
        %v2105 = vpop.f32.mrb[0].mxu0
        %v2106 = vadd.f32 %v1752, %v2105
        %2107 = vmatprep.mubr.bf16.mxu0 0
        %2108 = vmatmul.mubr.bf16.gmra.mrb[0].mxu0 %v1710
        %v2109 = vpop.f32.mrb[0].mxu0
        %v2110 = vadd.f32 %v1748, %v2109
        %v2111 = vpop.f32.mrb[0].mxu0
        %v2112 = vadd.f32 %v1752, %v2111
        %v2113 = vpop.f32.mrb[0].mxu0
        %v2114 = vadd.f32 %v1748, %v2113
        %v2115 = vpop.f32.mrb[0].mxu0
        %v2116 = vadd.f32 %v1752, %v2115
        %2117 = vdwg.mxu0
        %2118 = vmatprep.subr.bf16.mxu0 %v1864
        %2119 = vmatpush1.bf16.msra.mxu0 %v1863
        %2120 = vmatprep.subr.bf16.mxu0 %v1868
        %2121 = vmatpush1.bf16.msra.mxu0 %v1867
        %2122 = vmatprep.subr.bf16.mxu0 %v1872
        %2123 = vmatpush1.bf16.msra.mxu0 %v1871
        %2124 = vmatprep.subr.bf16.mxu0 %v1876
        %2125 = vmatpush1.bf16.msra.mxu0 %v1875
        %2126 = vmatprep.subr.bf16.mxu0 %v1880
        %2127 = vmatpush1.bf16.msra.mxu0 %v1879
        %2128 = vmatprep.subr.bf16.mxu0 %v1884
        %2129 = vmatpush1.bf16.msra.mxu0 %v1883
        %2130 = vmatprep.subr.bf16.mxu0 %v1888
        %2131 = vmatpush1.bf16.msra.mxu0 %v1887
        %2132 = vmatprep.subr.bf16.mxu0 %v1892
        %2133 = vmatpush1.bf16.msra.mxu0 %v1891
        %2134 = vmatprep.subr.bf16.mxu0 0
        %2135 = vmatpush1.bf16.msra.mxu0 0
        %2136 = vmatprep.subr.bf16.mxu0 0
        %2137 = vmatpush1.bf16.msra.mxu0 0
        %2138 = vmatprep.subr.bf16.mxu0 0
        %2139 = vmatpush1.bf16.msra.mxu0 0
        %2140 = vmatprep.subr.bf16.mxu0 0
        %2141 = vmatpush1.bf16.msra.mxu0 0
        %2142 = vmatprep.subr.bf16.mxu0 0
        %2143 = vmatpush1.bf16.msra.mxu0 0
        %2144 = vmatprep.subr.bf16.mxu0 0
        %2145 = vmatpush1.bf16.msra.mxu0 0
        %2146 = vmatprep.subr.bf16.mxu0 0
        %2147 = vmatpush1.bf16.msra.mxu0 0
        %2148 = vmatprep.subr.bf16.mxu0 0
        %2149 = vmatpush1.bf16.msra.mxu0 0
        %2150 = vmatprep.mubr.bf16.mxu0 0
        %2151 = vmatmul.mubr.bf16.gmra.mrb[0].mxu0 %v1695
        %v2152 = vpop.f32.mrb[0].mxu0
        %v2153 = vadd.f32 %v1756, %v2152
        %v2154 = vpop.f32.mrb[0].mxu0
        %v2155 = vadd.f32 %v1760, %v2154
        %v2156 = vpop.f32.mrb[0].mxu0
        %v2157 = vadd.f32 %v1756, %v2156
        %v2158 = vpop.f32.mrb[0].mxu0
        %v2159 = vadd.f32 %v1760, %v2158
        %2160 = vmatprep.mubr.bf16.mxu0 0
        %2161 = vmatmul.mubr.bf16.gmra.mrb[0].mxu0 %v1696
        %v2162 = vpop.f32.mrb[0].mxu0
        %v2163 = vadd.f32 %v1756, %v2162
        %v2164 = vpop.f32.mrb[0].mxu0
        %v2165 = vadd.f32 %v1760, %v2164
        %v2166 = vpop.f32.mrb[0].mxu0
        %v2167 = vadd.f32 %v1756, %v2166
        %v2168 = vpop.f32.mrb[0].mxu0
        %v2169 = vadd.f32 %v1760, %v2168
        %2170 = vmatprep.mubr.bf16.mxu0 0
        %2171 = vmatmul.mubr.bf16.gmra.mrb[0].mxu0 %v1697
        %v2172 = vpop.f32.mrb[0].mxu0
        %v2173 = vadd.f32 %v1756, %v2172
        %v2174 = vpop.f32.mrb[0].mxu0
        %v2175 = vadd.f32 %v1760, %v2174
        %v2176 = vpop.f32.mrb[0].mxu0
        %v2177 = vadd.f32 %v1756, %v2176
        %v2178 = vpop.f32.mrb[0].mxu0
        %v2179 = vadd.f32 %v1760, %v2178
        %2180 = vmatprep.mubr.bf16.mxu0 0
        %2181 = vmatmul.mubr.bf16.gmra.mrb[0].mxu0 %v1698
        %v2182 = vpop.f32.mrb[0].mxu0
        %v2183 = vadd.f32 %v1756, %v2182
        %v2184 = vpop.f32.mrb[0].mxu0
        %v2185 = vadd.f32 %v1760, %v2184
        %v2186 = vpop.f32.mrb[0].mxu0
        %v2187 = vadd.f32 %v1756, %v2186
        %v2188 = vpop.f32.mrb[0].mxu0
        %v2189 = vadd.f32 %v1760, %v2188
        %2190 = vmatprep.mubr.bf16.mxu0 0
        %2191 = vmatmul.mubr.bf16.gmra.mrb[0].mxu0 %v1699
        %v2192 = vpop.f32.mrb[0].mxu0
        %v2193 = vadd.f32 %v1756, %v2192
        %v2194 = vpop.f32.mrb[0].mxu0
        %v2195 = vadd.f32 %v1760, %v2194
        %v2196 = vpop.f32.mrb[0].mxu0
        %v2197 = vadd.f32 %v1756, %v2196
        %v2198 = vpop.f32.mrb[0].mxu0
        %v2199 = vadd.f32 %v1760, %v2198
        %2200 = vmatprep.mubr.bf16.mxu0 0
        %2201 = vmatmul.mubr.bf16.gmra.mrb[0].mxu0 %v1700
        %v2202 = vpop.f32.mrb[0].mxu0
        %v2203 = vadd.f32 %v1756, %v2202
        %v2204 = vpop.f32.mrb[0].mxu0
        %v2205 = vadd.f32 %v1760, %v2204
        %v2206 = vpop.f32.mrb[0].mxu0
        %v2207 = vadd.f32 %v1756, %v2206
        %v2208 = vpop.f32.mrb[0].mxu0
        %v2209 = vadd.f32 %v1760, %v2208
        %2210 = vmatprep.mubr.bf16.mxu0 0
        %2211 = vmatmul.mubr.bf16.gmra.mrb[0].mxu0 %v1701
        %v2212 = vpop.f32.mrb[0].mxu0
        %v2213 = vadd.f32 %v1756, %v2212
        %v2214 = vpop.f32.mrb[0].mxu0
        %v2215 = vadd.f32 %v1760, %v2214
        %v2216 = vpop.f32.mrb[0].mxu0
        %v2217 = vadd.f32 %v1756, %v2216
        %v2218 = vpop.f32.mrb[0].mxu0
        %v2219 = vadd.f32 %v1760, %v2218
        %2220 = vmatprep.mubr.bf16.mxu0 0
        %2221 = vmatmul.mubr.bf16.gmra.mrb[0].mxu0 %v1702
        %v2222 = vpop.f32.mrb[0].mxu0
        %v2223 = vadd.f32 %v1756, %v2222
        %v2224 = vpop.f32.mrb[0].mxu0
        %v2225 = vadd.f32 %v1760, %v2224
        %v2226 = vpop.f32.mrb[0].mxu0
        %v2227 = vadd.f32 %v1756, %v2226
        %v2228 = vpop.f32.mrb[0].mxu0
        %v2229 = vadd.f32 %v1760, %v2228
        %2230 = vmatprep.mubr.bf16.mxu0 0
        %2231 = vmatmul.mubr.bf16.gmra.mrb[0].mxu0 %v1703
        %v2232 = vpop.f32.mrb[0].mxu0
        %v2233 = vadd.f32 %v1756, %v2232
        %v2234 = vpop.f32.mrb[0].mxu0
        %v2235 = vadd.f32 %v1760, %v2234
        %v2236 = vpop.f32.mrb[0].mxu0
        %v2237 = vadd.f32 %v1756, %v2236
        %v2238 = vpop.f32.mrb[0].mxu0
        %v2239 = vadd.f32 %v1760, %v2238
        %2240 = vmatprep.mubr.bf16.mxu0 0
        %2241 = vmatmul.mubr.bf16.gmra.mrb[0].mxu0 %v1704
        %v2242 = vpop.f32.mrb[0].mxu0
        %v2243 = vadd.f32 %v1756, %v2242
        %v2244 = vpop.f32.mrb[0].mxu0
        %v2245 = vadd.f32 %v1760, %v2244
        %v2246 = vpop.f32.mrb[0].mxu0
        %v2247 = vadd.f32 %v1756, %v2246
        %v2248 = vpop.f32.mrb[0].mxu0
        %v2249 = vadd.f32 %v1760, %v2248
        %2250 = vmatprep.mubr.bf16.mxu0 0
        %2251 = vmatmul.mubr.bf16.gmra.mrb[0].mxu0 %v1705
        %v2252 = vpop.f32.mrb[0].mxu0
        %v2253 = vadd.f32 %v1756, %v2252
        %v2254 = vpop.f32.mrb[0].mxu0
        %v2255 = vadd.f32 %v1760, %v2254
        %v2256 = vpop.f32.mrb[0].mxu0
        %v2257 = vadd.f32 %v1756, %v2256
        %v2258 = vpop.f32.mrb[0].mxu0
        %v2259 = vadd.f32 %v1760, %v2258
        %2260 = vmatprep.mubr.bf16.mxu0 0
        %2261 = vmatmul.mubr.bf16.gmra.mrb[0].mxu0 %v1706
        %v2262 = vpop.f32.mrb[0].mxu0
        %v2263 = vadd.f32 %v1756, %v2262
        %v2264 = vpop.f32.mrb[0].mxu0
        %v2265 = vadd.f32 %v1760, %v2264
        %v2266 = vpop.f32.mrb[0].mxu0
        %v2267 = vadd.f32 %v1756, %v2266
        %v2268 = vpop.f32.mrb[0].mxu0
        %v2269 = vadd.f32 %v1760, %v2268
        %2270 = vmatprep.mubr.bf16.mxu0 0
        %2271 = vmatmul.mubr.bf16.gmra.mrb[0].mxu0 %v1707
        %v2272 = vpop.f32.mrb[0].mxu0
        %v2273 = vadd.f32 %v1756, %v2272
        %v2274 = vpop.f32.mrb[0].mxu0
        %v2275 = vadd.f32 %v1760, %v2274
        %v2276 = vpop.f32.mrb[0].mxu0
        %v2277 = vadd.f32 %v1756, %v2276
        %v2278 = vpop.f32.mrb[0].mxu0
        %v2279 = vadd.f32 %v1760, %v2278
        %2280 = vmatprep.mubr.bf16.mxu0 0
        %2281 = vmatmul.mubr.bf16.gmra.mrb[0].mxu0 %v1708
        %v2282 = vpop.f32.mrb[0].mxu0
        %v2283 = vadd.f32 %v1756, %v2282
        %v2284 = vpop.f32.mrb[0].mxu0
        %v2285 = vadd.f32 %v1760, %v2284
        %v2286 = vpop.f32.mrb[0].mxu0
        %v2287 = vadd.f32 %v1756, %v2286
        %v2288 = vpop.f32.mrb[0].mxu0
        %v2289 = vadd.f32 %v1760, %v2288
        %2290 = vmatprep.mubr.bf16.mxu0 0
        %2291 = vmatmul.mubr.bf16.gmra.mrb[0].mxu0 %v1709
        %v2292 = vpop.f32.mrb[0].mxu0
        %v2293 = vadd.f32 %v1756, %v2292
        %v2294 = vpop.f32.mrb[0].mxu0
        %v2295 = vadd.f32 %v1760, %v2294
        %v2296 = vpop.f32.mrb[0].mxu0
        %v2297 = vadd.f32 %v1756, %v2296
        %v2298 = vpop.f32.mrb[0].mxu0
        %v2299 = vadd.f32 %v1760, %v2298
        %2300 = vmatprep.mubr.bf16.mxu0 0
        %2301 = vmatmul.mubr.bf16.gmra.mrb[0].mxu0 %v1710
        %v2302 = vpop.f32.mrb[0].mxu0
        %v2303 = vadd.f32 %v1756, %v2302
        %v2304 = vpop.f32.mrb[0].mxu0
        %v2305 = vadd.f32 %v1760, %v2304
        %v2306 = vpop.f32.mrb[0].mxu0
        %v2307 = vadd.f32 %v1756, %v2306
        %v2308 = vpop.f32.mrb[0].mxu0
        %v2309 = vadd.f32 %v1760, %v2308
        %2310 = vdwg.mxu0
        %v2311 = vmul.f32 %v1960, 0.5
        %v2312 = vmul.f32 %v1962, 0.5
        %v2313 = vmul.f32 %v2153, 0.5
        %v2314 = vmul.f32 %v2155, 0.5
        %v2315 = vmul.f32 %v1964, 0.5
        %v2316 = vmul.f32 %v1966, 0.5
        %v2317 = vmul.f32 %v2157, 0.5
        %v2318 = vmul.f32 %v2159, 0.5
        %v2319 = vmul.f32 %v1970, 0.5
        %v2320 = vmul.f32 %v1972, 0.5
        %v2321 = vmul.f32 %v2163, 0.5
        %v2322 = vmul.f32 %v2165, 0.5
        %v2323 = vmul.f32 %v1974, 0.5
        %v2324 = vmul.f32 %v1976, 0.5
        %v2325 = vmul.f32 %v2167, 0.5
        %v2326 = vmul.f32 %v2169, 0.5
        %v2327 = vmul.f32 %v1980, 0.5
        %v2328 = vmul.f32 %v1982, 0.5
        %v2329 = vmul.f32 %v2173, 0.5
        %v2330 = vmul.f32 %v2175, 0.5
        %v2331 = vmul.f32 %v1984, 0.5
        %v2332 = vmul.f32 %v1986, 0.5
        %v2333 = vmul.f32 %v2177, 0.5
        %v2334 = vmul.f32 %v2179, 0.5
        %v2335 = vmul.f32 %v1990, 0.5
        %v2336 = vmul.f32 %v1992, 0.5
        %v2337 = vmul.f32 %v2183, 0.5
        %v2338 = vmul.f32 %v2185, 0.5
        %v2339 = vmul.f32 %v1994, 0.5
        %v2340 = vmul.f32 %v1996, 0.5
        %v2341 = vmul.f32 %v2187, 0.5
        %v2342 = vmul.f32 %v2189, 0.5
        %v2343 = vmul.f32 %v2000, 0.5
        %v2344 = vmul.f32 %v2002, 0.5
        %v2345 = vmul.f32 %v2193, 0.5
        %v2346 = vmul.f32 %v2195, 0.5
        %v2347 = vmul.f32 %v2004, 0.5
        %v2348 = vmul.f32 %v2006, 0.5
        %v2349 = vmul.f32 %v2197, 0.5
        %v2350 = vmul.f32 %v2199, 0.5
        %v2351 = vmul.f32 %v2010, 0.5
        %v2352 = vmul.f32 %v2012, 0.5
        %v2353 = vmul.f32 %v2203, 0.5
        %v2354 = vmul.f32 %v2205, 0.5
        %v2355 = vmul.f32 %v2014, 0.5
        %v2356 = vmul.f32 %v2016, 0.5
        %v2357 = vmul.f32 %v2207, 0.5
        %v2358 = vmul.f32 %v2209, 0.5
        %v2359 = vmul.f32 %v2020, 0.5
        %v2360 = vmul.f32 %v2022, 0.5
        %v2361 = vmul.f32 %v2213, 0.5
        %v2362 = vmul.f32 %v2215, 0.5
        %v2363 = vmul.f32 %v2024, 0.5
        %v2364 = vmul.f32 %v2026, 0.5
        %v2365 = vmul.f32 %v2217, 0.5
        %v2366 = vmul.f32 %v2219, 0.5
        %v2367 = vmul.f32 %v2030, 0.5
        %v2368 = vmul.f32 %v2032, 0.5
        %v2369 = vmul.f32 %v2223, 0.5
        %v2370 = vmul.f32 %v2225, 0.5
        %v2371 = vmul.f32 %v2034, 0.5
        %v2372 = vmul.f32 %v2036, 0.5
        %v2373 = vmul.f32 %v2227, 0.5
        %v2374 = vmul.f32 %v2229, 0.5
        %v2375 = vmul.f32 %v2040, 0.5
        %v2376 = vmul.f32 %v2042, 0.5
        %v2377 = vmul.f32 %v2233, 0.5
        %v2378 = vmul.f32 %v2235, 0.5
        %v2379 = vmul.f32 %v2044, 0.5
        %v2380 = vmul.f32 %v2046, 0.5
        %v2381 = vmul.f32 %v2237, 0.5
        %v2382 = vmul.f32 %v2239, 0.5
        %v2383 = vmul.f32 %v2050, 0.5
        %v2384 = vmul.f32 %v2052, 0.5
        %v2385 = vmul.f32 %v2243, 0.5
        %v2386 = vmul.f32 %v2245, 0.5
        %v2387 = vmul.f32 %v2054, 0.5
        %v2388 = vmul.f32 %v2056, 0.5
        %v2389 = vmul.f32 %v2247, 0.5
        %v2390 = vmul.f32 %v2249, 0.5
        %v2391 = vmul.f32 %v2060, 0.5
        %v2392 = vmul.f32 %v2062, 0.5
        %v2393 = vmul.f32 %v2253, 0.5
        %v2394 = vmul.f32 %v2255, 0.5
        %v2395 = vmul.f32 %v2064, 0.5
        %v2396 = vmul.f32 %v2066, 0.5
        %v2397 = vmul.f32 %v2257, 0.5
        %v2398 = vmul.f32 %v2259, 0.5
        %v2399 = vmul.f32 %v2070, 0.5
        %v2400 = vmul.f32 %v2072, 0.5
        %v2401 = vmul.f32 %v2263, 0.5
        %v2402 = vmul.f32 %v2265, 0.5
        %v2403 = vmul.f32 %v2074, 0.5
        %v2404 = vmul.f32 %v2076, 0.5
        %v2405 = vmul.f32 %v2267, 0.5
        %v2406 = vmul.f32 %v2269, 0.5
        %v2407 = vmul.f32 %v2080, 0.5
        %v2408 = vmul.f32 %v2082, 0.5
        %v2409 = vmul.f32 %v2273, 0.5
        %v2410 = vmul.f32 %v2275, 0.5
        %v2411 = vmul.f32 %v2084, 0.5
        %v2412 = vmul.f32 %v2086, 0.5
        %v2413 = vmul.f32 %v2277, 0.5
        %v2414 = vmul.f32 %v2279, 0.5
        %v2415 = vmul.f32 %v2090, 0.5
        %v2416 = vmul.f32 %v2092, 0.5
        %v2417 = vmul.f32 %v2283, 0.5
        %v2418 = vmul.f32 %v2285, 0.5
        %v2419 = vmul.f32 %v2094, 0.5
        %v2420 = vmul.f32 %v2096, 0.5
        %v2421 = vmul.f32 %v2287, 0.5
        %v2422 = vmul.f32 %v2289, 0.5
        %v2423 = vmul.f32 %v2100, 0.5
        %v2424 = vmul.f32 %v2102, 0.5
        %v2425 = vmul.f32 %v2293, 0.5
        %v2426 = vmul.f32 %v2295, 0.5
        %v2427 = vmul.f32 %v2104, 0.5
        %v2428 = vmul.f32 %v2106, 0.5
        %v2429 = vmul.f32 %v2297, 0.5
        %v2430 = vmul.f32 %v2299, 0.5
        %v2431 = vmul.f32 %v2110, 0.5
        %v2432 = vmul.f32 %v2112, 0.5
        %v2433 = vmul.f32 %v2303, 0.5
        %v2434 = vmul.f32 %v2305, 0.5
        %v2435 = vmul.f32 %v2114, 0.5
        %v2436 = vmul.f32 %v2116, 0.5
        %v2437 = vmul.f32 %v2307, 0.5
        %v2438 = vmul.f32 %v2309, 0.5
        %v2439 = vmul.f32 %v1960, 0.70710677
        %v2440 = vmul.f32 %v1962, 0.70710677
        %v2441 = vmul.f32 %v2153, 0.70710677
        %v2442 = vmul.f32 %v2155, 0.70710677
        %v2443 = vmul.f32 %v1964, 0.70710677
        %v2444 = vmul.f32 %v1966, 0.70710677
        %v2445 = vmul.f32 %v2157, 0.70710677
        %v2446 = vmul.f32 %v2159, 0.70710677
        %v2447 = vmul.f32 %v1970, 0.70710677
        %v2448 = vmul.f32 %v1972, 0.70710677
        %v2449 = vmul.f32 %v2163, 0.70710677
        %v2450 = vmul.f32 %v2165, 0.70710677
        %v2451 = vmul.f32 %v1974, 0.70710677
        %v2452 = vmul.f32 %v1976, 0.70710677
        %v2453 = vmul.f32 %v2167, 0.70710677
        %v2454 = vmul.f32 %v2169, 0.70710677
        %v2455 = vmul.f32 %v1980, 0.70710677
        %v2456 = vmul.f32 %v1982, 0.70710677
        %v2457 = vmul.f32 %v2173, 0.70710677
        %v2458 = vmul.f32 %v2175, 0.70710677
        %v2459 = vmul.f32 %v1984, 0.70710677
        %v2460 = vmul.f32 %v1986, 0.70710677
        %v2461 = vmul.f32 %v2177, 0.70710677
        %v2462 = vmul.f32 %v2179, 0.70710677
        %v2463 = vmul.f32 %v1990, 0.70710677
        %v2464 = vmul.f32 %v1992, 0.70710677
        %v2465 = vmul.f32 %v2183, 0.70710677
        %v2466 = vmul.f32 %v2185, 0.70710677
        %v2467 = vmul.f32 %v1994, 0.70710677
        %v2468 = vmul.f32 %v1996, 0.70710677
        %v2469 = vmul.f32 %v2187, 0.70710677
        %v2470 = vmul.f32 %v2189, 0.70710677
        %v2471 = vmul.f32 %v2000, 0.70710677
        %v2472 = vmul.f32 %v2002, 0.70710677
        %v2473 = vmul.f32 %v2193, 0.70710677
        %v2474 = vmul.f32 %v2195, 0.70710677
        %v2475 = vmul.f32 %v2004, 0.70710677
        %v2476 = vmul.f32 %v2006, 0.70710677
        %v2477 = vmul.f32 %v2197, 0.70710677
        %v2478 = vmul.f32 %v2199, 0.70710677
        %v2479 = vmul.f32 %v2010, 0.70710677
        %v2480 = vmul.f32 %v2012, 0.70710677
        %v2481 = vmul.f32 %v2203, 0.70710677
        %v2482 = vmul.f32 %v2205, 0.70710677
        %v2483 = vmul.f32 %v2014, 0.70710677
        %v2484 = vmul.f32 %v2016, 0.70710677
        %v2485 = vmul.f32 %v2207, 0.70710677
        %v2486 = vmul.f32 %v2209, 0.70710677
        %v2487 = vmul.f32 %v2020, 0.70710677
        %v2488 = vmul.f32 %v2022, 0.70710677
        %v2489 = vmul.f32 %v2213, 0.70710677
        %v2490 = vmul.f32 %v2215, 0.70710677
        %v2491 = vmul.f32 %v2024, 0.70710677
        %v2492 = vmul.f32 %v2026, 0.70710677
        %v2493 = vmul.f32 %v2217, 0.70710677
        %v2494 = vmul.f32 %v2219, 0.70710677
        %v2495 = vmul.f32 %v2030, 0.70710677
        %v2496 = vmul.f32 %v2032, 0.70710677
        %v2497 = vmul.f32 %v2223, 0.70710677
        %v2498 = vmul.f32 %v2225, 0.70710677
        %v2499 = vmul.f32 %v2034, 0.70710677
        %v2500 = vmul.f32 %v2036, 0.70710677
        %v2501 = vmul.f32 %v2227, 0.70710677
        %v2502 = vmul.f32 %v2229, 0.70710677
        %v2503 = vmul.f32 %v2040, 0.70710677
        %v2504 = vmul.f32 %v2042, 0.70710677
        %v2505 = vmul.f32 %v2233, 0.70710677
        %v2506 = vmul.f32 %v2235, 0.70710677
        %v2507 = vmul.f32 %v2044, 0.70710677
        %v2508 = vmul.f32 %v2046, 0.70710677
        %v2509 = vmul.f32 %v2237, 0.70710677
        %v2510 = vmul.f32 %v2239, 0.70710677
        %v2511 = vmul.f32 %v2050, 0.70710677
        %v2512 = vmul.f32 %v2052, 0.70710677
        %v2513 = vmul.f32 %v2243, 0.70710677
        %v2514 = vmul.f32 %v2245, 0.70710677
        %v2515 = vmul.f32 %v2054, 0.70710677
        %v2516 = vmul.f32 %v2056, 0.70710677
        %v2517 = vmul.f32 %v2247, 0.70710677
        %v2518 = vmul.f32 %v2249, 0.70710677
        %v2519 = vmul.f32 %v2060, 0.70710677
        %v2520 = vmul.f32 %v2062, 0.70710677
        %v2521 = vmul.f32 %v2253, 0.70710677
        %v2522 = vmul.f32 %v2255, 0.70710677
        %v2523 = vmul.f32 %v2064, 0.70710677
        %v2524 = vmul.f32 %v2066, 0.70710677
        %v2525 = vmul.f32 %v2257, 0.70710677
        %v2526 = vmul.f32 %v2259, 0.70710677
        %v2527 = vmul.f32 %v2070, 0.70710677
        %v2528 = vmul.f32 %v2072, 0.70710677
        %v2529 = vmul.f32 %v2263, 0.70710677
        %v2530 = vmul.f32 %v2265, 0.70710677
        %v2531 = vmul.f32 %v2074, 0.70710677
        %v2532 = vmul.f32 %v2076, 0.70710677
        %v2533 = vmul.f32 %v2267, 0.70710677
        %v2534 = vmul.f32 %v2269, 0.70710677
        %v2535 = vmul.f32 %v2080, 0.70710677
        %v2536 = vmul.f32 %v2082, 0.70710677
        %v2537 = vmul.f32 %v2273, 0.70710677
        %v2538 = vmul.f32 %v2275, 0.70710677
        %v2539 = vmul.f32 %v2084, 0.70710677
        %v2540 = vmul.f32 %v2086, 0.70710677
        %v2541 = vmul.f32 %v2277, 0.70710677
        %v2542 = vmul.f32 %v2279, 0.70710677
        %v2543 = vmul.f32 %v2090, 0.70710677
        %v2544 = vmul.f32 %v2092, 0.70710677
        %v2545 = vmul.f32 %v2283, 0.70710677
        %v2546 = vmul.f32 %v2285, 0.70710677
        %v2547 = vmul.f32 %v2094, 0.70710677
        %v2548 = vmul.f32 %v2096, 0.70710677
        %v2549 = vmul.f32 %v2287, 0.70710677
        %v2550 = vmul.f32 %v2289, 0.70710677
        %v2551 = vmul.f32 %v2100, 0.70710677
        %v2552 = vmul.f32 %v2102, 0.70710677
        %v2553 = vmul.f32 %v2293, 0.70710677
        %v2554 = vmul.f32 %v2295, 0.70710677
        %v2555 = vmul.f32 %v2104, 0.70710677
        %v2556 = vmul.f32 %v2106, 0.70710677
        %v2557 = vmul.f32 %v2297, 0.70710677
        %v2558 = vmul.f32 %v2299, 0.70710677
        %v2559 = vmul.f32 %v2110, 0.70710677
        %v2560 = vmul.f32 %v2112, 0.70710677
        %v2561 = vmul.f32 %v2303, 0.70710677
        %v2562 = vmul.f32 %v2305, 0.70710677
        %v2563 = vmul.f32 %v2114, 0.70710677
        %v2564 = vmul.f32 %v2116, 0.70710677
        %v2565 = vmul.f32 %v2307, 0.70710677
        %v2566 = vmul.f32 %v2309, 0.70710677
        %v2567 = verf.f32.pop %v2439
        %v2568 = verf.f32.pop %v2440
        %v2569 = verf.f32.pop %v2441
        %v2570 = verf.f32.pop %v2442
        %v2571 = verf.f32.pop %v2443
        %v2572 = verf.f32.pop %v2444
        %v2573 = verf.f32.pop %v2445
        %v2574 = verf.f32.pop %v2446
        %v2575 = verf.f32.pop %v2447
        %v2576 = verf.f32.pop %v2448
        %v2577 = verf.f32.pop %v2449
        %v2578 = verf.f32.pop %v2450
        %v2579 = verf.f32.pop %v2451
        %v2580 = verf.f32.pop %v2452
        %v2581 = verf.f32.pop %v2453
        %v2582 = verf.f32.pop %v2454
        %v2583 = verf.f32.pop %v2455
        %v2584 = verf.f32.pop %v2456
        %v2585 = verf.f32.pop %v2457
        %v2586 = verf.f32.pop %v2458
        %v2587 = verf.f32.pop %v2459
        %v2588 = verf.f32.pop %v2460
        %v2589 = verf.f32.pop %v2461
        %v2590 = verf.f32.pop %v2462
        %v2591 = verf.f32.pop %v2463
        %v2592 = verf.f32.pop %v2464
        %v2593 = verf.f32.pop %v2465
        %v2594 = verf.f32.pop %v2466
        %v2595 = verf.f32.pop %v2467
        %v2596 = verf.f32.pop %v2468
        %v2597 = verf.f32.pop %v2469
        %v2598 = verf.f32.pop %v2470
        %v2599 = verf.f32.pop %v2471
        %v2600 = verf.f32.pop %v2472
        %v2601 = verf.f32.pop %v2473
        %v2602 = verf.f32.pop %v2474
        %v2603 = verf.f32.pop %v2475
        %v2604 = verf.f32.pop %v2476
        %v2605 = verf.f32.pop %v2477
        %v2606 = verf.f32.pop %v2478
        %v2607 = verf.f32.pop %v2479
        %v2608 = verf.f32.pop %v2480
        %v2609 = verf.f32.pop %v2481
        %v2610 = verf.f32.pop %v2482
        %v2611 = verf.f32.pop %v2483
        %v2612 = verf.f32.pop %v2484
        %v2613 = verf.f32.pop %v2485
        %v2614 = verf.f32.pop %v2486
        %v2615 = verf.f32.pop %v2487
        %v2616 = verf.f32.pop %v2488
        %v2617 = verf.f32.pop %v2489
        %v2618 = verf.f32.pop %v2490
        %v2619 = verf.f32.pop %v2491
        %v2620 = verf.f32.pop %v2492
        %v2621 = verf.f32.pop %v2493
        %v2622 = verf.f32.pop %v2494
        %v2623 = verf.f32.pop %v2495
        %v2624 = verf.f32.pop %v2496
        %v2625 = verf.f32.pop %v2497
        %v2626 = verf.f32.pop %v2498
        %v2627 = verf.f32.pop %v2499
        %v2628 = verf.f32.pop %v2500
        %v2629 = verf.f32.pop %v2501
        %v2630 = verf.f32.pop %v2502
        %v2631 = verf.f32.pop %v2503
        %v2632 = verf.f32.pop %v2504
        %v2633 = verf.f32.pop %v2505
        %v2634 = verf.f32.pop %v2506
        %v2635 = verf.f32.pop %v2507
        %v2636 = verf.f32.pop %v2508
        %v2637 = verf.f32.pop %v2509
        %v2638 = verf.f32.pop %v2510
        %v2639 = verf.f32.pop %v2511
        %v2640 = verf.f32.pop %v2512
        %v2641 = verf.f32.pop %v2513
        %v2642 = verf.f32.pop %v2514
        %v2643 = verf.f32.pop %v2515
        %v2644 = verf.f32.pop %v2516
        %v2645 = verf.f32.pop %v2517
        %v2646 = verf.f32.pop %v2518
        %v2647 = verf.f32.pop %v2519
        %v2648 = verf.f32.pop %v2520
        %v2649 = verf.f32.pop %v2521
        %v2650 = verf.f32.pop %v2522
        %v2651 = verf.f32.pop %v2523
        %v2652 = verf.f32.pop %v2524
        %v2653 = verf.f32.pop %v2525
        %v2654 = verf.f32.pop %v2526
        %v2655 = verf.f32.pop %v2527
        %v2656 = verf.f32.pop %v2528
        %v2657 = verf.f32.pop %v2529
        %v2658 = verf.f32.pop %v2530
        %v2659 = verf.f32.pop %v2531
        %v2660 = verf.f32.pop %v2532
        %v2661 = verf.f32.pop %v2533
        %v2662 = verf.f32.pop %v2534
        %v2663 = verf.f32.pop %v2535
        %v2664 = verf.f32.pop %v2536
        %v2665 = verf.f32.pop %v2537
        %v2666 = verf.f32.pop %v2538
        %v2667 = verf.f32.pop %v2539
        %v2668 = verf.f32.pop %v2540
        %v2669 = verf.f32.pop %v2541
        %v2670 = verf.f32.pop %v2542
        %v2671 = verf.f32.pop %v2543
        %v2672 = verf.f32.pop %v2544
        %v2673 = verf.f32.pop %v2545
        %v2674 = verf.f32.pop %v2546
        %v2675 = verf.f32.pop %v2547
        %v2676 = verf.f32.pop %v2548
        %v2677 = verf.f32.pop %v2549
        %v2678 = verf.f32.pop %v2550
        %v2679 = verf.f32.pop %v2551
        %v2680 = verf.f32.pop %v2552
        %v2681 = verf.f32.pop %v2553
        %v2682 = verf.f32.pop %v2554
        %v2683 = verf.f32.pop %v2555
        %v2684 = verf.f32.pop %v2556
        %v2685 = verf.f32.pop %v2557
        %v2686 = verf.f32.pop %v2558
        %v2687 = verf.f32.pop %v2559
        %v2688 = verf.f32.pop %v2560
        %v2689 = verf.f32.pop %v2561
        %v2690 = verf.f32.pop %v2562
        %v2691 = verf.f32.pop %v2563
        %v2692 = verf.f32.pop %v2564
        %v2693 = verf.f32.pop %v2565
        %v2694 = verf.f32.pop %v2566
        %v2695 = vadd.f32 %v2567, 1.0
        %v2696 = vadd.f32 %v2568, 1.0
        %v2697 = vadd.f32 %v2569, 1.0
        %v2698 = vadd.f32 %v2570, 1.0
        %v2699 = vadd.f32 %v2571, 1.0
        %v2700 = vadd.f32 %v2572, 1.0
        %v2701 = vadd.f32 %v2573, 1.0
        %v2702 = vadd.f32 %v2574, 1.0
        %v2703 = vadd.f32 %v2575, 1.0
        %v2704 = vadd.f32 %v2576, 1.0
        %v2705 = vadd.f32 %v2577, 1.0
        %v2706 = vadd.f32 %v2578, 1.0
        %v2707 = vadd.f32 %v2579, 1.0
        %v2708 = vadd.f32 %v2580, 1.0
        %v2709 = vadd.f32 %v2581, 1.0
        %v2710 = vadd.f32 %v2582, 1.0
        %v2711 = vadd.f32 %v2583, 1.0
        %v2712 = vadd.f32 %v2584, 1.0
        %v2713 = vadd.f32 %v2585, 1.0
        %v2714 = vadd.f32 %v2586, 1.0
        %v2715 = vadd.f32 %v2587, 1.0
        %v2716 = vadd.f32 %v2588, 1.0
        %v2717 = vadd.f32 %v2589, 1.0
        %v2718 = vadd.f32 %v2590, 1.0
        %v2719 = vadd.f32 %v2591, 1.0
        %v2720 = vadd.f32 %v2592, 1.0
        %v2721 = vadd.f32 %v2593, 1.0
        %v2722 = vadd.f32 %v2594, 1.0
        %v2723 = vadd.f32 %v2595, 1.0
        %v2724 = vadd.f32 %v2596, 1.0
        %v2725 = vadd.f32 %v2597, 1.0
        %v2726 = vadd.f32 %v2598, 1.0
        %v2727 = vadd.f32 %v2599, 1.0
        %v2728 = vadd.f32 %v2600, 1.0
        %v2729 = vadd.f32 %v2601, 1.0
        %v2730 = vadd.f32 %v2602, 1.0
        %v2731 = vadd.f32 %v2603, 1.0
        %v2732 = vadd.f32 %v2604, 1.0
        %v2733 = vadd.f32 %v2605, 1.0
        %v2734 = vadd.f32 %v2606, 1.0
        %v2735 = vadd.f32 %v2607, 1.0
        %v2736 = vadd.f32 %v2608, 1.0
        %v2737 = vadd.f32 %v2609, 1.0
        %v2738 = vadd.f32 %v2610, 1.0
        %v2739 = vadd.f32 %v2611, 1.0
        %v2740 = vadd.f32 %v2612, 1.0
        %v2741 = vadd.f32 %v2613, 1.0
        %v2742 = vadd.f32 %v2614, 1.0
        %v2743 = vadd.f32 %v2615, 1.0
        %v2744 = vadd.f32 %v2616, 1.0
        %v2745 = vadd.f32 %v2617, 1.0
        %v2746 = vadd.f32 %v2618, 1.0
        %v2747 = vadd.f32 %v2619, 1.0
        %v2748 = vadd.f32 %v2620, 1.0
        %v2749 = vadd.f32 %v2621, 1.0
        %v2750 = vadd.f32 %v2622, 1.0
        %v2751 = vadd.f32 %v2623, 1.0
        %v2752 = vadd.f32 %v2624, 1.0
        %v2753 = vadd.f32 %v2625, 1.0
        %v2754 = vadd.f32 %v2626, 1.0
        %v2755 = vadd.f32 %v2627, 1.0
        %v2756 = vadd.f32 %v2628, 1.0
        %v2757 = vadd.f32 %v2629, 1.0
        %v2758 = vadd.f32 %v2630, 1.0
        %v2759 = vadd.f32 %v2631, 1.0
        %v2760 = vadd.f32 %v2632, 1.0
        %v2761 = vadd.f32 %v2633, 1.0
        %v2762 = vadd.f32 %v2634, 1.0
        %v2763 = vadd.f32 %v2635, 1.0
        %v2764 = vadd.f32 %v2636, 1.0
        %v2765 = vadd.f32 %v2637, 1.0
        %v2766 = vadd.f32 %v2638, 1.0
        %v2767 = vadd.f32 %v2639, 1.0
        %v2768 = vadd.f32 %v2640, 1.0
        %v2769 = vadd.f32 %v2641, 1.0
        %v2770 = vadd.f32 %v2642, 1.0
        %v2771 = vadd.f32 %v2643, 1.0
        %v2772 = vadd.f32 %v2644, 1.0
        %v2773 = vadd.f32 %v2645, 1.0
        %v2774 = vadd.f32 %v2646, 1.0
        %v2775 = vadd.f32 %v2647, 1.0
        %v2776 = vadd.f32 %v2648, 1.0
        %v2777 = vadd.f32 %v2649, 1.0
        %v2778 = vadd.f32 %v2650, 1.0
        %v2779 = vadd.f32 %v2651, 1.0
        %v2780 = vadd.f32 %v2652, 1.0
        %v2781 = vadd.f32 %v2653, 1.0
        %v2782 = vadd.f32 %v2654, 1.0
        %v2783 = vadd.f32 %v2655, 1.0
        %v2784 = vadd.f32 %v2656, 1.0
        %v2785 = vadd.f32 %v2657, 1.0
        %v2786 = vadd.f32 %v2658, 1.0
        %v2787 = vadd.f32 %v2659, 1.0
        %v2788 = vadd.f32 %v2660, 1.0
        %v2789 = vadd.f32 %v2661, 1.0
        %v2790 = vadd.f32 %v2662, 1.0
        %v2791 = vadd.f32 %v2663, 1.0
        %v2792 = vadd.f32 %v2664, 1.0
        %v2793 = vadd.f32 %v2665, 1.0
        %v2794 = vadd.f32 %v2666, 1.0
        %v2795 = vadd.f32 %v2667, 1.0
        %v2796 = vadd.f32 %v2668, 1.0
        %v2797 = vadd.f32 %v2669, 1.0
        %v2798 = vadd.f32 %v2670, 1.0
        %v2799 = vadd.f32 %v2671, 1.0
        %v2800 = vadd.f32 %v2672, 1.0
        %v2801 = vadd.f32 %v2673, 1.0
        %v2802 = vadd.f32 %v2674, 1.0
        %v2803 = vadd.f32 %v2675, 1.0
        %v2804 = vadd.f32 %v2676, 1.0
        %v2805 = vadd.f32 %v2677, 1.0
        %v2806 = vadd.f32 %v2678, 1.0
        %v2807 = vadd.f32 %v2679, 1.0
        %v2808 = vadd.f32 %v2680, 1.0
        %v2809 = vadd.f32 %v2681, 1.0
        %v2810 = vadd.f32 %v2682, 1.0
        %v2811 = vadd.f32 %v2683, 1.0
        %v2812 = vadd.f32 %v2684, 1.0
        %v2813 = vadd.f32 %v2685, 1.0
        %v2814 = vadd.f32 %v2686, 1.0
        %v2815 = vadd.f32 %v2687, 1.0
        %v2816 = vadd.f32 %v2688, 1.0
        %v2817 = vadd.f32 %v2689, 1.0
        %v2818 = vadd.f32 %v2690, 1.0
        %v2819 = vadd.f32 %v2691, 1.0
        %v2820 = vadd.f32 %v2692, 1.0
        %v2821 = vadd.f32 %v2693, 1.0
        %v2822 = vadd.f32 %v2694, 1.0
        %v2823 = vmul.f32 %v2311, %v2695
        %v2824 = vmul.f32 %v2312, %v2696
        %v2825 = vmul.f32 %v2313, %v2697
        %v2826 = vmul.f32 %v2314, %v2698
        %v2827 = vmul.f32 %v2315, %v2699
        %v2828 = vmul.f32 %v2316, %v2700
        %v2829 = vmul.f32 %v2317, %v2701
        %v2830 = vmul.f32 %v2318, %v2702
        %v2831 = vmul.f32 %v2319, %v2703
        %v2832 = vmul.f32 %v2320, %v2704
        %v2833 = vmul.f32 %v2321, %v2705
        %v2834 = vmul.f32 %v2322, %v2706
        %v2835 = vmul.f32 %v2323, %v2707
        %v2836 = vmul.f32 %v2324, %v2708
        %v2837 = vmul.f32 %v2325, %v2709
        %v2838 = vmul.f32 %v2326, %v2710
        %v2839 = vmul.f32 %v2327, %v2711
        %v2840 = vmul.f32 %v2328, %v2712
        %v2841 = vmul.f32 %v2329, %v2713
        %v2842 = vmul.f32 %v2330, %v2714
        %v2843 = vmul.f32 %v2331, %v2715
        %v2844 = vmul.f32 %v2332, %v2716
        %v2845 = vmul.f32 %v2333, %v2717
        %v2846 = vmul.f32 %v2334, %v2718
        %v2847 = vmul.f32 %v2335, %v2719
        %v2848 = vmul.f32 %v2336, %v2720
        %v2849 = vmul.f32 %v2337, %v2721
        %v2850 = vmul.f32 %v2338, %v2722
        %v2851 = vmul.f32 %v2339, %v2723
        %v2852 = vmul.f32 %v2340, %v2724
        %v2853 = vmul.f32 %v2341, %v2725
        %v2854 = vmul.f32 %v2342, %v2726
        %v2855 = vmul.f32 %v2343, %v2727
        %v2856 = vmul.f32 %v2344, %v2728
        %v2857 = vmul.f32 %v2345, %v2729
        %v2858 = vmul.f32 %v2346, %v2730
        %v2859 = vmul.f32 %v2347, %v2731
        %v2860 = vmul.f32 %v2348, %v2732
        %v2861 = vmul.f32 %v2349, %v2733
        %v2862 = vmul.f32 %v2350, %v2734
        %v2863 = vmul.f32 %v2351, %v2735
        %v2864 = vmul.f32 %v2352, %v2736
        %v2865 = vmul.f32 %v2353, %v2737
        %v2866 = vmul.f32 %v2354, %v2738
        %v2867 = vmul.f32 %v2355, %v2739
        %v2868 = vmul.f32 %v2356, %v2740
        %v2869 = vmul.f32 %v2357, %v2741
        %v2870 = vmul.f32 %v2358, %v2742
        %v2871 = vmul.f32 %v2359, %v2743
        %v2872 = vmul.f32 %v2360, %v2744
        %v2873 = vmul.f32 %v2361, %v2745
        %v2874 = vmul.f32 %v2362, %v2746
        %v2875 = vmul.f32 %v2363, %v2747
        %v2876 = vmul.f32 %v2364, %v2748
        %v2877 = vmul.f32 %v2365, %v2749
        %v2878 = vmul.f32 %v2366, %v2750
        %v2879 = vmul.f32 %v2367, %v2751
        %v2880 = vmul.f32 %v2368, %v2752
        %v2881 = vmul.f32 %v2369, %v2753
        %v2882 = vmul.f32 %v2370, %v2754
        %v2883 = vmul.f32 %v2371, %v2755
        %v2884 = vmul.f32 %v2372, %v2756
        %v2885 = vmul.f32 %v2373, %v2757
        %v2886 = vmul.f32 %v2374, %v2758
        %v2887 = vmul.f32 %v2375, %v2759
        %v2888 = vmul.f32 %v2376, %v2760
        %v2889 = vmul.f32 %v2377, %v2761
        %v2890 = vmul.f32 %v2378, %v2762
        %v2891 = vmul.f32 %v2379, %v2763
        %v2892 = vmul.f32 %v2380, %v2764
        %v2893 = vmul.f32 %v2381, %v2765
        %v2894 = vmul.f32 %v2382, %v2766
        %v2895 = vmul.f32 %v2383, %v2767
        %v2896 = vmul.f32 %v2384, %v2768
        %v2897 = vmul.f32 %v2385, %v2769
        %v2898 = vmul.f32 %v2386, %v2770
        %v2899 = vmul.f32 %v2387, %v2771
        %v2900 = vmul.f32 %v2388, %v2772
        %v2901 = vmul.f32 %v2389, %v2773
        %v2902 = vmul.f32 %v2390, %v2774
        %v2903 = vmul.f32 %v2391, %v2775
        %v2904 = vmul.f32 %v2392, %v2776
        %v2905 = vmul.f32 %v2393, %v2777
        %v2906 = vmul.f32 %v2394, %v2778
        %v2907 = vmul.f32 %v2395, %v2779
        %v2908 = vmul.f32 %v2396, %v2780
        %v2909 = vmul.f32 %v2397, %v2781
        %v2910 = vmul.f32 %v2398, %v2782
        %v2911 = vmul.f32 %v2399, %v2783
        %v2912 = vmul.f32 %v2400, %v2784
        %v2913 = vmul.f32 %v2401, %v2785
        %v2914 = vmul.f32 %v2402, %v2786
        %v2915 = vmul.f32 %v2403, %v2787
        %v2916 = vmul.f32 %v2404, %v2788
        %v2917 = vmul.f32 %v2405, %v2789
        %v2918 = vmul.f32 %v2406, %v2790
        %v2919 = vmul.f32 %v2407, %v2791
        %v2920 = vmul.f32 %v2408, %v2792
        %v2921 = vmul.f32 %v2409, %v2793
        %v2922 = vmul.f32 %v2410, %v2794
        %v2923 = vmul.f32 %v2411, %v2795
        %v2924 = vmul.f32 %v2412, %v2796
        %v2925 = vmul.f32 %v2413, %v2797
        %v2926 = vmul.f32 %v2414, %v2798
        %v2927 = vmul.f32 %v2415, %v2799
        %v2928 = vmul.f32 %v2416, %v2800
        %v2929 = vmul.f32 %v2417, %v2801
        %v2930 = vmul.f32 %v2418, %v2802
        %v2931 = vmul.f32 %v2419, %v2803
        %v2932 = vmul.f32 %v2420, %v2804
        %v2933 = vmul.f32 %v2421, %v2805
        %v2934 = vmul.f32 %v2422, %v2806
        %v2935 = vmul.f32 %v2423, %v2807
        %v2936 = vmul.f32 %v2424, %v2808
        %v2937 = vmul.f32 %v2425, %v2809
        %v2938 = vmul.f32 %v2426, %v2810
        %v2939 = vmul.f32 %v2427, %v2811
        %v2940 = vmul.f32 %v2428, %v2812
        %v2941 = vmul.f32 %v2429, %v2813
        %v2942 = vmul.f32 %v2430, %v2814
        %v2943 = vmul.f32 %v2431, %v2815
        %v2944 = vmul.f32 %v2432, %v2816
        %v2945 = vmul.f32 %v2433, %v2817
        %v2946 = vmul.f32 %v2434, %v2818
        %v2947 = vmul.f32 %v2435, %v2819
        %v2948 = vmul.f32 %v2436, %v2820
        %v2949 = vmul.f32 %v2437, %v2821
        %v2950 = vmul.f32 %v2438, %v2822
        %v2951 = vpack.c.bf16 %v2827, %v2823
        %v2952 = vpack.c.bf16 %v2828, %v2824
        %v2953 = vpack.c.bf16 %v2829, %v2825
        %v2954 = vpack.c.bf16 %v2830, %v2826
        %v2955 = vpack.c.bf16 %v2835, %v2831
        %v2956 = vpack.c.bf16 %v2836, %v2832
        %v2957 = vpack.c.bf16 %v2837, %v2833
        %v2958 = vpack.c.bf16 %v2838, %v2834
        %v2959 = vpack.c.bf16 %v2843, %v2839
        %v2960 = vpack.c.bf16 %v2844, %v2840
        %v2961 = vpack.c.bf16 %v2845, %v2841
        %v2962 = vpack.c.bf16 %v2846, %v2842
        %v2963 = vpack.c.bf16 %v2851, %v2847
        %v2964 = vpack.c.bf16 %v2852, %v2848
        %v2965 = vpack.c.bf16 %v2853, %v2849
        %v2966 = vpack.c.bf16 %v2854, %v2850
        %v2967 = vpack.c.bf16 %v2859, %v2855
        %v2968 = vpack.c.bf16 %v2860, %v2856
        %v2969 = vpack.c.bf16 %v2861, %v2857
        %v2970 = vpack.c.bf16 %v2862, %v2858
        %v2971 = vpack.c.bf16 %v2867, %v2863
        %v2972 = vpack.c.bf16 %v2868, %v2864
        %v2973 = vpack.c.bf16 %v2869, %v2865
        %v2974 = vpack.c.bf16 %v2870, %v2866
        %v2975 = vpack.c.bf16 %v2875, %v2871
        %v2976 = vpack.c.bf16 %v2876, %v2872
        %v2977 = vpack.c.bf16 %v2877, %v2873
        %v2978 = vpack.c.bf16 %v2878, %v2874
        %v2979 = vpack.c.bf16 %v2883, %v2879
        %v2980 = vpack.c.bf16 %v2884, %v2880
        %v2981 = vpack.c.bf16 %v2885, %v2881
        %v2982 = vpack.c.bf16 %v2886, %v2882
        %v2983 = vpack.c.bf16 %v2891, %v2887
        %v2984 = vpack.c.bf16 %v2892, %v2888
        %v2985 = vpack.c.bf16 %v2893, %v2889
        %v2986 = vpack.c.bf16 %v2894, %v2890
        %v2987 = vpack.c.bf16 %v2899, %v2895
        %v2988 = vpack.c.bf16 %v2900, %v2896
        %v2989 = vpack.c.bf16 %v2901, %v2897
        %v2990 = vpack.c.bf16 %v2902, %v2898
        %v2991 = vpack.c.bf16 %v2907, %v2903
        %v2992 = vpack.c.bf16 %v2908, %v2904
        %v2993 = vpack.c.bf16 %v2909, %v2905
        %v2994 = vpack.c.bf16 %v2910, %v2906
        %v2995 = vpack.c.bf16 %v2915, %v2911
        %v2996 = vpack.c.bf16 %v2916, %v2912
        %v2997 = vpack.c.bf16 %v2917, %v2913
        %v2998 = vpack.c.bf16 %v2918, %v2914
        %v2999 = vpack.c.bf16 %v2923, %v2919
        %v3000 = vpack.c.bf16 %v2924, %v2920
        %v3001 = vpack.c.bf16 %v2925, %v2921
        %v3002 = vpack.c.bf16 %v2926, %v2922
        %v3003 = vpack.c.bf16 %v2931, %v2927
        %v3004 = vpack.c.bf16 %v2932, %v2928
        %v3005 = vpack.c.bf16 %v2933, %v2929
        %v3006 = vpack.c.bf16 %v2934, %v2930
        %v3007 = vpack.c.bf16 %v2939, %v2935
        %v3008 = vpack.c.bf16 %v2940, %v2936
        %v3009 = vpack.c.bf16 %v2941, %v2937
        %v3010 = vpack.c.bf16 %v2942, %v2938
        %v3011 = vpack.c.bf16 %v2947, %v2943
        %v3012 = vpack.c.bf16 %v2948, %v2944
        %v3013 = vpack.c.bf16 %v2949, %v2945
        %v3014 = vpack.c.bf16 %v2950, %v2946
        %v3015 = vld [vmem:[#allocation10] sm:$0xf]
        %v3016 = vld [vmem:[#allocation10 + $0x4] sm:$0xf]
        %v3017 = vld [vmem:[#allocation10 + $0x8] sm:$0xf]
        %v3018 = vld [vmem:[#allocation10 + $0xc] sm:$0xf]
        %v3019 = vld [vmem:[#allocation10 + $0x10] sm:$0xf]
        %v3020 = vld [vmem:[#allocation10 + $0x14] sm:$0xf]
        %v3021 = vld [vmem:[#allocation10 + $0x18] sm:$0xf]
        %v3022 = vld [vmem:[#allocation10 + $0x1c] sm:$0xf]
        %v3023 = vld [vmem:[#allocation10 + $0x20] sm:$0xf]
        %v3024 = vld [vmem:[#allocation10 + $0x24] sm:$0xf]
        %v3025 = vld [vmem:[#allocation10 + $0x28] sm:$0xf]
        %v3026 = vld [vmem:[#allocation10 + $0x2c] sm:$0xf]
        %v3027 = vld [vmem:[#allocation10 + $0x30] sm:$0xf]
        %v3028 = vld [vmem:[#allocation10 + $0x34] sm:$0xf]
        %v3029 = vld [vmem:[#allocation10 + $0x38] sm:$0xf]
        %v3030 = vld [vmem:[#allocation10 + $0x3c] sm:$0xf]
        %v3031 = vld [vmem:[#allocation10 + $0x40] sm:$0xf]
        %v3032 = vld [vmem:[#allocation10 + $0x44] sm:$0xf]
        %v3033 = vld [vmem:[#allocation10 + $0x48] sm:$0xf]
        %v3034 = vld [vmem:[#allocation10 + $0x4c] sm:$0xf]
        %v3035 = vld [vmem:[#allocation10 + $0x50] sm:$0xf]
        %v3036 = vld [vmem:[#allocation10 + $0x54] sm:$0xf]
        %v3037 = vld [vmem:[#allocation10 + $0x58] sm:$0xf]
        %v3038 = vld [vmem:[#allocation10 + $0x5c] sm:$0xf]
        %v3039 = vld [vmem:[#allocation10 + $0x60] sm:$0xf]
        %v3040 = vld [vmem:[#allocation10 + $0x64] sm:$0xf]
        %v3041 = vld [vmem:[#allocation10 + $0x68] sm:$0xf]
        %v3042 = vld [vmem:[#allocation10 + $0x6c] sm:$0xf]
        %v3043 = vld [vmem:[#allocation10 + $0x70] sm:$0xf]
        %v3044 = vld [vmem:[#allocation10 + $0x74] sm:$0xf]
        %v3045 = vld [vmem:[#allocation10 + $0x78] sm:$0xf]
        %v3046 = vld [vmem:[#allocation10 + $0x7c] sm:$0xf]
        %v3047 = vld [vmem:[#allocation10 + $0x80] sm:$0xf]
        %v3048 = vld [vmem:[#allocation10 + $0x84] sm:$0xf]
        %v3049 = vld [vmem:[#allocation10 + $0x88] sm:$0xf]
        %v3050 = vld [vmem:[#allocation10 + $0x8c] sm:$0xf]
        %v3051 = vld [vmem:[#allocation10 + $0x90] sm:$0xf]
        %v3052 = vld [vmem:[#allocation10 + $0x94] sm:$0xf]
        %v3053 = vld [vmem:[#allocation10 + $0x98] sm:$0xf]
        %v3054 = vld [vmem:[#allocation10 + $0x9c] sm:$0xf]
        %v3055 = vld [vmem:[#allocation10 + $0xa0] sm:$0xf]
        %v3056 = vld [vmem:[#allocation10 + $0xa4] sm:$0xf]
        %v3057 = vld [vmem:[#allocation10 + $0xa8] sm:$0xf]
        %v3058 = vld [vmem:[#allocation10 + $0xac] sm:$0xf]
        %v3059 = vld [vmem:[#allocation10 + $0xb0] sm:$0xf]
        %v3060 = vld [vmem:[#allocation10 + $0xb4] sm:$0xf]
        %v3061 = vld [vmem:[#allocation10 + $0xb8] sm:$0xf]
        %v3062 = vld [vmem:[#allocation10 + $0xbc] sm:$0xf]
        %v3063 = vld [vmem:[#allocation10 + $0xc0] sm:$0xf]
        %v3064 = vld [vmem:[#allocation10 + $0xc4] sm:$0xf]
        %v3065 = vld [vmem:[#allocation10 + $0xc8] sm:$0xf]
        %v3066 = vld [vmem:[#allocation10 + $0xcc] sm:$0xf]
        %v3067 = vld [vmem:[#allocation10 + $0xd0] sm:$0xf]
        %v3068 = vld [vmem:[#allocation10 + $0xd4] sm:$0xf]
        %v3069 = vld [vmem:[#allocation10 + $0xd8] sm:$0xf]
        %v3070 = vld [vmem:[#allocation10 + $0xdc] sm:$0xf]
        %v3071 = vld [vmem:[#allocation10 + $0xe0] sm:$0xf]
        %v3072 = vld [vmem:[#allocation10 + $0xe4] sm:$0xf]
        %v3073 = vld [vmem:[#allocation10 + $0xe8] sm:$0xf]
        %v3074 = vld [vmem:[#allocation10 + $0xec] sm:$0xf]
        %v3075 = vld [vmem:[#allocation10 + $0xf0] sm:$0xf]
        %v3076 = vld [vmem:[#allocation10 + $0xf4] sm:$0xf]
        %v3077 = vld [vmem:[#allocation10 + $0xf8] sm:$0xf]
        %v3078 = vld [vmem:[#allocation10 + $0xfc] sm:$0xf]
        %v3079 = vld [vmem:[%s7] sm:$0x1]
        %v3081 = vlaneseq
        %v3082 = vshrl.u32 %v3081, 7
        %v3083 = vsub.s32 0, %v3082
        %v3084 = vrot.slane %v3079, %v3083
        %v3150 = vunpack.c.l.b16 %v3015
        %v3151 = vunpack.c.l.b16 %v3016
        %v3152 = vunpack.c.l.b16 %v3017
        %v3153 = vunpack.c.l.b16 %v3018
        %v3154 = vunpack.c.l.b16 %v3019
        %v3155 = vunpack.c.l.b16 %v3020
        %v3156 = vunpack.c.l.b16 %v3021
        %v3157 = vunpack.c.l.b16 %v3022
        %v3158 = vunpack.c.l.b16 %v3023
        %v3159 = vunpack.c.l.b16 %v3024
        %v3160 = vunpack.c.l.b16 %v3025
        %v3161 = vunpack.c.l.b16 %v3026
        %v3162 = vunpack.c.l.b16 %v3027
        %v3163 = vunpack.c.l.b16 %v3028
        %v3164 = vunpack.c.l.b16 %v3029
        %v3165 = vunpack.c.l.b16 %v3030
        %v3166 = vunpack.c.l.b16 %v3031
        %v3167 = vunpack.c.l.b16 %v3032
        %v3168 = vunpack.c.l.b16 %v3033
        %v3169 = vunpack.c.l.b16 %v3034
        %v3170 = vunpack.c.l.b16 %v3035
        %v3171 = vunpack.c.l.b16 %v3036
        %v3172 = vunpack.c.l.b16 %v3037
        %v3173 = vunpack.c.l.b16 %v3038
        %v3174 = vunpack.c.l.b16 %v3039
        %v3175 = vunpack.c.l.b16 %v3040
        %v3176 = vunpack.c.l.b16 %v3041
        %v3177 = vunpack.c.l.b16 %v3042
        %v3178 = vunpack.c.l.b16 %v3043
        %v3179 = vunpack.c.l.b16 %v3044
        %v3180 = vunpack.c.l.b16 %v3045
        %v3181 = vunpack.c.l.b16 %v3046
        %v3182 = vunpack.c.l.b16 %v3047
        %v3183 = vunpack.c.l.b16 %v3048
        %v3184 = vunpack.c.l.b16 %v3049
        %v3185 = vunpack.c.l.b16 %v3050
        %v3186 = vunpack.c.l.b16 %v3051
        %v3187 = vunpack.c.l.b16 %v3052
        %v3188 = vunpack.c.l.b16 %v3053
        %v3189 = vunpack.c.l.b16 %v3054
        %v3190 = vunpack.c.l.b16 %v3055
        %v3191 = vunpack.c.l.b16 %v3056
        %v3192 = vunpack.c.l.b16 %v3057
        %v3193 = vunpack.c.l.b16 %v3058
        %v3194 = vunpack.c.l.b16 %v3059
        %v3195 = vunpack.c.l.b16 %v3060
        %v3196 = vunpack.c.l.b16 %v3061
        %v3197 = vunpack.c.l.b16 %v3062
        %v3198 = vunpack.c.l.b16 %v3063
        %v3199 = vunpack.c.l.b16 %v3064
        %v3200 = vunpack.c.l.b16 %v3065
        %v3201 = vunpack.c.l.b16 %v3066
        %v3202 = vunpack.c.l.b16 %v3067
        %v3203 = vunpack.c.l.b16 %v3068
        %v3204 = vunpack.c.l.b16 %v3069
        %v3205 = vunpack.c.l.b16 %v3070
        %v3206 = vunpack.c.l.b16 %v3071
        %v3207 = vunpack.c.l.b16 %v3072
        %v3208 = vunpack.c.l.b16 %v3073
        %v3209 = vunpack.c.l.b16 %v3074
        %v3210 = vunpack.c.l.b16 %v3075
        %v3211 = vunpack.c.l.b16 %v3076
        %v3212 = vunpack.c.l.b16 %v3077
        %v3213 = vunpack.c.l.b16 %v3078
        %v3214 = vpack.c.b16 %v3151, %v3150
        %v3215 = vpack.c.b16 %v3153, %v3152
        %v3216 = vpack.c.b16 %v3155, %v3154
        %v3217 = vpack.c.b16 %v3157, %v3156
        %v3218 = vpack.c.b16 %v3159, %v3158
        %v3219 = vpack.c.b16 %v3161, %v3160
        %v3220 = vpack.c.b16 %v3163, %v3162
        %v3221 = vpack.c.b16 %v3165, %v3164
        %v3222 = vpack.c.b16 %v3167, %v3166
        %v3223 = vpack.c.b16 %v3169, %v3168
        %v3224 = vpack.c.b16 %v3171, %v3170
        %v3225 = vpack.c.b16 %v3173, %v3172
        %v3226 = vpack.c.b16 %v3175, %v3174
        %v3227 = vpack.c.b16 %v3177, %v3176
        %v3228 = vpack.c.b16 %v3179, %v3178
        %v3229 = vpack.c.b16 %v3181, %v3180
        %v3230 = vpack.c.b16 %v3183, %v3182
        %v3231 = vpack.c.b16 %v3185, %v3184
        %v3232 = vpack.c.b16 %v3187, %v3186
        %v3233 = vpack.c.b16 %v3189, %v3188
        %v3234 = vpack.c.b16 %v3191, %v3190
        %v3235 = vpack.c.b16 %v3193, %v3192
        %v3236 = vpack.c.b16 %v3195, %v3194
        %v3237 = vpack.c.b16 %v3197, %v3196
        %v3238 = vpack.c.b16 %v3199, %v3198
        %v3239 = vpack.c.b16 %v3201, %v3200
        %v3240 = vpack.c.b16 %v3203, %v3202
        %v3241 = vpack.c.b16 %v3205, %v3204
        %v3242 = vpack.c.b16 %v3207, %v3206
        %v3243 = vpack.c.b16 %v3209, %v3208
        %v3244 = vpack.c.b16 %v3211, %v3210
        %v3245 = vpack.c.b16 %v3213, %v3212
        %3278 = vmatprep.subr.bf16.mxu0 0
        %3279 = vmatpush1.bf16.msra.mxu0 %v3214
        %3280 = vmatprep.subr.bf16.mxu0 0
        %3281 = vmatpush1.bf16.msra.mxu0 %v3215
        %3282 = vmatprep.subr.bf16.mxu0 0
        %3283 = vmatpush1.bf16.msra.mxu0 %v3216
        %3284 = vmatprep.subr.bf16.mxu0 0
        %3285 = vmatpush1.bf16.msra.mxu0 %v3217
        %3286 = vmatprep.subr.bf16.mxu0 0
        %3287 = vmatpush1.bf16.msra.mxu0 %v3218
        %3288 = vmatprep.subr.bf16.mxu0 0
        %3289 = vmatpush1.bf16.msra.mxu0 %v3219
        %3290 = vmatprep.subr.bf16.mxu0 0
        %3291 = vmatpush1.bf16.msra.mxu0 %v3220
        %3292 = vmatprep.subr.bf16.mxu0 0
        %3293 = vmatpush1.bf16.msra.mxu0 %v3221
        %3294 = vmatprep.subr.bf16.mxu0 0
        %3295 = vmatpush1.bf16.msra.mxu0 %v3222
        %3296 = vmatprep.subr.bf16.mxu0 0
        %3297 = vmatpush1.bf16.msra.mxu0 %v3223
        %3298 = vmatprep.subr.bf16.mxu0 0
        %3299 = vmatpush1.bf16.msra.mxu0 %v3224
        %3300 = vmatprep.subr.bf16.mxu0 0
        %3301 = vmatpush1.bf16.msra.mxu0 %v3225
        %3302 = vmatprep.subr.bf16.mxu0 0
        %3303 = vmatpush1.bf16.msra.mxu0 %v3226
        %3304 = vmatprep.subr.bf16.mxu0 0
        %3305 = vmatpush1.bf16.msra.mxu0 %v3227
        %3306 = vmatprep.subr.bf16.mxu0 0
        %3307 = vmatpush1.bf16.msra.mxu0 %v3228
        %3308 = vmatprep.subr.bf16.mxu0 0
        %3309 = vmatpush1.bf16.msra.mxu0 %v3229
        %3310 = vmatprep.mubr.bf16.mxu0 %v2952
        %3311 = vmatmul.mubr.bf16.gmra.mrb[0].mxu0 %v2951
        %v3312 = vpop.f32.mrb[0].mxu0
        %v3313 = vadd.f32 %v3084, %v3312
        %v3314 = vpop.f32.mrb[0].mxu0
        %v3315 = vpop.f32.mrb[0].mxu0
        %v3316 = vadd.f32 %v3084, %v3315
        %v3317 = vpop.f32.mrb[0].mxu0
        %3318 = vmatprep.mubr.bf16.mxu0 %v2956
        %3319 = vmatmul.mubr.bf16.gmra.mrb[0].mxu0 %v2955
        %v3320 = vpop.f32.mrb[0].mxu0
        %v3321 = vadd.f32 %v3084, %v3320
        %v3322 = vpop.f32.mrb[0].mxu0
        %v3323 = vpop.f32.mrb[0].mxu0
        %v3324 = vadd.f32 %v3084, %v3323
        %v3325 = vpop.f32.mrb[0].mxu0
        %3326 = vmatprep.mubr.bf16.mxu0 %v2960
        %3327 = vmatmul.mubr.bf16.gmra.mrb[0].mxu0 %v2959
        %v3328 = vpop.f32.mrb[0].mxu0
        %v3329 = vadd.f32 %v3084, %v3328
        %v3330 = vpop.f32.mrb[0].mxu0
        %v3331 = vpop.f32.mrb[0].mxu0
        %v3332 = vadd.f32 %v3084, %v3331
        %v3333 = vpop.f32.mrb[0].mxu0
        %3334 = vmatprep.mubr.bf16.mxu0 %v2964
        %3335 = vmatmul.mubr.bf16.gmra.mrb[0].mxu0 %v2963
        %v3336 = vpop.f32.mrb[0].mxu0
        %v3337 = vadd.f32 %v3084, %v3336
        %v3338 = vpop.f32.mrb[0].mxu0
        %v3339 = vpop.f32.mrb[0].mxu0
        %v3340 = vadd.f32 %v3084, %v3339
        %v3341 = vpop.f32.mrb[0].mxu0
        %3342 = vmatprep.mubr.bf16.mxu0 %v2968
        %3343 = vmatmul.mubr.bf16.gmra.mrb[0].mxu0 %v2967
        %v3344 = vpop.f32.mrb[0].mxu0
        %v3345 = vadd.f32 %v3084, %v3344
        %v3346 = vpop.f32.mrb[0].mxu0
        %v3347 = vpop.f32.mrb[0].mxu0
        %v3348 = vadd.f32 %v3084, %v3347
        %v3349 = vpop.f32.mrb[0].mxu0
        %3350 = vmatprep.mubr.bf16.mxu0 %v2972
        %3351 = vmatmul.mubr.bf16.gmra.mrb[0].mxu0 %v2971
        %v3352 = vpop.f32.mrb[0].mxu0
        %v3353 = vadd.f32 %v3084, %v3352
        %v3354 = vpop.f32.mrb[0].mxu0
        %v3355 = vpop.f32.mrb[0].mxu0
        %v3356 = vadd.f32 %v3084, %v3355
        %v3357 = vpop.f32.mrb[0].mxu0
        %3358 = vmatprep.mubr.bf16.mxu0 %v2976
        %3359 = vmatmul.mubr.bf16.gmra.mrb[0].mxu0 %v2975
        %v3360 = vpop.f32.mrb[0].mxu0
        %v3361 = vadd.f32 %v3084, %v3360
        %v3362 = vpop.f32.mrb[0].mxu0
        %v3363 = vpop.f32.mrb[0].mxu0
        %v3364 = vadd.f32 %v3084, %v3363
        %v3365 = vpop.f32.mrb[0].mxu0
        %3366 = vmatprep.mubr.bf16.mxu0 %v2980
        %3367 = vmatmul.mubr.bf16.gmra.mrb[0].mxu0 %v2979
        %v3368 = vpop.f32.mrb[0].mxu0
        %v3369 = vadd.f32 %v3084, %v3368
        %v3370 = vpop.f32.mrb[0].mxu0
        %v3371 = vpop.f32.mrb[0].mxu0
        %v3372 = vadd.f32 %v3084, %v3371
        %v3373 = vpop.f32.mrb[0].mxu0
        %3374 = vmatprep.mubr.bf16.mxu0 %v2984
        %3375 = vmatmul.mubr.bf16.gmra.mrb[0].mxu0 %v2983
        %v3376 = vpop.f32.mrb[0].mxu0
        %v3377 = vadd.f32 %v3084, %v3376
        %v3378 = vpop.f32.mrb[0].mxu0
        %v3379 = vpop.f32.mrb[0].mxu0
        %v3380 = vadd.f32 %v3084, %v3379
        %v3381 = vpop.f32.mrb[0].mxu0
        %3382 = vmatprep.mubr.bf16.mxu0 %v2988
        %3383 = vmatmul.mubr.bf16.gmra.mrb[0].mxu0 %v2987
        %v3384 = vpop.f32.mrb[0].mxu0
        %v3385 = vadd.f32 %v3084, %v3384
        %v3386 = vpop.f32.mrb[0].mxu0
        %v3387 = vpop.f32.mrb[0].mxu0
        %v3388 = vadd.f32 %v3084, %v3387
        %v3389 = vpop.f32.mrb[0].mxu0
        %3390 = vmatprep.mubr.bf16.mxu0 %v2992
        %3391 = vmatmul.mubr.bf16.gmra.mrb[0].mxu0 %v2991
        %v3392 = vpop.f32.mrb[0].mxu0
        %v3393 = vadd.f32 %v3084, %v3392
        %v3394 = vpop.f32.mrb[0].mxu0
        %v3395 = vpop.f32.mrb[0].mxu0
        %v3396 = vadd.f32 %v3084, %v3395
        %v3397 = vpop.f32.mrb[0].mxu0
        %3398 = vmatprep.mubr.bf16.mxu0 %v2996
        %3399 = vmatmul.mubr.bf16.gmra.mrb[0].mxu0 %v2995
        %v3400 = vpop.f32.mrb[0].mxu0
        %v3401 = vadd.f32 %v3084, %v3400
        %v3402 = vpop.f32.mrb[0].mxu0
        %v3403 = vpop.f32.mrb[0].mxu0
        %v3404 = vadd.f32 %v3084, %v3403
        %v3405 = vpop.f32.mrb[0].mxu0
        %3406 = vmatprep.mubr.bf16.mxu0 %v3000
        %3407 = vmatmul.mubr.bf16.gmra.mrb[0].mxu0 %v2999
        %v3408 = vpop.f32.mrb[0].mxu0
        %v3409 = vadd.f32 %v3084, %v3408
        %v3410 = vpop.f32.mrb[0].mxu0
        %v3411 = vpop.f32.mrb[0].mxu0
        %v3412 = vadd.f32 %v3084, %v3411
        %v3413 = vpop.f32.mrb[0].mxu0
        %3414 = vmatprep.mubr.bf16.mxu0 %v3004
        %3415 = vmatmul.mubr.bf16.gmra.mrb[0].mxu0 %v3003
        %v3416 = vpop.f32.mrb[0].mxu0
        %v3417 = vadd.f32 %v3084, %v3416
        %v3418 = vpop.f32.mrb[0].mxu0
        %v3419 = vpop.f32.mrb[0].mxu0
        %v3420 = vadd.f32 %v3084, %v3419
        %v3421 = vpop.f32.mrb[0].mxu0
        %3422 = vmatprep.mubr.bf16.mxu0 %v3008
        %3423 = vmatmul.mubr.bf16.gmra.mrb[0].mxu0 %v3007
        %v3424 = vpop.f32.mrb[0].mxu0
        %v3425 = vadd.f32 %v3084, %v3424
        %v3426 = vpop.f32.mrb[0].mxu0
        %v3427 = vpop.f32.mrb[0].mxu0
        %v3428 = vadd.f32 %v3084, %v3427
        %v3429 = vpop.f32.mrb[0].mxu0
        %3430 = vmatprep.mubr.bf16.mxu0 %v3012
        %3431 = vmatmul.mubr.bf16.gmra.mrb[0].mxu0 %v3011
        %v3432 = vpop.f32.mrb[0].mxu0
        %v3433 = vadd.f32 %v3084, %v3432
        %v3434 = vpop.f32.mrb[0].mxu0
        %v3435 = vpop.f32.mrb[0].mxu0
        %v3436 = vadd.f32 %v3084, %v3435
        %v3437 = vpop.f32.mrb[0].mxu0
        %3438 = vdwg.mxu0
        %3439 = vmatprep.subr.bf16.mxu0 0
        %3440 = vmatpush1.bf16.msra.mxu0 %v3230
        %3441 = vmatprep.subr.bf16.mxu0 0
        %3442 = vmatpush1.bf16.msra.mxu0 %v3231
        %3443 = vmatprep.subr.bf16.mxu0 0
        %3444 = vmatpush1.bf16.msra.mxu0 %v3232
        %3445 = vmatprep.subr.bf16.mxu0 0
        %3446 = vmatpush1.bf16.msra.mxu0 %v3233
        %3447 = vmatprep.subr.bf16.mxu0 0
        %3448 = vmatpush1.bf16.msra.mxu0 %v3234
        %3449 = vmatprep.subr.bf16.mxu0 0
        %3450 = vmatpush1.bf16.msra.mxu0 %v3235
        %3451 = vmatprep.subr.bf16.mxu0 0
        %3452 = vmatpush1.bf16.msra.mxu0 %v3236
        %3453 = vmatprep.subr.bf16.mxu0 0
        %3454 = vmatpush1.bf16.msra.mxu0 %v3237
        %3455 = vmatprep.subr.bf16.mxu0 0
        %3456 = vmatpush1.bf16.msra.mxu0 %v3238
        %3457 = vmatprep.subr.bf16.mxu0 0
        %3458 = vmatpush1.bf16.msra.mxu0 %v3239
        %3459 = vmatprep.subr.bf16.mxu0 0
        %3460 = vmatpush1.bf16.msra.mxu0 %v3240
        %3461 = vmatprep.subr.bf16.mxu0 0
        %3462 = vmatpush1.bf16.msra.mxu0 %v3241
        %3463 = vmatprep.subr.bf16.mxu0 0
        %3464 = vmatpush1.bf16.msra.mxu0 %v3242
        %3465 = vmatprep.subr.bf16.mxu0 0
        %3466 = vmatpush1.bf16.msra.mxu0 %v3243
        %3467 = vmatprep.subr.bf16.mxu0 0
        %3468 = vmatpush1.bf16.msra.mxu0 %v3244
        %3469 = vmatprep.subr.bf16.mxu0 0
        %3470 = vmatpush1.bf16.msra.mxu0 %v3245
        %3471 = vmatprep.mubr.bf16.mxu0 %v2954
        %3472 = vmatmul.mubr.bf16.gmra.mrb[0].mxu0 %v2953
        %v3473 = vpop.f32.mrb[0].mxu0
        %v3474 = vadd.f32 %v3313, %v3473
        %v3475 = vpop.f32.mrb[0].mxu0
        %v3476 = vpop.f32.mrb[0].mxu0
        %v3477 = vadd.f32 %v3316, %v3476
        %v3478 = vpop.f32.mrb[0].mxu0
        %3479 = vmatprep.mubr.bf16.mxu0 %v2958
        %3480 = vmatmul.mubr.bf16.gmra.mrb[0].mxu0 %v2957
        %v3481 = vpop.f32.mrb[0].mxu0
        %v3482 = vadd.f32 %v3321, %v3481
        %v3483 = vpop.f32.mrb[0].mxu0
        %v3484 = vpop.f32.mrb[0].mxu0
        %v3485 = vadd.f32 %v3324, %v3484
        %v3486 = vpop.f32.mrb[0].mxu0
        %3487 = vmatprep.mubr.bf16.mxu0 %v2962
        %3488 = vmatmul.mubr.bf16.gmra.mrb[0].mxu0 %v2961
        %v3489 = vpop.f32.mrb[0].mxu0
        %v3490 = vadd.f32 %v3329, %v3489
        %v3491 = vpop.f32.mrb[0].mxu0
        %v3492 = vpop.f32.mrb[0].mxu0
        %v3493 = vadd.f32 %v3332, %v3492
        %v3494 = vpop.f32.mrb[0].mxu0
        %3495 = vmatprep.mubr.bf16.mxu0 %v2966
        %3496 = vmatmul.mubr.bf16.gmra.mrb[0].mxu0 %v2965
        %v3497 = vpop.f32.mrb[0].mxu0
        %v3498 = vadd.f32 %v3337, %v3497
        %v3499 = vpop.f32.mrb[0].mxu0
        %v3500 = vpop.f32.mrb[0].mxu0
        %v3501 = vadd.f32 %v3340, %v3500
        %v3502 = vpop.f32.mrb[0].mxu0
        %3503 = vmatprep.mubr.bf16.mxu0 %v2970
        %3504 = vmatmul.mubr.bf16.gmra.mrb[0].mxu0 %v2969
        %v3505 = vpop.f32.mrb[0].mxu0
        %v3506 = vadd.f32 %v3345, %v3505
        %v3507 = vpop.f32.mrb[0].mxu0
        %v3508 = vpop.f32.mrb[0].mxu0
        %v3509 = vadd.f32 %v3348, %v3508
        %v3510 = vpop.f32.mrb[0].mxu0
        %3511 = vmatprep.mubr.bf16.mxu0 %v2974
        %3512 = vmatmul.mubr.bf16.gmra.mrb[0].mxu0 %v2973
        %v3513 = vpop.f32.mrb[0].mxu0
        %v3514 = vadd.f32 %v3353, %v3513
        %v3515 = vpop.f32.mrb[0].mxu0
        %v3516 = vpop.f32.mrb[0].mxu0
        %v3517 = vadd.f32 %v3356, %v3516
        %v3518 = vpop.f32.mrb[0].mxu0
        %3519 = vmatprep.mubr.bf16.mxu0 %v2978
        %3520 = vmatmul.mubr.bf16.gmra.mrb[0].mxu0 %v2977
        %v3521 = vpop.f32.mrb[0].mxu0
        %v3522 = vadd.f32 %v3361, %v3521
        %v3523 = vpop.f32.mrb[0].mxu0
        %v3524 = vpop.f32.mrb[0].mxu0
        %v3525 = vadd.f32 %v3364, %v3524
        %v3526 = vpop.f32.mrb[0].mxu0
        %3527 = vmatprep.mubr.bf16.mxu0 %v2982
        %3528 = vmatmul.mubr.bf16.gmra.mrb[0].mxu0 %v2981
        %v3529 = vpop.f32.mrb[0].mxu0
        %v3530 = vadd.f32 %v3369, %v3529
        %v3531 = vpop.f32.mrb[0].mxu0
        %v3532 = vpop.f32.mrb[0].mxu0
        %v3533 = vadd.f32 %v3372, %v3532
        %v3534 = vpop.f32.mrb[0].mxu0
        %3535 = vmatprep.mubr.bf16.mxu0 %v2986
        %3536 = vmatmul.mubr.bf16.gmra.mrb[0].mxu0 %v2985
        %v3537 = vpop.f32.mrb[0].mxu0
        %v3538 = vadd.f32 %v3377, %v3537
        %v3539 = vpop.f32.mrb[0].mxu0
        %v3540 = vpop.f32.mrb[0].mxu0
        %v3541 = vadd.f32 %v3380, %v3540
        %v3542 = vpop.f32.mrb[0].mxu0
        %3543 = vmatprep.mubr.bf16.mxu0 %v2990
        %3544 = vmatmul.mubr.bf16.gmra.mrb[0].mxu0 %v2989
        %v3545 = vpop.f32.mrb[0].mxu0
        %v3546 = vadd.f32 %v3385, %v3545
        %v3547 = vpop.f32.mrb[0].mxu0
        %v3548 = vpop.f32.mrb[0].mxu0
        %v3549 = vadd.f32 %v3388, %v3548
        %v3550 = vpop.f32.mrb[0].mxu0
        %3551 = vmatprep.mubr.bf16.mxu0 %v2994
        %3552 = vmatmul.mubr.bf16.gmra.mrb[0].mxu0 %v2993
        %v3553 = vpop.f32.mrb[0].mxu0
        %v3554 = vadd.f32 %v3393, %v3553
        %v3555 = vpop.f32.mrb[0].mxu0
        %v3556 = vpop.f32.mrb[0].mxu0
        %v3557 = vadd.f32 %v3396, %v3556
        %v3558 = vpop.f32.mrb[0].mxu0
        %3559 = vmatprep.mubr.bf16.mxu0 %v2998
        %3560 = vmatmul.mubr.bf16.gmra.mrb[0].mxu0 %v2997
        %v3561 = vpop.f32.mrb[0].mxu0
        %v3562 = vadd.f32 %v3401, %v3561
        %v3563 = vpop.f32.mrb[0].mxu0
        %v3564 = vpop.f32.mrb[0].mxu0
        %v3565 = vadd.f32 %v3404, %v3564
        %v3566 = vpop.f32.mrb[0].mxu0
        %3567 = vmatprep.mubr.bf16.mxu0 %v3002
        %3568 = vmatmul.mubr.bf16.gmra.mrb[0].mxu0 %v3001
        %v3569 = vpop.f32.mrb[0].mxu0
        %v3570 = vadd.f32 %v3409, %v3569
        %v3571 = vpop.f32.mrb[0].mxu0
        %v3572 = vpop.f32.mrb[0].mxu0
        %v3573 = vadd.f32 %v3412, %v3572
        %v3574 = vpop.f32.mrb[0].mxu0
        %3575 = vmatprep.mubr.bf16.mxu0 %v3006
        %3576 = vmatmul.mubr.bf16.gmra.mrb[0].mxu0 %v3005
        %v3577 = vpop.f32.mrb[0].mxu0
        %v3578 = vadd.f32 %v3417, %v3577
        %v3579 = vpop.f32.mrb[0].mxu0
        %v3580 = vpop.f32.mrb[0].mxu0
        %v3581 = vadd.f32 %v3420, %v3580
        %v3582 = vpop.f32.mrb[0].mxu0
        %3583 = vmatprep.mubr.bf16.mxu0 %v3010
        %3584 = vmatmul.mubr.bf16.gmra.mrb[0].mxu0 %v3009
        %v3585 = vpop.f32.mrb[0].mxu0
        %v3586 = vadd.f32 %v3425, %v3585
        %v3587 = vpop.f32.mrb[0].mxu0
        %v3588 = vpop.f32.mrb[0].mxu0
        %v3589 = vadd.f32 %v3428, %v3588
        %v3590 = vpop.f32.mrb[0].mxu0
        %3591 = vmatprep.mubr.bf16.mxu0 %v3014
        %3592 = vmatmul.mubr.bf16.gmra.mrb[0].mxu0 %v3013
        %v3593 = vpop.f32.mrb[0].mxu0
        %v3594 = vadd.f32 %v3433, %v3593
        %v3595 = vpop.f32.mrb[0].mxu0
        %v3596 = vpop.f32.mrb[0].mxu0
        %v3597 = vadd.f32 %v3436, %v3596
        %v3598 = vpop.f32.mrb[0].mxu0
        %3599 = vdwg.mxu0
        %v3600 = vmul.f32 %v3474, %v1120
        %v3601 = vmul.f32 %v3477, %v1123
        %v3602 = vmul.f32 %v3482, %v1128
        %v3603 = vmul.f32 %v3485, %v1131
        %v3604 = vmul.f32 %v3490, %v1136
        %v3605 = vmul.f32 %v3493, %v1139
        %v3606 = vmul.f32 %v3498, %v1144
        %v3607 = vmul.f32 %v3501, %v1147
        %v3608 = vmul.f32 %v3506, %v1152
        %v3609 = vmul.f32 %v3509, %v1155
        %v3610 = vmul.f32 %v3514, %v1160
        %v3611 = vmul.f32 %v3517, %v1163
        %v3612 = vmul.f32 %v3522, %v1168
        %v3613 = vmul.f32 %v3525, %v1171
        %v3614 = vmul.f32 %v3530, %v1176
        %v3615 = vmul.f32 %v3533, %v1179
        %v3616 = vmul.f32 %v3538, %v1184
        %v3617 = vmul.f32 %v3541, %v1187
        %v3618 = vmul.f32 %v3546, %v1192
        %v3619 = vmul.f32 %v3549, %v1195
        %v3620 = vmul.f32 %v3554, %v1200
        %v3621 = vmul.f32 %v3557, %v1203
        %v3622 = vmul.f32 %v3562, %v1208
        %v3623 = vmul.f32 %v3565, %v1211
        %v3624 = vmul.f32 %v3570, %v1216
        %v3625 = vmul.f32 %v3573, %v1219
        %v3626 = vmul.f32 %v3578, %v1224
        %v3627 = vmul.f32 %v3581, %v1227
        %v3628 = vmul.f32 %v3586, %v1232
        %v3629 = vmul.f32 %v3589, %v1235
        %v3630 = vmul.f32 %v3594, %v1240
        %v3631 = vmul.f32 %v3597, %v1243
        %v3632 = vadd.f32 %v411, %v3600
        %v3633 = vadd.f32 %v412, %v3601
        %v3634 = vadd.f32 %v413, %v3602
        %v3635 = vadd.f32 %v414, %v3603
        %v3636 = vadd.f32 %v415, %v3604
        %v3637 = vadd.f32 %v416, %v3605
        %v3638 = vadd.f32 %v417, %v3606
        %v3639 = vadd.f32 %v418, %v3607
        %v3640 = vadd.f32 %v419, %v3608
        %v3641 = vadd.f32 %v420, %v3609
        %v3642 = vadd.f32 %v421, %v3610
        %v3643 = vadd.f32 %v422, %v3611
        %v3644 = vadd.f32 %v423, %v3612
        %v3645 = vadd.f32 %v424, %v3613
        %v3646 = vadd.f32 %v425, %v3614
        %v3647 = vadd.f32 %v426, %v3615
        %v3648 = vadd.f32 %v427, %v3616
        %v3649 = vadd.f32 %v428, %v3617
        %v3650 = vadd.f32 %v429, %v3618
        %v3651 = vadd.f32 %v430, %v3619
        %v3652 = vadd.f32 %v431, %v3620
        %v3653 = vadd.f32 %v432, %v3621
        %v3654 = vadd.f32 %v433, %v3622
        %v3655 = vadd.f32 %v434, %v3623
        %v3656 = vadd.f32 %v435, %v3624
        %v3657 = vadd.f32 %v436, %v3625
        %v3658 = vadd.f32 %v437, %v3626
        %v3659 = vadd.f32 %v438, %v3627
        %v3660 = vadd.f32 %v439, %v3628
        %v3661 = vadd.f32 %v440, %v3629
        %v3662 = vadd.f32 %v441, %v3630
        %v3663 = vadd.f32 %v442, %v3631
        %3664 = vst [vmem:[%s406] sm:$0xff] %v3632
        %3665 = vst [vmem:[%s406 + $0x8] sm:$0xff] %v3633
        %3666 = vst [vmem:[%s406 + $0x10] sm:$0xff] %v3634
        %3667 = vst [vmem:[%s406 + $0x18] sm:$0xff] %v3635
        %3668 = vst [vmem:[%s406 + $0x20] sm:$0xff] %v3636
        %3669 = vst [vmem:[%s406 + $0x28] sm:$0xff] %v3637
        %3670 = vst [vmem:[%s406 + $0x30] sm:$0xff] %v3638
        %3671 = vst [vmem:[%s406 + $0x38] sm:$0xff] %v3639
        %3672 = vst [vmem:[%s406 + $0x40] sm:$0xff] %v3640
        %3673 = vst [vmem:[%s406 + $0x48] sm:$0xff] %v3641
        %3674 = vst [vmem:[%s406 + $0x50] sm:$0xff] %v3642
        %3675 = vst [vmem:[%s406 + $0x58] sm:$0xff] %v3643
        %3676 = vst [vmem:[%s406 + $0x60] sm:$0xff] %v3644
        %3677 = vst [vmem:[%s406 + $0x68] sm:$0xff] %v3645
        %3678 = vst [vmem:[%s406 + $0x70] sm:$0xff] %v3646
        %3679 = vst [vmem:[%s406 + $0x78] sm:$0xff] %v3647
        %3680 = vst [vmem:[%s406 + $0x80] sm:$0xff] %v3648
        %3681 = vst [vmem:[%s406 + $0x88] sm:$0xff] %v3649
        %3682 = vst [vmem:[%s406 + $0x90] sm:$0xff] %v3650
        %3683 = vst [vmem:[%s406 + $0x98] sm:$0xff] %v3651
        %3684 = vst [vmem:[%s406 + $0xa0] sm:$0xff] %v3652
        %3685 = vst [vmem:[%s406 + $0xa8] sm:$0xff] %v3653
        %3686 = vst [vmem:[%s406 + $0xb0] sm:$0xff] %v3654
        %3687 = vst [vmem:[%s406 + $0xb8] sm:$0xff] %v3655
        %3688 = vst [vmem:[%s406 + $0xc0] sm:$0xff] %v3656
        %3689 = vst [vmem:[%s406 + $0xc8] sm:$0xff] %v3657
        %3690 = vst [vmem:[%s406 + $0xd0] sm:$0xff] %v3658
        %3691 = vst [vmem:[%s406 + $0xd8] sm:$0xff] %v3659
        %3692 = vst [vmem:[%s406 + $0xe0] sm:$0xff] %v3660
        %3693 = vst [vmem:[%s406 + $0xe8] sm:$0xff] %v3661
        %3694 = vst [vmem:[%s406 + $0xf0] sm:$0xff] %v3662
        %3695 = vst [vmem:[%s406 + $0xf8] sm:$0xff] %v3663
        %s3696 = sand.u32 %s215, 1
        %s3697 = scalar_lea.sflag [#allocation4], %s3696
        %s3698 = sand.u32 %s215, 1
        %s3699 = smul.addr %s3698, 256
        %s3700 = scalar_lea.vmem [#allocation11], %s3699
        // Predicated region
        $region73: #{tpu_custom_call.1} parent=51 // pred_check
          %p3701 = pneg %p225
        $region74: #{tpu_custom_call.1} parent=51 // pred_check_branch
          %3703 = sbr.rel (%p3701) target = $region76
        $region75: #{tpu_custom_call.1} parent=51 // pred_region
          %s3704 = smul.u32 32, %s29
          %s3706 = ssub.s32 4096, 4096
          %3707 = vsyncadd %s3697, %s3706
          %s3708 = smul.addr %s3704, 128
          %s3709 = scalar_lea.hbm %s8, %s3708
          %s3710 = sshll.u32 %s3700, 4
          %s3711 = int_to_ptr.vmem [resolvable:$true] %s3710
          %3716 = dma.vmem_to_hbm [thread:$0]  %s3711, 4096, %s3709, %s3697, 128, 128, 8
        $region76: #{tpu_custom_call.1} parent=51 // pred_fallthru
          _
      $region52: #{tpu_custom_call.1} parent=5 // pred_fallthru
        _
      %p3717 = scmp.le.s32.totalorder 2, %s24
      // Predicated region
      $region77: #{tpu_custom_call.1} parent=5 // pred_check
        %p3718 = pneg %p3717
      $region78: #{tpu_custom_call.1} parent=5 // pred_check_branch
        %3720 = sbr.rel (%p3718) target = $region80
      $region79: #{tpu_custom_call.1} parent=5 // pred_region
        %s3721 = ssub.s32 %s24, 2
        // Predicated region
        $region81: #{tpu_custom_call.1} parent=79 // pred_check
          %p3722 = pneg %p231
        $region82: #{tpu_custom_call.1} parent=79 // pred_check_branch
          %3724 = sbr.rel (%p3722) target = $region84
        $region83: #{tpu_custom_call.1} parent=79 // pred_region
          %s3725 = sand.u32 %s216, 1
          %s3726 = scalar_lea.sflag [#allocation4], %s3725
          %s3727 = sand.u32 %s216, 1
          %s3728 = smul.addr %s3727, 256
          %s3729 = scalar_lea.vmem [#allocation11], %s3728
          %3730 = dma.done %s3726, 4096
        $region84: #{tpu_custom_call.1} parent=79 // pred_fallthru
          _
      $region80: #{tpu_custom_call.1} parent=5 // pred_fallthru
        _
    $region6: #{tpu_custom_call.1} parent=1 // loop_footer
      %s28 = sadd.s32 1, %s24
    $region7: #{tpu_custom_call.1} parent=1 // loop_footer_branch
      %23 = sbr.rel target = $region3
    $region8: #{tpu_custom_call.1} parent=1 // loop_exit
      _
    %3731 = vsyncpa [#allocation3], 1
    %s3732 = scalar_lea.sflag [#allocation3], 1
    %3733 = vsyncpa %s3732, 1
    %3734 = vsyncpa [#allocation6], 1
    %s3735 = scalar_lea.sflag [#allocation6], 1
    %3736 = vsyncpa %s3735, 1
    %3737 = vsyncpa [#allocation9], 1
    %3738 = vsyncpa [#allocation4], 1
    %s3739 = scalar_lea.sflag [#allocation4], 1
    %3740 = vsyncpa %s3739, 1

</llo_original>
